<compile_context>
chip_gen: v6e
topology: v6e:2x2x1
jax: 0.10.0
libtpu: 0.0.40
codegen_flags: <defaults>
</compile_context>

<pallas_src>
import functools
import math

import jax
import jax.numpy as jnp
from jax.experimental import pallas as pl
from jax.experimental.pallas import tpu as pltpu


# --------------------------------------------------------------------------
# small in-kernel helper
# --------------------------------------------------------------------------
def _layernorm(x, g, b, eps=1e-5):
    mu = jnp.mean(x, axis=-1, keepdims=True)
    var = jnp.mean(jnp.square(x - mu), axis=-1, keepdims=True)
    return (x - mu) * jax.lax.rsqrt(var + eps) * g + b


# --------------------------------------------------------------------------
# fused kernel: all layers, both branches, activation resident in VMEM
# --------------------------------------------------------------------------
def hmte_fused_kernel(x_ref, rope_ref, prot_ref, flags_ref,
                      a_g_ref, a_b_ref, wq_ref, wk_ref, wv_ref, wo_ref,
                      qs_ref, ks_ref,
                      f_g_ref, f_b_ref, win_ref, wgate_ref, wout_ref,
                      o_ref, acc_ref,
                      *, heads, dim_head, block_width, dim):
    l = pl.program_id(1)                       # layer index (trailing, "arbitrary")
    w = block_width
    rows = acc_ref.shape[0]                    # tokens per tile (= blocks * w)
    nblk = rows // w

    @pl.when(l == 0)
    def _load():                               # bring the activation tile resident
        acc_ref[...] = x_ref[...]

    x = acc_ref[...]                           # (rows, D) f32, resident across layers

    # ---------------- attention branch (pre-norm, rotary-xpos, causal) ----------
    h = _layernorm(x, a_g_ref[0], a_b_ref[0]).astype(jnp.bfloat16)

    use_rms = flags_ref[l] != 0                # qk-rmsnorm only on recurrent layers
    q_cos, q_sin = rope_ref[0], rope_ref[1]    # (rows, dh); xpos scale + sign folded
    k_cos, k_sin = rope_ref[2], rope_ref[3]
    prot = prot_ref[...]                       # (dh, dh) half-swap permutation

    row_i = jax.lax.broadcasted_iota(jnp.int32, (w, w), 0)
    col_i = jax.lax.broadcasted_iota(jnp.int32, (w, w), 1)
    causal = col_i <= row_i                    # (w, w), broadcasts over blocks

    scale = dim_head ** -0.5
    att = jnp.zeros((rows, dim), jnp.float32)
    for hh in range(heads):                    # static unroll; per-head weight slabs
        q = jnp.dot(h, wq_ref[0, hh], preferred_element_type=jnp.float32)  # (rows, dh)
        k = jnp.dot(h, wk_ref[0, hh], preferred_element_type=jnp.float32)
        v = jnp.dot(h, wv_ref[0, hh], preferred_element_type=jnp.float32)

        # optional qk-rmsnorm, selected by the per-layer flag (compute-and-select)
        q_n = q * jax.lax.rsqrt(jnp.sum(q * q, -1, keepdims=True) + 1e-8) * qs_ref[0, hh]
        k_n = k * jax.lax.rsqrt(jnp.sum(k * k, -1, keepdims=True) + 1e-8) * ks_ref[0, hh]
        q = jnp.where(use_rms, q_n, q)
        k = jnp.where(use_rms, k_n, k)

        # rotary + xpos: rotate-half via the constant permutation matmul (no lane
        # concatenate); sign and xpos scale are already folded into the tables.
        q = q * q_cos + jnp.dot(q, prot, preferred_element_type=jnp.float32) * q_sin
        k = k * k_cos + jnp.dot(k, prot, preferred_element_type=jnp.float32) * k_sin

        q3 = q.reshape(nblk, w, dim_head).astype(jnp.bfloat16)
        k3 = k.reshape(nblk, w, dim_head).astype(jnp.bfloat16)
        v3 = v.reshape(nblk, w, dim_head).astype(jnp.bfloat16)

        s = jnp.einsum("bqd,bkd->bqk", q3, k3,
                       preferred_element_type=jnp.float32) * scale      # (nblk, w, w)
        s = jnp.where(causal, s, -1e30)
        s = s - jnp.max(s, axis=-1, keepdims=True)
        p = jnp.exp(s)
        p = p * pl.reciprocal(jnp.sum(p, axis=-1, keepdims=True), approx=True)
        oh = jnp.einsum("bqk,bkd->bqd", p.astype(jnp.bfloat16), v3,
                        preferred_element_type=jnp.float32)             # (nblk, w, dh)
        # accumulate the per-head contribution straight into the output proj
        att = att + jnp.dot(oh.reshape(rows, dim_head).astype(jnp.bfloat16),
                            wo_ref[0, hh], preferred_element_type=jnp.float32)

    x = x + att                                # attn_branch_out + residual

    # ---------------- "ff" branch ----------------------------------------------
    # TODO(synk): SelectiveMemoryLayer(Mamba2(d_state=16, d_conv=4, expand=2))
    # source not provided; residual pre-norm gated MLP (expand=2, SiLU) stand-in.
    h2 = _layernorm(x, f_g_ref[0], f_b_ref[0]).astype(jnp.bfloat16)
    a = jnp.dot(h2, win_ref[0], preferred_element_type=jnp.float32)
    g = jnp.dot(h2, wgate_ref[0], preferred_element_type=jnp.float32)
    y = jnp.dot((jax.nn.silu(g) * a).astype(jnp.bfloat16), wout_ref[0],
                preferred_element_type=jnp.float32)
    x = x + y

    acc_ref[...] = x                           # carry to the next layer (VMEM)

    @pl.when(l == pl.num_programs(1) - 1)
    def _store():                              # write back to HBM once per tile
        o_ref[...] = x.astype(o_ref.dtype)


# --------------------------------------------------------------------------
# BlockSpec helpers
# --------------------------------------------------------------------------
def _layer_block(shape):
    """Per-layer stacked parameter: one layer slab, indexed by the layer axis."""
    zeros = (0,) * (len(shape) - 1)
    return pl.BlockSpec((1,) + tuple(shape[1:]),
                        lambda t, l, _z=zeros: (l,) + _z)


def _const_block(shape):
    """Small constant tensor replicated to every grid step (fetched once)."""
    zeros = (0,) * len(shape)
    return pl.BlockSpec(tuple(shape), lambda t, l, _z=zeros: _z)


def _blocks_per_tile(num_blocks, width, target_rows=128):
    """Pick blocks-per-grid-step TB | num_blocks with TB % 8 == 0 (sublane rule)
    or TB == num_blocks, preferring >= target_rows matmul rows per step."""
    cands = [d for d in range(1, num_blocks + 1)
             if num_blocks % d == 0 and (d % 8 == 0 or d == num_blocks)]
    for d in cands:
        if d * width >= target_rows:
            return d
    return cands[-1]


# --------------------------------------------------------------------------
# glue (plain JAX): rotary table, parameter init, forward
# --------------------------------------------------------------------------
def rotary_freqs_and_scale(dim_head, width, scale_base=512, theta=10000.0):
    """Mirrors RotaryEmbedding.forward(): (freqs, xpos scale), each (width, dim_head)."""
    inv_freq = 1.0 / theta ** (jnp.arange(0, dim_head, 2, dtype=jnp.float32) / dim_head)
    t = jnp.arange(width, dtype=jnp.float32)
    freqs = t[:, None] * inv_freq[None, :]
    freqs = jnp.concatenate([freqs, freqs], axis=-1)
    scale = (jnp.arange(0, dim_head, 2, dtype=jnp.float32) + 0.4 * dim_head) / (1.4 * dim_head)
    power = (t - width // 2) / scale_base
    scale = scale[None, :] ** power[:, None]
    scale = jnp.concatenate([scale, scale], axis=-1)
    return freqs, scale


def init_params(key, *, dim, depth, heads, dim_head, expand=2):
    """Per-layer weights stacked along a leading depth axis.
    Matmul weights stored in bf16 (MXU operands); norms/scales in f32."""
    d_inner = expand * dim
    ks = jax.random.split(key, 7)

    def w(kk, shape, fan_in):
        return (jax.random.normal(kk, shape, jnp.float32) / math.sqrt(fan_in)
                ).astype(jnp.bfloat16)

    return dict(
        attn_ln_g=jnp.ones((depth, 1, dim), jnp.float32),
        attn_ln_b=jnp.zeros((depth, 1, dim), jnp.float32),
        wq=w(ks[0], (depth, heads, dim, dim_head), dim),
        wk=w(ks[1], (depth, heads, dim, dim_head), dim),
        wv=w(ks[2], (depth, heads, dim, dim_head), dim),
        wo=w(ks[3], (depth, heads, dim_head, dim), heads * dim_head),
        q_scale=jnp.ones((depth, heads, 1, dim_head), jnp.float32),
        k_scale=jnp.ones((depth, heads, 1, dim_head), jnp.float32),
        ff_ln_g=jnp.ones((depth, 1, dim), jnp.float32),
        ff_ln_b=jnp.zeros((depth, 1, dim), jnp.float32),
        w_in=w(ks[4], (depth, dim, d_inner), dim),
        w_gate=w(ks[5], (depth, dim, d_inner), dim),
        w_out=w(ks[6], (depth, d_inner, dim), d_inner),
    )


def hmte_forward(params, x, *, block_width, heads, dim_head, recurrent_layers):
    """Mirrors Hmte_Model.forward(x): returns (out, None, None)."""
    B, S, D = x.shape
    w = block_width
    assert S % w == 0, "max_seq_len must be divisible by block_width"
    NB = (B * S) // w                       # total number of width-w blocks
    depth = params["wq"].shape[0]
    d_inner = params["w_in"].shape[-1]
    dh = dim_head

    TB = _blocks_per_tile(NB, w)            # blocks processed per grid step
    rows = TB * w                           # matmul M-dim per grid step

    # RotaryEmbedding(dim_head, width=2*block_width); in-block attention uses
    # the last `w` positions (no xl memories attended to).  xpos scale (q: *s,
    # k: /s) and the rotate-half sign are folded into the tables here, once.
    freqs, xscale = rotary_freqs_and_scale(dh, 2 * w)
    freqs, xscale = freqs[-w:], xscale[-w:]
    cosf, sinf = jnp.cos(freqs), jnp.sin(freqs)
    sign = jnp.concatenate([-jnp.ones((dh // 2,), jnp.float32),
                            jnp.ones((dh // 2,), jnp.float32)])
    rope = jnp.stack([cosf * xscale, sinf * xscale * sign,
                      cosf / xscale, sinf / xscale * sign])          # (4, w, dh)
    rope = jnp.tile(rope, (1, TB, 1))                                # (4, rows, dh)
    # rotate-half as a half-swap permutation (sign lives in the sin tables)
    prot = jnp.roll(jnp.eye(dh, dtype=jnp.float32), dh // 2, axis=0)

    flags = jnp.array([1 if (i + 1) in recurrent_layers else 0 for i in range(depth)],
                      jnp.int32)

    kern = functools.partial(hmte_fused_kernel, heads=heads, dim_head=dh,
                             block_width=w, dim=D)

    # rough advisory cost for the XLA scheduler
    tokens = B * S
    flops = 2 * depth * tokens * (4 * D * heads * dh + 2 * w * heads * dh
                                  + 3 * D * d_inner)
    trans = depth * tokens * (w + d_inner)
    wbytes = sum(int(v.size) * v.dtype.itemsize for v in params.values())
    bytes_accessed = 2 * tokens * D * 4 + wbytes

    x2 = x.reshape(B * S, D)                 # token-major 2-D activations
    out = pl.pallas_call(
        kern,
        out_shape=jax.ShapeDtypeStruct((B * S, D), x.dtype),
        grid=((B * S) // rows, depth),
        in_specs=[
            pl.BlockSpec((rows, D), lambda t, l: (t, 0)),        # activations
            _const_block((4, rows, dh)),                          # rope tables
            _const_block((dh, dh)),                               # rotate-half perm
            pl.BlockSpec(memory_space=pltpu.MemorySpace.SMEM),    # per-layer flags
            _layer_block(params["attn_ln_g"].shape),
            _layer_block(params["attn_ln_b"].shape),
            _layer_block(params["wq"].shape),
            _layer_block(params["wk"].shape),
            _layer_block(params["wv"].shape),
            _layer_block(params["wo"].shape),
            _layer_block(params["q_scale"].shape),
            _layer_block(params["k_scale"].shape),
            _layer_block(params["ff_ln_g"].shape),
            _layer_block(params["ff_ln_b"].shape),
            _layer_block(params["w_in"].shape),
            _layer_block(params["w_gate"].shape),
            _layer_block(params["w_out"].shape),
        ],
        out_specs=pl.BlockSpec((rows, D), lambda t, l: (t, 0)),
        scratch_shapes=[pltpu.VMEM((rows, D), jnp.float32)],      # resident activations
        input_output_aliases={0: 0},                              # reuse activation HBM
        cost_estimate=pl.CostEstimate(flops=int(flops), transcendentals=int(trans),
                                      bytes_accessed=int(bytes_accessed)),
        compiler_params=pltpu.CompilerParams(
            dimension_semantics=("parallel", "arbitrary"),        # tiles shardable (v7x)
            vmem_limit_bytes=32 * 1024 * 1024),
    )(x2, rope, prot, flags,
      params["attn_ln_g"], params["attn_ln_b"],
      params["wq"], params["wk"], params["wv"], params["wo"],
      params["q_scale"], params["k_scale"],
      params["ff_ln_g"], params["ff_ln_b"],
      params["w_in"], params["w_gate"], params["w_out"])

    return out.reshape(B, S, D), None, None


# --------------------------------------------------------------------------
if __name__ == "__main__":
    # small config consistent with the module: dim, depth, heads, dim_head,
    # block_width, max_seq_len (divisible by block_width)
    B = 2
    dim, depth, heads, dim_head = 32, 2, 2, 16
    block_width, max_seq_len = 8, 16
    recurrent_layers = (depth // 2,)                 # default in __init__

    key = jax.random.PRNGKey(0)
    kx, kp = jax.random.split(key)
    x = jax.random.normal(kx, (B, max_seq_len, dim), dtype=jnp.float32)
    params = init_params(kp, dim=dim, depth=depth, heads=heads, dim_head=dim_head)

    fwd = jax.jit(functools.partial(
        hmte_forward, block_width=block_width, heads=heads, dim_head=dim_head,
        recurrent_layers=recurrent_layers))

    out, mems, states = fwd(params, x)
    jax.block_until_ready(out)
    assert out.shape == x.shape and mems is None and states is None
    assert bool(jnp.all(jnp.isfinite(out)))
    print("KERNEL_OK")
</pallas_src>

<mosaic_0001>
module attributes {stable_mosaic.version = 11 : i64} {
  func.func @hmte_fused_kernel(%arg0: i32, %arg1: i32, %arg2: memref<32x32xf32, #tpu.memory_space<vmem>>, %arg3: memref<4x32x16xf32, #tpu.memory_space<vmem>>, %arg4: memref<16x16xf32, #tpu.memory_space<vmem>>, %arg5: memref<2xi32, #tpu.memory_space<smem>>, %arg6: memref<1x1x32xf32, #tpu.memory_space<vmem>>, %arg7: memref<1x1x32xf32, #tpu.memory_space<vmem>>, %arg8: memref<1x2x32x16xbf16, #tpu.memory_space<vmem>>, %arg9: memref<1x2x32x16xbf16, #tpu.memory_space<vmem>>, %arg10: memref<1x2x32x16xbf16, #tpu.memory_space<vmem>>, %arg11: memref<1x2x16x32xbf16, #tpu.memory_space<vmem>>, %arg12: memref<1x2x1x16xf32, #tpu.memory_space<vmem>>, %arg13: memref<1x2x1x16xf32, #tpu.memory_space<vmem>>, %arg14: memref<1x1x32xf32, #tpu.memory_space<vmem>>, %arg15: memref<1x1x32xf32, #tpu.memory_space<vmem>>, %arg16: memref<1x32x64xbf16, #tpu.memory_space<vmem>>, %arg17: memref<1x32x64xbf16, #tpu.memory_space<vmem>>, %arg18: memref<1x64x32xbf16, #tpu.memory_space<vmem>>, %arg19: memref<32x32xf32, #tpu.memory_space<vmem>>, %arg20: memref<32x32xf32, #tpu.memory_space<vmem>>) attributes {dimension_semantics = [#tpu.dimension_semantics<parallel>, #tpu.dimension_semantics<arbitrary>], iteration_bounds = array<i64: 1, 2>, scalar_prefetch = 0 : i64, scratch_operands = 1 : i64, tpu.core_type = #tpu.core_type<tc>, window_params = [{transform_indices = @transform_0, window_bounds = array<i64: 32, 32>}, {pipeline_mode = #tpu.pipeline_mode<synchronous>, transform_indices = @transform_1, window_bounds = array<i64: 4, 32, 16>}, {pipeline_mode = #tpu.pipeline_mode<synchronous>, transform_indices = @transform_2, window_bounds = array<i64: 16, 16>}, {transform_indices = @transform_3, window_bounds = array<i64: 2>}, {transform_indices = @transform_4, window_bounds = array<i64: 1, 1, 32>}, {transform_indices = @transform_5, window_bounds = array<i64: 1, 1, 32>}, {transform_indices = @transform_6, window_bounds = array<i64: 1, 2, 32, 16>}, {transform_indices = @transform_7, window_bounds = array<i64: 1, 2, 32, 16>}, {transform_indices = @transform_8, window_bounds = array<i64: 1, 2, 32, 16>}, {transform_indices = @transform_9, window_bounds = array<i64: 1, 2, 16, 32>}, {transform_indices = @transform_10, window_bounds = array<i64: 1, 2, 1, 16>}, {transform_indices = @transform_11, window_bounds = array<i64: 1, 2, 1, 16>}, {transform_indices = @transform_12, window_bounds = array<i64: 1, 1, 32>}, {transform_indices = @transform_13, window_bounds = array<i64: 1, 1, 32>}, {transform_indices = @transform_14, window_bounds = array<i64: 1, 32, 64>}, {transform_indices = @transform_15, window_bounds = array<i64: 1, 32, 64>}, {transform_indices = @transform_16, window_bounds = array<i64: 1, 64, 32>}, {transform_indices = @transform_17, window_bounds = array<i64: 32, 32>}]} {
    %c0_i32 = arith.constant 0 : i32
    %0 = arith.cmpi eq, %arg1, %c0_i32 : i32
    %1 = arith.extui %0 : i1 to i32
    %c0_i32_0 = arith.constant 0 : i32
    %2 = arith.cmpi ne, %1, %c0_i32_0 : i32
    scf.if %2 {
      %c0_132 = arith.constant 0 : index
      %c0_133 = arith.constant 0 : index
      %245 = vector.load %arg2[%c0_132, %c0_133] : memref<32x32xf32, #tpu.memory_space<vmem>>, vector<32x32xf32>
      %c0_134 = arith.constant 0 : index
      %c0_135 = arith.constant 0 : index
      %246 = vector.load %arg20[%c0_134, %c0_135] : memref<32x32xf32, #tpu.memory_space<vmem>>, vector<32x32xf32>
      tpu.vector_store %arg20[%c0_134, %c0_135], %245 {strides = array<i32>} : memref<32x32xf32, #tpu.memory_space<vmem>>, vector<32x32xf32>,
    } else {
    }
    %c0 = arith.constant 0 : index
    %c0_1 = arith.constant 0 : index
    %3 = vector.load %arg20[%c0, %c0_1] : memref<32x32xf32, #tpu.memory_space<vmem>>, vector<32x32xf32>
    %c0_2 = arith.constant 0 : index
    %c0_3 = arith.constant 0 : index
    %c0_4 = arith.constant 0 : index
    %4 = vector.load %arg6[%c0_2, %c0_3, %c0_4] : memref<1x1x32xf32, #tpu.memory_space<vmem>>, vector<1x1x32xf32>
    %5 = vector.shape_cast %4 : vector<1x1x32xf32> to vector<1x32xf32>
    %c0_5 = arith.constant 0 : index
    %c0_6 = arith.constant 0 : index
    %c0_7 = arith.constant 0 : index
    %6 = vector.load %arg7[%c0_5, %c0_6, %c0_7] : memref<1x1x32xf32, #tpu.memory_space<vmem>>, vector<1x1x32xf32>
    %7 = vector.shape_cast %6 : vector<1x1x32xf32> to vector<1x32xf32>
    %cst = arith.constant dense<0.000000e+00> : vector<32xf32>
    %8 = vector.multi_reduction <add>, %3, %cst [1] : vector<32x32xf32> to vector<32xf32>
    %9 = vector.shape_cast %8 : vector<32xf32> to vector<32x1xf32>
    %cst_8 = arith.constant 3.200000e+01 : f32
    %10 = vector.broadcast %cst_8 : f32 to vector<32x1xf32>
    %11 = arith.divf %9, %10 : vector<32x1xf32>
    %12 = vector.broadcast %11 : vector<32x1xf32> to vector<32x32xf32>
    %13 = arith.subf %3, %12 : vector<32x32xf32>
    %14 = arith.mulf %13, %13 : vector<32x32xf32>
    %cst_9 = arith.constant dense<0.000000e+00> : vector<32xf32>
    %15 = vector.multi_reduction <add>, %14, %cst_9 [1] : vector<32x32xf32> to vector<32xf32>
    %16 = vector.shape_cast %15 : vector<32xf32> to vector<32x1xf32>
    %cst_10 = arith.constant 3.200000e+01 : f32
    %17 = vector.broadcast %cst_10 : f32 to vector<32x1xf32>
    %18 = arith.divf %16, %17 : vector<32x1xf32>
    %19 = vector.broadcast %11 : vector<32x1xf32> to vector<32x32xf32>
    %20 = arith.subf %3, %19 : vector<32x32xf32>
    %cst_11 = arith.constant 9.99999974E-6 : f32
    %21 = vector.broadcast %cst_11 : f32 to vector<32x1xf32>
    %22 = arith.addf %18, %21 : vector<32x1xf32>
    %23 = math.rsqrt %22 : vector<32x1xf32>
    %24 = vector.broadcast %23 : vector<32x1xf32> to vector<32x32xf32>
    %25 = arith.mulf %20, %24 : vector<32x32xf32>
    %26 = vector.broadcast %5 : vector<1x32xf32> to vector<32x32xf32>
    %27 = arith.mulf %25, %26 : vector<32x32xf32>
    %28 = vector.broadcast %7 : vector<1x32xf32> to vector<32x32xf32>
    %29 = arith.addf %27, %28 : vector<32x32xf32>
    %30 = arith.truncf %29 : vector<32x32xf32> to vector<32x32xbf16>
    %31 = arith.index_cast %arg1 : i32 to index
    %32 = memref.load %arg5[%31] : memref<2xi32, #tpu.memory_space<smem>>
    %c0_i32_12 = arith.constant 0 : i32
    %33 = arith.cmpi ne, %32, %c0_i32_12 : i32
    %c0_13 = arith.constant 0 : index
    %c0_14 = arith.constant 0 : index
    %c0_15 = arith.constant 0 : index
    %34 = vector.load %arg3[%c0_13, %c0_14, %c0_15] : memref<4x32x16xf32, #tpu.memory_space<vmem>>, vector<1x32x16xf32>
    %35 = vector.shape_cast %34 : vector<1x32x16xf32> to vector<32x16xf32>
    %c1 = arith.constant 1 : index
    %c0_16 = arith.constant 0 : index
    %c0_17 = arith.constant 0 : index
    %36 = vector.load %arg3[%c1, %c0_16, %c0_17] : memref<4x32x16xf32, #tpu.memory_space<vmem>>, vector<1x32x16xf32>
    %37 = vector.shape_cast %36 : vector<1x32x16xf32> to vector<32x16xf32>
    %c2 = arith.constant 2 : index
    %c0_18 = arith.constant 0 : index
    %c0_19 = arith.constant 0 : index
    %38 = vector.load %arg3[%c2, %c0_18, %c0_19] : memref<4x32x16xf32, #tpu.memory_space<vmem>>, vector<1x32x16xf32>
    %39 = vector.shape_cast %38 : vector<1x32x16xf32> to vector<32x16xf32>
    %c3 = arith.constant 3 : index
    %c0_20 = arith.constant 0 : index
    %c0_21 = arith.constant 0 : index
    %40 = vector.load %arg3[%c3, %c0_20, %c0_21] : memref<4x32x16xf32, #tpu.memory_space<vmem>>, vector<1x32x16xf32>
    %41 = vector.shape_cast %40 : vector<1x32x16xf32> to vector<32x16xf32>
    %c0_22 = arith.constant 0 : index
    %c0_23 = arith.constant 0 : index
    %42 = vector.load %arg4[%c0_22, %c0_23] : memref<16x16xf32, #tpu.memory_space<vmem>>, vector<16x16xf32>
    %43 = tpu.iota {dimensions = array<i32: 0>} : vector<8x8xi32>
    %44 = tpu.iota {dimensions = array<i32: 1>} : vector<8x8xi32>
    %45 = arith.cmpi sle, %44, %43 : vector<8x8xi32>
    %cst_24 = arith.constant 0.000000e+00 : f32
    %46 = vector.broadcast %cst_24 : f32 to vector<32x32xf32>
    %c0_25 = arith.constant 0 : index
    %c0_26 = arith.constant 0 : index
    %c0_27 = arith.constant 0 : index
    %c0_28 = arith.constant 0 : index
    %47 = vector.load %arg8[%c0_25, %c0_26, %c0_27, %c0_28] : memref<1x2x32x16xbf16, #tpu.memory_space<vmem>>, vector<1x1x32x16xbf16>
    %48 = vector.shape_cast %47 : vector<1x1x32x16xbf16> to vector<32x16xbf16>
    %cst_29 = arith.constant dense<0.000000e+00> : vector<32x16xf32>
    %49 = tpu.matmul %30, %48, %cst_29 {dimension_numbers = #tpu.dot_dimension_numbers<[1], [0], [0], [1], [0, 0, 1, 1], [], []>} : vector<32x32xbf16>, vector<32x16xbf16>, vector<32x16xf32> -> vector<32x16xf32>
    %c0_30 = arith.constant 0 : index
    %c0_31 = arith.constant 0 : index
    %c0_32 = arith.constant 0 : index
    %c0_33 = arith.constant 0 : index
    %50 = vector.load %arg9[%c0_30, %c0_31, %c0_32, %c0_33] : memref<1x2x32x16xbf16, #tpu.memory_space<vmem>>, vector<1x1x32x16xbf16>
    %51 = vector.shape_cast %50 : vector<1x1x32x16xbf16> to vector<32x16xbf16>
    %cst_34 = arith.constant dense<0.000000e+00> : vector<32x16xf32>
    %52 = tpu.matmul %30, %51, %cst_34 {dimension_numbers = #tpu.dot_dimension_numbers<[1], [0], [0], [1], [0, 0, 1, 1], [], []>} : vector<32x32xbf16>, vector<32x16xbf16>, vector<32x16xf32> -> vector<32x16xf32>
    %c0_35 = arith.constant 0 : index
    %c0_36 = arith.constant 0 : index
    %c0_37 = arith.constant 0 : index
    %c0_38 = arith.constant 0 : index
    %53 = vector.load %arg10[%c0_35, %c0_36, %c0_37, %c0_38] : memref<1x2x32x16xbf16, #tpu.memory_space<vmem>>, vector<1x1x32x16xbf16>
    %54 = vector.shape_cast %53 : vector<1x1x32x16xbf16> to vector<32x16xbf16>
    %cst_39 = arith.constant dense<0.000000e+00> : vector<32x16xf32>
    %55 = tpu.matmul %30, %54, %cst_39 {dimension_numbers = #tpu.dot_dimension_numbers<[1], [0], [0], [1], [0, 0, 1, 1], [], []>} : vector<32x32xbf16>, vector<32x16xbf16>, vector<32x16xf32> -> vector<32x16xf32>
    %56 = arith.mulf %49, %49 : vector<32x16xf32>
    %cst_40 = arith.constant dense<0.000000e+00> : vector<32xf32>
    %57 = vector.multi_reduction <add>, %56, %cst_40 [1] : vector<32x16xf32> to vector<32xf32>
    %58 = vector.shape_cast %57 : vector<32xf32> to vector<32x1xf32>
    %cst_41 = arith.constant 9.99999993E-9 : f32
    %59 = vector.broadcast %cst_41 : f32 to vector<32x1xf32>
    %60 = arith.addf %58, %59 : vector<32x1xf32>
    %61 = math.rsqrt %60 : vector<32x1xf32>
    %62 = vector.broadcast %61 : vector<32x1xf32> to vector<32x16xf32>
    %63 = arith.mulf %49, %62 : vector<32x16xf32>
    %c0_42 = arith.constant 0 : index
    %c0_43 = arith.constant 0 : index
    %c0_44 = arith.constant 0 : index
    %c0_45 = arith.constant 0 : index
    %64 = vector.load %arg12[%c0_42, %c0_43, %c0_44, %c0_45] : memref<1x2x1x16xf32, #tpu.memory_space<vmem>>, vector<1x1x1x16xf32>
    %65 = vector.shape_cast %64 : vector<1x1x1x16xf32> to vector<1x16xf32>
    %66 = vector.broadcast %65 : vector<1x16xf32> to vector<32x16xf32>
    %67 = arith.mulf %63, %66 : vector<32x16xf32>
    %68 = arith.mulf %52, %52 : vector<32x16xf32>
    %cst_46 = arith.constant dense<0.000000e+00> : vector<32xf32>
    %69 = vector.multi_reduction <add>, %68, %cst_46 [1] : vector<32x16xf32> to vector<32xf32>
    %70 = vector.shape_cast %69 : vector<32xf32> to vector<32x1xf32>
    %cst_47 = arith.constant 9.99999993E-9 : f32
    %71 = vector.broadcast %cst_47 : f32 to vector<32x1xf32>
    %72 = arith.addf %70, %71 : vector<32x1xf32>
    %73 = math.rsqrt %72 : vector<32x1xf32>
    %74 = vector.broadcast %73 : vector<32x1xf32> to vector<32x16xf32>
    %75 = arith.mulf %52, %74 : vector<32x16xf32>
    %c0_48 = arith.constant 0 : index
    %c0_49 = arith.constant 0 : index
    %c0_50 = arith.constant 0 : index
    %c0_51 = arith.constant 0 : index
    %76 = vector.load %arg13[%c0_48, %c0_49, %c0_50, %c0_51] : memref<1x2x1x16xf32, #tpu.memory_space<vmem>>, vector<1x1x1x16xf32>
    %77 = vector.shape_cast %76 : vector<1x1x1x16xf32> to vector<1x16xf32>
    %78 = vector.broadcast %77 : vector<1x16xf32> to vector<32x16xf32>
    %79 = arith.mulf %75, %78 : vector<32x16xf32>
    %80 = arith.select %33, %67, %49 : vector<32x16xf32>
    %81 = arith.select %33, %79, %52 : vector<32x16xf32>
    %82 = arith.mulf %80, %35 : vector<32x16xf32>
    %cst_52 = arith.constant dense<0.000000e+00> : vector<32x16xf32>
    %83 = tpu.matmul %80, %42, %cst_52 {dimension_numbers = #tpu.dot_dimension_numbers<[1], [0], [0], [1], [0, 0, 1, 1], [], []>} : vector<32x16xf32>, vector<16x16xf32>, vector<32x16xf32> -> vector<32x16xf32>
    %84 = arith.mulf %83, %37 : vector<32x16xf32>
    %85 = arith.addf %82, %84 : vector<32x16xf32>
    %86 = arith.mulf %81, %39 : vector<32x16xf32>
    %cst_53 = arith.constant dense<0.000000e+00> : vector<32x16xf32>
    %87 = tpu.matmul %81, %42, %cst_53 {dimension_numbers = #tpu.dot_dimension_numbers<[1], [0], [0], [1], [0, 0, 1, 1], [], []>} : vector<32x16xf32>, vector<16x16xf32>, vector<32x16xf32> -> vector<32x16xf32>
    %88 = arith.mulf %87, %41 : vector<32x16xf32>
    %89 = arith.addf %86, %88 : vector<32x16xf32>
    %90 = vector.shape_cast %85 : vector<32x16xf32> to vector<4x8x16xf32>
    %91 = arith.truncf %90 : vector<4x8x16xf32> to vector<4x8x16xbf16>
    %92 = vector.shape_cast %89 : vector<32x16xf32> to vector<4x8x16xf32>
    %93 = arith.truncf %92 : vector<4x8x16xf32> to vector<4x8x16xbf16>
    %94 = vector.shape_cast %55 : vector<32x16xf32> to vector<4x8x16xf32>
    %95 = arith.truncf %94 : vector<4x8x16xf32> to vector<4x8x16xbf16>
    "tpu.trace_start"() <{level = 10 : i32, message = "bqd,bkd->bqk"}> : () -> ()
    %cst_54 = arith.constant dense<0.000000e+00> : vector<4x8x8xf32>
    %96 = tpu.matmul %91, %93, %cst_54 {dimension_numbers = #tpu.dot_dimension_numbers<[2], [2], [1], [1], [0, 0, 0, 1, 1, 1], [0], [0]>} : vector<4x8x16xbf16>, vector<4x8x16xbf16>, vector<4x8x8xf32> -> vector<4x8x8xf32>
    "tpu.trace_stop"() : () -> ()
    %cst_55 = arith.constant 2.500000e-01 : f32
    %97 = vector.broadcast %cst_55 : f32 to vector<4x8x8xf32>
    %98 = arith.mulf %96, %97 : vector<4x8x8xf32>
    %cst_56 = arith.constant -1.000000e+30 : f32
    %99 = vector.shape_cast %45 : vector<8x8xi1> to vector<1x8x8xi1>
    %100 = vector.broadcast %99 : vector<1x8x8xi1> to vector<4x8x8xi1>
    %101 = vector.broadcast %cst_56 : f32 to vector<4x8x8xf32>
    %102 = arith.select %100, %98, %101 : vector<4x8x8xi1>, vector<4x8x8xf32>
    %cst_57 = arith.constant dense<0xFF800000> : vector<4x8xf32>
    %103 = vector.multi_reduction <maximumf>, %102, %cst_57 [2] : vector<4x8x8xf32> to vector<4x8xf32>
    %104 = vector.shape_cast %103 : vector<4x8xf32> to vector<4x8x1xf32>
    %105 = vector.broadcast %104 : vector<4x8x1xf32> to vector<4x8x8xf32>
    %106 = arith.subf %102, %105 : vector<4x8x8xf32>
    %107 = math.exp %106 : vector<4x8x8xf32>
    %cst_58 = arith.constant dense<0.000000e+00> : vector<4x8xf32>
    %108 = vector.multi_reduction <add>, %107, %cst_58 [2] : vector<4x8x8xf32> to vector<4x8xf32>
    %109 = vector.shape_cast %108 : vector<4x8xf32> to vector<4x8x1xf32>
    %110 = tpu.reciprocal %109 {approx = true} : vector<4x8x1xf32> -> vector<4x8x1xf32>
    %111 = vector.broadcast %110 : vector<4x8x1xf32> to vector<4x8x8xf32>
    %112 = arith.mulf %107, %111 : vector<4x8x8xf32>
    %113 = arith.truncf %112 : vector<4x8x8xf32> to vector<4x8x8xbf16>
    "tpu.trace_start"() <{level = 10 : i32, message = "bqk,bkd->bqd"}> : () -> ()
    %cst_59 = arith.constant dense<0.000000e+00> : vector<4x8x16xf32>
    %114 = tpu.matmul %113, %95, %cst_59 {dimension_numbers = #tpu.dot_dimension_numbers<[2], [1], [1], [2], [0, 0, 0, 1, 1, 2], [0], [0]>} : vector<4x8x8xbf16>, vector<4x8x16xbf16>, vector<4x8x16xf32> -> vector<4x8x16xf32>
    "tpu.trace_stop"() : () -> ()
    %115 = vector.shape_cast %114 : vector<4x8x16xf32> to vector<32x16xf32>
    %116 = arith.truncf %115 : vector<32x16xf32> to vector<32x16xbf16>
    %c0_60 = arith.constant 0 : index
    %c0_61 = arith.constant 0 : index
    %c0_62 = arith.constant 0 : index
    %c0_63 = arith.constant 0 : index
    %117 = vector.load %arg11[%c0_60, %c0_61, %c0_62, %c0_63] : memref<1x2x16x32xbf16, #tpu.memory_space<vmem>>, vector<1x1x16x32xbf16>
    %118 = vector.shape_cast %117 : vector<1x1x16x32xbf16> to vector<16x32xbf16>
    %cst_64 = arith.constant dense<0.000000e+00> : vector<32x32xf32>
    %119 = tpu.matmul %116, %118, %cst_64 {dimension_numbers = #tpu.dot_dimension_numbers<[1], [0], [0], [1], [0, 0, 1, 1], [], []>} : vector<32x16xbf16>, vector<16x32xbf16>, vector<32x32xf32> -> vector<32x32xf32>
    %120 = arith.addf %46, %119 : vector<32x32xf32>
    %c0_65 = arith.constant 0 : index
    %c1_66 = arith.constant 1 : index
    %c0_67 = arith.constant 0 : index
    %c0_68 = arith.constant 0 : index
    %121 = vector.load %arg8[%c0_65, %c1_66, %c0_67, %c0_68] : memref<1x2x32x16xbf16, #tpu.memory_space<vmem>>, vector<1x1x32x16xbf16>
    %122 = vector.shape_cast %121 : vector<1x1x32x16xbf16> to vector<32x16xbf16>
    %cst_69 = arith.constant dense<0.000000e+00> : vector<32x16xf32>
    %123 = tpu.matmul %30, %122, %cst_69 {dimension_numbers = #tpu.dot_dimension_numbers<[1], [0], [0], [1], [0, 0, 1, 1], [], []>} : vector<32x32xbf16>, vector<32x16xbf16>, vector<32x16xf32> -> vector<32x16xf32>
    %c0_70 = arith.constant 0 : index
    %c1_71 = arith.constant 1 : index
    %c0_72 = arith.constant 0 : index
    %c0_73 = arith.constant 0 : index
    %124 = vector.load %arg9[%c0_70, %c1_71, %c0_72, %c0_73] : memref<1x2x32x16xbf16, #tpu.memory_space<vmem>>, vector<1x1x32x16xbf16>
    %125 = vector.shape_cast %124 : vector<1x1x32x16xbf16> to vector<32x16xbf16>
    %cst_74 = arith.constant dense<0.000000e+00> : vector<32x16xf32>
    %126 = tpu.matmul %30, %125, %cst_74 {dimension_numbers = #tpu.dot_dimension_numbers<[1], [0], [0], [1], [0, 0, 1, 1], [], []>} : vector<32x32xbf16>, vector<32x16xbf16>, vector<32x16xf32> -> vector<32x16xf32>
    %c0_75 = arith.constant 0 : index
    %c1_76 = arith.constant 1 : index
    %c0_77 = arith.constant 0 : index
    %c0_78 = arith.constant 0 : index
    %127 = vector.load %arg10[%c0_75, %c1_76, %c0_77, %c0_78] : memref<1x2x32x16xbf16, #tpu.memory_space<vmem>>, vector<1x1x32x16xbf16>
    %128 = vector.shape_cast %127 : vector<1x1x32x16xbf16> to vector<32x16xbf16>
    %cst_79 = arith.constant dense<0.000000e+00> : vector<32x16xf32>
    %129 = tpu.matmul %30, %128, %cst_79 {dimension_numbers = #tpu.dot_dimension_numbers<[1], [0], [0], [1], [0, 0, 1, 1], [], []>} : vector<32x32xbf16>, vector<32x16xbf16>, vector<32x16xf32> -> vector<32x16xf32>
    %130 = arith.mulf %123, %123 : vector<32x16xf32>
    %cst_80 = arith.constant dense<0.000000e+00> : vector<32xf32>
    %131 = vector.multi_reduction <add>, %130, %cst_80 [1] : vector<32x16xf32> to vector<32xf32>
    %132 = vector.shape_cast %131 : vector<32xf32> to vector<32x1xf32>
    %cst_81 = arith.constant 9.99999993E-9 : f32
    %133 = vector.broadcast %cst_81 : f32 to vector<32x1xf32>
    %134 = arith.addf %132, %133 : vector<32x1xf32>
    %135 = math.rsqrt %134 : vector<32x1xf32>
    %136 = vector.broadcast %135 : vector<32x1xf32> to vector<32x16xf32>
    %137 = arith.mulf %123, %136 : vector<32x16xf32>
    %c0_82 = arith.constant 0 : index
    %c1_83 = arith.constant 1 : index
    %c0_84 = arith.constant 0 : index
    %c0_85 = arith.constant 0 : index
    %138 = vector.load %arg12[%c0_82, %c1_83, %c0_84, %c0_85] : memref<1x2x1x16xf32, #tpu.memory_space<vmem>>, vector<1x1x1x16xf32>
    %139 = vector.shape_cast %138 : vector<1x1x1x16xf32> to vector<1x16xf32>
    %140 = vector.broadcast %139 : vector<1x16xf32> to vector<32x16xf32>
    %141 = arith.mulf %137, %140 : vector<32x16xf32>
    %142 = arith.mulf %126, %126 : vector<32x16xf32>
    %cst_86 = arith.constant dense<0.000000e+00> : vector<32xf32>
    %143 = vector.multi_reduction <add>, %142, %cst_86 [1] : vector<32x16xf32> to vector<32xf32>
    %144 = vector.shape_cast %143 : vector<32xf32> to vector<32x1xf32>
    %cst_87 = arith.constant 9.99999993E-9 : f32
    %145 = vector.broadcast %cst_87 : f32 to vector<32x1xf32>
    %146 = arith.addf %144, %145 : vector<32x1xf32>
    %147 = math.rsqrt %146 : vector<32x1xf32>
    %148 = vector.broadcast %147 : vector<32x1xf32> to vector<32x16xf32>
    %149 = arith.mulf %126, %148 : vector<32x16xf32>
    %c0_88 = arith.constant 0 : index
    %c1_89 = arith.constant 1 : index
    %c0_90 = arith.constant 0 : index
    %c0_91 = arith.constant 0 : index
    %150 = vector.load %arg13[%c0_88, %c1_89, %c0_90, %c0_91] : memref<1x2x1x16xf32, #tpu.memory_space<vmem>>, vector<1x1x1x16xf32>
    %151 = vector.shape_cast %150 : vector<1x1x1x16xf32> to vector<1x16xf32>
    %152 = vector.broadcast %151 : vector<1x16xf32> to vector<32x16xf32>
    %153 = arith.mulf %149, %152 : vector<32x16xf32>
    %154 = arith.select %33, %141, %123 : vector<32x16xf32>
    %155 = arith.select %33, %153, %126 : vector<32x16xf32>
    %156 = arith.mulf %154, %35 : vector<32x16xf32>
    %cst_92 = arith.constant dense<0.000000e+00> : vector<32x16xf32>
    %157 = tpu.matmul %154, %42, %cst_92 {dimension_numbers = #tpu.dot_dimension_numbers<[1], [0], [0], [1], [0, 0, 1, 1], [], []>} : vector<32x16xf32>, vector<16x16xf32>, vector<32x16xf32> -> vector<32x16xf32>
    %158 = arith.mulf %157, %37 : vector<32x16xf32>
    %159 = arith.addf %156, %158 : vector<32x16xf32>
    %160 = arith.mulf %155, %39 : vector<32x16xf32>
    %cst_93 = arith.constant dense<0.000000e+00> : vector<32x16xf32>
    %161 = tpu.matmul %155, %42, %cst_93 {dimension_numbers = #tpu.dot_dimension_numbers<[1], [0], [0], [1], [0, 0, 1, 1], [], []>} : vector<32x16xf32>, vector<16x16xf32>, vector<32x16xf32> -> vector<32x16xf32>
    %162 = arith.mulf %161, %41 : vector<32x16xf32>
    %163 = arith.addf %160, %162 : vector<32x16xf32>
    %164 = vector.shape_cast %159 : vector<32x16xf32> to vector<4x8x16xf32>
    %165 = arith.truncf %164 : vector<4x8x16xf32> to vector<4x8x16xbf16>
    %166 = vector.shape_cast %163 : vector<32x16xf32> to vector<4x8x16xf32>
    %167 = arith.truncf %166 : vector<4x8x16xf32> to vector<4x8x16xbf16>
    %168 = vector.shape_cast %129 : vector<32x16xf32> to vector<4x8x16xf32>
    %169 = arith.truncf %168 : vector<4x8x16xf32> to vector<4x8x16xbf16>
    "tpu.trace_start"() <{level = 10 : i32, message = "bqd,bkd->bqk"}> : () -> ()
    %cst_94 = arith.constant dense<0.000000e+00> : vector<4x8x8xf32>
    %170 = tpu.matmul %165, %167, %cst_94 {dimension_numbers = #tpu.dot_dimension_numbers<[2], [2], [1], [1], [0, 0, 0, 1, 1, 1], [0], [0]>} : vector<4x8x16xbf16>, vector<4x8x16xbf16>, vector<4x8x8xf32> -> vector<4x8x8xf32>
    "tpu.trace_stop"() : () -> ()
    %cst_95 = arith.constant 2.500000e-01 : f32
    %171 = vector.broadcast %cst_95 : f32 to vector<4x8x8xf32>
    %172 = arith.mulf %170, %171 : vector<4x8x8xf32>
    %cst_96 = arith.constant -1.000000e+30 : f32
    %173 = vector.shape_cast %45 : vector<8x8xi1> to vector<1x8x8xi1>
    %174 = vector.broadcast %173 : vector<1x8x8xi1> to vector<4x8x8xi1>
    %175 = vector.broadcast %cst_96 : f32 to vector<4x8x8xf32>
    %176 = arith.select %174, %172, %175 : vector<4x8x8xi1>, vector<4x8x8xf32>
    %cst_97 = arith.constant dense<0xFF800000> : vector<4x8xf32>
    %177 = vector.multi_reduction <maximumf>, %176, %cst_97 [2] : vector<4x8x8xf32> to vector<4x8xf32>
    %178 = vector.shape_cast %177 : vector<4x8xf32> to vector<4x8x1xf32>
    %179 = vector.broadcast %178 : vector<4x8x1xf32> to vector<4x8x8xf32>
    %180 = arith.subf %176, %179 : vector<4x8x8xf32>
    %181 = math.exp %180 : vector<4x8x8xf32>
    %cst_98 = arith.constant dense<0.000000e+00> : vector<4x8xf32>
    %182 = vector.multi_reduction <add>, %181, %cst_98 [2] : vector<4x8x8xf32> to vector<4x8xf32>
    %183 = vector.shape_cast %182 : vector<4x8xf32> to vector<4x8x1xf32>
    %184 = tpu.reciprocal %183 {approx = true} : vector<4x8x1xf32> -> vector<4x8x1xf32>
    %185 = vector.broadcast %184 : vector<4x8x1xf32> to vector<4x8x8xf32>
    %186 = arith.mulf %181, %185 : vector<4x8x8xf32>
    %187 = arith.truncf %186 : vector<4x8x8xf32> to vector<4x8x8xbf16>
    "tpu.trace_start"() <{level = 10 : i32, message = "bqk,bkd->bqd"}> : () -> ()
    %cst_99 = arith.constant dense<0.000000e+00> : vector<4x8x16xf32>
    %188 = tpu.matmul %187, %169, %cst_99 {dimension_numbers = #tpu.dot_dimension_numbers<[2], [1], [1], [2], [0, 0, 0, 1, 1, 2], [0], [0]>} : vector<4x8x8xbf16>, vector<4x8x16xbf16>, vector<4x8x16xf32> -> vector<4x8x16xf32>
    "tpu.trace_stop"() : () -> ()
    %189 = vector.shape_cast %188 : vector<4x8x16xf32> to vector<32x16xf32>
    %190 = arith.truncf %189 : vector<32x16xf32> to vector<32x16xbf16>
    %c0_100 = arith.constant 0 : index
    %c1_101 = arith.constant 1 : index
    %c0_102 = arith.constant 0 : index
    %c0_103 = arith.constant 0 : index
    %191 = vector.load %arg11[%c0_100, %c1_101, %c0_102, %c0_103] : memref<1x2x16x32xbf16, #tpu.memory_space<vmem>>, vector<1x1x16x32xbf16>
    %192 = vector.shape_cast %191 : vector<1x1x16x32xbf16> to vector<16x32xbf16>
    %cst_104 = arith.constant dense<0.000000e+00> : vector<32x32xf32>
    %193 = tpu.matmul %190, %192, %cst_104 {dimension_numbers = #tpu.dot_dimension_numbers<[1], [0], [0], [1], [0, 0, 1, 1], [], []>} : vector<32x16xbf16>, vector<16x32xbf16>, vector<32x32xf32> -> vector<32x32xf32>
    %194 = arith.addf %120, %193 : vector<32x32xf32>
    %195 = arith.addf %3, %194 : vector<32x32xf32>
    %c0_105 = arith.constant 0 : index
    %c0_106 = arith.constant 0 : index
    %c0_107 = arith.constant 0 : index
    %196 = vector.load %arg14[%c0_105, %c0_106, %c0_107] : memref<1x1x32xf32, #tpu.memory_space<vmem>>, vector<1x1x32xf32>
    %197 = vector.shape_cast %196 : vector<1x1x32xf32> to vector<1x32xf32>
    %c0_108 = arith.constant 0 : index
    %c0_109 = arith.constant 0 : index
    %c0_110 = arith.constant 0 : index
    %198 = vector.load %arg15[%c0_108, %c0_109, %c0_110] : memref<1x1x32xf32, #tpu.memory_space<vmem>>, vector<1x1x32xf32>
    %199 = vector.shape_cast %198 : vector<1x1x32xf32> to vector<1x32xf32>
    %cst_111 = arith.constant dense<0.000000e+00> : vector<32xf32>
    %200 = vector.multi_reduction <add>, %195, %cst_111 [1] : vector<32x32xf32> to vector<32xf32>
    %201 = vector.shape_cast %200 : vector<32xf32> to vector<32x1xf32>
    %cst_112 = arith.constant 3.200000e+01 : f32
    %202 = vector.broadcast %cst_112 : f32 to vector<32x1xf32>
    %203 = arith.divf %201, %202 : vector<32x1xf32>
    %204 = vector.broadcast %203 : vector<32x1xf32> to vector<32x32xf32>
    %205 = arith.subf %195, %204 : vector<32x32xf32>
    %206 = arith.mulf %205, %205 : vector<32x32xf32>
    %cst_113 = arith.constant dense<0.000000e+00> : vector<32xf32>
    %207 = vector.multi_reduction <add>, %206, %cst_113 [1] : vector<32x32xf32> to vector<32xf32>
    %208 = vector.shape_cast %207 : vector<32xf32> to vector<32x1xf32>
    %cst_114 = arith.constant 3.200000e+01 : f32
    %209 = vector.broadcast %cst_114 : f32 to vector<32x1xf32>
    %210 = arith.divf %208, %209 : vector<32x1xf32>
    %211 = vector.broadcast %203 : vector<32x1xf32> to vector<32x32xf32>
    %212 = arith.subf %195, %211 : vector<32x32xf32>
    %cst_115 = arith.constant 9.99999974E-6 : f32
    %213 = vector.broadcast %cst_115 : f32 to vector<32x1xf32>
    %214 = arith.addf %210, %213 : vector<32x1xf32>
    %215 = math.rsqrt %214 : vector<32x1xf32>
    %216 = vector.broadcast %215 : vector<32x1xf32> to vector<32x32xf32>
    %217 = arith.mulf %212, %216 : vector<32x32xf32>
    %218 = vector.broadcast %197 : vector<1x32xf32> to vector<32x32xf32>
    %219 = arith.mulf %217, %218 : vector<32x32xf32>
    %220 = vector.broadcast %199 : vector<1x32xf32> to vector<32x32xf32>
    %221 = arith.addf %219, %220 : vector<32x32xf32>
    %222 = arith.truncf %221 : vector<32x32xf32> to vector<32x32xbf16>
    %c0_116 = arith.constant 0 : index
    %c0_117 = arith.constant 0 : index
    %c0_118 = arith.constant 0 : index
    %223 = vector.load %arg16[%c0_116, %c0_117, %c0_118] : memref<1x32x64xbf16, #tpu.memory_space<vmem>>, vector<1x32x64xbf16>
    %224 = vector.shape_cast %223 : vector<1x32x64xbf16> to vector<32x64xbf16>
    %cst_119 = arith.constant dense<0.000000e+00> : vector<32x64xf32>
    %225 = tpu.matmul %222, %224, %cst_119 {dimension_numbers = #tpu.dot_dimension_numbers<[1], [0], [0], [1], [0, 0, 1, 1], [], []>} : vector<32x32xbf16>, vector<32x64xbf16>, vector<32x64xf32> -> vector<32x64xf32>
    %c0_120 = arith.constant 0 : index
    %c0_121 = arith.constant 0 : index
    %c0_122 = arith.constant 0 : index
    %226 = vector.load %arg17[%c0_120, %c0_121, %c0_122] : memref<1x32x64xbf16, #tpu.memory_space<vmem>>, vector<1x32x64xbf16>
    %227 = vector.shape_cast %226 : vector<1x32x64xbf16> to vector<32x64xbf16>
    %cst_123 = arith.constant dense<0.000000e+00> : vector<32x64xf32>
    %228 = tpu.matmul %222, %227, %cst_123 {dimension_numbers = #tpu.dot_dimension_numbers<[1], [0], [0], [1], [0, 0, 1, 1], [], []>} : vector<32x32xbf16>, vector<32x64xbf16>, vector<32x64xf32> -> vector<32x64xf32>
    %229 = arith.negf %228 : vector<32x64xf32>
    %230 = math.exp %229 : vector<32x64xf32>
    %cst_124 = arith.constant 1.000000e+00 : f32
    %231 = vector.broadcast %cst_124 : f32 to vector<32x64xf32>
    %232 = arith.addf %231, %230 : vector<32x64xf32>
    %233 = arith.divf %231, %232 : vector<32x64xf32>
    %234 = arith.mulf %228, %233 : vector<32x64xf32>
    %235 = arith.mulf %234, %225 : vector<32x64xf32>
    %236 = arith.truncf %235 : vector<32x64xf32> to vector<32x64xbf16>
    %c0_125 = arith.constant 0 : index
    %c0_126 = arith.constant 0 : index
    %c0_127 = arith.constant 0 : index
    %237 = vector.load %arg18[%c0_125, %c0_126, %c0_127] : memref<1x64x32xbf16, #tpu.memory_space<vmem>>, vector<1x64x32xbf16>
    %238 = vector.shape_cast %237 : vector<1x64x32xbf16> to vector<64x32xbf16>
    %cst_128 = arith.constant dense<0.000000e+00> : vector<32x32xf32>
    %239 = tpu.matmul %236, %238, %cst_128 {dimension_numbers = #tpu.dot_dimension_numbers<[1], [0], [0], [1], [0, 0, 1, 1], [], []>} : vector<32x64xbf16>, vector<64x32xbf16>, vector<32x32xf32> -> vector<32x32xf32>
    %240 = arith.addf %195, %239 : vector<32x32xf32>
    %c0_129 = arith.constant 0 : index
    %c0_130 = arith.constant 0 : index
    %241 = vector.load %arg20[%c0_129, %c0_130] : memref<32x32xf32, #tpu.memory_space<vmem>>, vector<32x32xf32>
    tpu.vector_store %arg20[%c0_129, %c0_130], %240 {strides = array<i32>} : memref<32x32xf32, #tpu.memory_space<vmem>>, vector<32x32xf32>,
    %c1_i32 = arith.constant 1 : i32
    %242 = arith.cmpi eq, %arg1, %c1_i32 : i32
    %243 = arith.extui %242 : i1 to i32
    %c0_i32_131 = arith.constant 0 : i32
    %244 = arith.cmpi ne, %243, %c0_i32_131 : i32
    scf.if %244 {
      %c0_132 = arith.constant 0 : index
      %c0_133 = arith.constant 0 : index
      %245 = vector.load %arg19[%c0_132, %c0_133] : memref<32x32xf32, #tpu.memory_space<vmem>>, vector<32x32xf32>
      tpu.vector_store %arg19[%c0_132, %c0_133], %240 {strides = array<i32>} : memref<32x32xf32, #tpu.memory_space<vmem>>, vector<32x32xf32>,
    } else {
    }
    return
  }
  func.func @transform_0(%arg0: i32, %arg1: i32) -> (i32, i32) {
    %c0_i32 = arith.constant 0 : i32
    %c0_i32_0 = arith.constant 0 : i32
    return %arg0, %c0_i32 : i32, i32
  }
  func.func @transform_1(%arg0: i32, %arg1: i32) -> (i32, i32, i32) {
    %c0_i32 = arith.constant 0 : i32
    %c0_i32_0 = arith.constant 0 : i32
    %c0_i32_1 = arith.constant 0 : i32
    %c0_i32_2 = arith.constant 0 : i32
    return %c0_i32, %c0_i32_0, %c0_i32_1 : i32, i32, i32
  }
  func.func @transform_2(%arg0: i32, %arg1: i32) -> (i32, i32) {
    %c0_i32 = arith.constant 0 : i32
    %c0_i32_0 = arith.constant 0 : i32
    %c0_i32_1 = arith.constant 0 : i32
    return %c0_i32, %c0_i32_0 : i32, i32
  }
  func.func @transform_3(%arg0: i32, %arg1: i32) -> i32 {
    %c0_i32 = arith.constant 0 : i32
    %c0_i32_0 = arith.constant 0 : i32
    return %c0_i32 : i32
  }
  func.func @transform_4(%arg0: i32, %arg1: i32) -> (i32, i32, i32) {
    %c0_i32 = arith.constant 0 : i32
    %c0_i32_0 = arith.constant 0 : i32
    %c0_i32_1 = arith.constant 0 : i32
    return %arg1, %c0_i32, %c0_i32_0 : i32, i32, i32
  }
  func.func @transform_5(%arg0: i32, %arg1: i32) -> (i32, i32, i32) {
    %c0_i32 = arith.constant 0 : i32
    %c0_i32_0 = arith.constant 0 : i32
    %c0_i32_1 = arith.constant 0 : i32
    return %arg1, %c0_i32, %c0_i32_0 : i32, i32, i32
  }
  func.func @transform_6(%arg0: i32, %arg1: i32) -> (i32, i32, i32, i32) {
    %c0_i32 = arith.constant 0 : i32
    %c0_i32_0 = arith.constant 0 : i32
    %c0_i32_1 = arith.constant 0 : i32
    %c0_i32_2 = arith.constant 0 : i32
    return %arg1, %c0_i32, %c0_i32_0, %c0_i32_1 : i32, i32, i32, i32
  }
  func.func @transform_7(%arg0: i32, %arg1: i32) -> (i32, i32, i32, i32) {
    %c0_i32 = arith.constant 0 : i32
    %c0_i32_0 = arith.constant 0 : i32
    %c0_i32_1 = arith.constant 0 : i32
    %c0_i32_2 = arith.constant 0 : i32
    return %arg1, %c0_i32, %c0_i32_0, %c0_i32_1 : i32, i32, i32, i32
  }
  func.func @transform_8(%arg0: i32, %arg1: i32) -> (i32, i32, i32, i32) {
    %c0_i32 = arith.constant 0 : i32
    %c0_i32_0 = arith.constant 0 : i32
    %c0_i32_1 = arith.constant 0 : i32
    %c0_i32_2 = arith.constant 0 : i32
    return %arg1, %c0_i32, %c0_i32_0, %c0_i32_1 : i32, i32, i32, i32
  }
  func.func @transform_9(%arg0: i32, %arg1: i32) -> (i32, i32, i32, i32) {
    %c0_i32 = arith.constant 0 : i32
    %c0_i32_0 = arith.constant 0 : i32
    %c0_i32_1 = arith.constant 0 : i32
    %c0_i32_2 = arith.constant 0 : i32
    return %arg1, %c0_i32, %c0_i32_0, %c0_i32_1 : i32, i32, i32, i32
  }
  func.func @transform_10(%arg0: i32, %arg1: i32) -> (i32, i32, i32, i32) {
    %c0_i32 = arith.constant 0 : i32
    %c0_i32_0 = arith.constant 0 : i32
    %c0_i32_1 = arith.constant 0 : i32
    %c0_i32_2 = arith.constant 0 : i32
    return %arg1, %c0_i32, %c0_i32_0, %c0_i32_1 : i32, i32, i32, i32
  }
  func.func @transform_11(%arg0: i32, %arg1: i32) -> (i32, i32, i32, i32) {
    %c0_i32 = arith.constant 0 : i32
    %c0_i32_0 = arith.constant 0 : i32
    %c0_i32_1 = arith.constant 0 : i32
    %c0_i32_2 = arith.constant 0 : i32
    return %arg1, %c0_i32, %c0_i32_0, %c0_i32_1 : i32, i32, i32, i32
  }
  func.func @transform_12(%arg0: i32, %arg1: i32) -> (i32, i32, i32) {
    %c0_i32 = arith.constant 0 : i32
    %c0_i32_0 = arith.constant 0 : i32
    %c0_i32_1 = arith.constant 0 : i32
    return %arg1, %c0_i32, %c0_i32_0 : i32, i32, i32
  }
  func.func @transform_13(%arg0: i32, %arg1: i32) -> (i32, i32, i32) {
    %c0_i32 = arith.constant 0 : i32
    %c0_i32_0 = arith.constant 0 : i32
    %c0_i32_1 = arith.constant 0 : i32
    return %arg1, %c0_i32, %c0_i32_0 : i32, i32, i32
  }
  func.func @transform_14(%arg0: i32, %arg1: i32) -> (i32, i32, i32) {
    %c0_i32 = arith.constant 0 : i32
    %c0_i32_0 = arith.constant 0 : i32
    %c0_i32_1 = arith.constant 0 : i32
    return %arg1, %c0_i32, %c0_i32_0 : i32, i32, i32
  }
  func.func @transform_15(%arg0: i32, %arg1: i32) -> (i32, i32, i32) {
    %c0_i32 = arith.constant 0 : i32
    %c0_i32_0 = arith.constant 0 : i32
    %c0_i32_1 = arith.constant 0 : i32
    return %arg1, %c0_i32, %c0_i32_0 : i32, i32, i32
  }
  func.func @transform_16(%arg0: i32, %arg1: i32) -> (i32, i32, i32) {
    %c0_i32 = arith.constant 0 : i32
    %c0_i32_0 = arith.constant 0 : i32
    %c0_i32_1 = arith.constant 0 : i32
    return %arg1, %c0_i32, %c0_i32_0 : i32, i32, i32
  }
  func.func @transform_17(%arg0: i32, %arg1: i32) -> (i32, i32) {
    %c0_i32 = arith.constant 0 : i32
    %c0_i32_0 = arith.constant 0 : i32
    return %arg0, %c0_i32 : i32, i32
  }
}

</mosaic_0001>

<llo_original>
// kernel: hmte_forward.1
$region0: #{hmte_forward.1}
  #allocation0 [shape = 'u32[]', space=smem, size = 0x4, offset = 0x4, fixed_abs, tag = 'smem constant byte address 0x4 - core index']
  #allocation1 [shape = 'u32[144,128]{1,0:T(1,128)}', space=vmem, size = 0x12000, scoped, tag = 'internal scratch']
  #allocation2 [shape = 'f32[32,32]{1,0:T(8,128)}', space=vmem, size = 0x4000, scoped, tag = 'scratch operand']
  %s0 = inlined_call_operand.vmem [shape: f32[32,32], index: 0, kind: input, shape index: {}, may-alias: {0,17}]
  %s1 = inlined_call_operand.vmem [shape: f32[4,32,16], index: 1, kind: input, shape index: {}]
  %s2 = inlined_call_operand.vmem [shape: f32[16,16], index: 2, kind: input, shape index: {}]
  %s3 = inlined_call_operand.vmem [shape: s32[2], index: 3, kind: input, shape index: {}]
  %s4 = inlined_call_operand.vmem [shape: f32[2,1,32], index: 4, kind: input, shape index: {}]
  %s5 = inlined_call_operand.vmem [shape: f32[2,1,32], index: 5, kind: input, shape index: {}]
  %s6 = inlined_call_operand.vmem [shape: bf16[2,2,32,16], index: 6, kind: input, shape index: {}]
  %s7 = inlined_call_operand.vmem [shape: bf16[2,2,32,16], index: 7, kind: input, shape index: {}]
  %s8 = inlined_call_operand.vmem [shape: bf16[2,2,32,16], index: 8, kind: input, shape index: {}]
  %s9 = inlined_call_operand.vmem [shape: bf16[2,2,16,32], index: 9, kind: input, shape index: {}]
  %s10 = inlined_call_operand.vmem [shape: f32[2,2,1,16], index: 10, kind: input, shape index: {}]
  %s11 = inlined_call_operand.vmem [shape: f32[2,2,1,16], index: 11, kind: input, shape index: {}]
  %s12 = inlined_call_operand.vmem [shape: f32[2,1,32], index: 12, kind: input, shape index: {}]
  %s13 = inlined_call_operand.vmem [shape: f32[2,1,32], index: 13, kind: input, shape index: {}]
  %s14 = inlined_call_operand.vmem [shape: bf16[2,32,64], index: 14, kind: input, shape index: {}]
  %s15 = inlined_call_operand.vmem [shape: bf16[2,32,64], index: 15, kind: input, shape index: {}]
  %s16 = inlined_call_operand.vmem [shape: bf16[2,64,32], index: 16, kind: input, shape index: {}]
  %s17 = inlined_call_operand.vmem [shape: f32[32,32], index: 17, kind: output, shape index: {}, may-alias: {0,17}]
  %s18 = sld [smem:[#allocation0]]
  $region113: #{hmte_forward.1} parent=0
    _
  %s20 = ssub.s32 1, %s18
  %s21 = scalar_select 0, %s20, %s18
  $region1: #{hmte_forward.1} parent=0
    #allocation3 [shape = 'u8[512]{0}', space=smem, size = 0x200, scoped, tag = 'input window, operand 3, single buffered']
    #allocation4 [shape = 's32[2]{0}', space=sflag, size = 0x8, scoped, tag = 'scoped memory for hmte_forward.1']
    %22 = vsyncpa [#allocation4], 0
    loop: start=0, step=1, limit=4
    $region2: #{hmte_forward.1} parent=1 // loop_pre_header
      _
    $region3: #{hmte_forward.1} parent=1 // loop_header
      %s24 = sphi 0, %s28
      %p25 = scmp.ge.s32.totalorder %s24, 4
      %s31 = sphi 0, %s43
      %s32 = sphi 0, %s39
      %s33 = sphi 0, %s31
      %s34 = sphi 0, %s32
      %s35 = sphi 0, %s33
      %s36 = sphi 0, %s34
      %s46 = sphi 0, %s48
      %s49 = sphi 0, %s46
      %s50 = sphi 0, %s49
      %s66 = sphi 0, %s50
      %s70 = sphi 0, %s70
      %s72 = sphi 0, %s70
      %s73 = sphi 0, %s72
      %s87 = sphi 0, %s73
      %s91 = sphi 0, %s91
      %s93 = sphi 0, %s91
      %s94 = sphi 0, %s93
      %s108 = sphi 0, %s94
      %s112 = sphi 0, %s112
      %s114 = sphi 0, %s112
      %s115 = sphi 0, %s114
      %s129 = sphi 0, %s115
      %s135 = sphi 0, %s137
      %s138 = sphi 0, %s135
      %s139 = sphi 0, %s138
      %s155 = sphi 0, %s139
      %s161 = sphi 0, %s163
      %s164 = sphi 0, %s161
      %s165 = sphi 0, %s164
      %s181 = sphi 0, %s165
      %s187 = sphi 0, %s189
      %s190 = sphi 0, %s187
      %s191 = sphi 0, %s190
      %s207 = sphi 0, %s191
      %s213 = sphi 0, %s215
      %s216 = sphi 0, %s213
      %s217 = sphi 0, %s216
      %s233 = sphi 0, %s217
      %s239 = sphi 0, %s241
      %s242 = sphi 0, %s239
      %s243 = sphi 0, %s242
      %s259 = sphi 0, %s243
      %s265 = sphi 0, %s267
      %s268 = sphi 0, %s265
      %s269 = sphi 0, %s268
      %s285 = sphi 0, %s269
      %s291 = sphi 0, %s293
      %s294 = sphi 0, %s291
      %s295 = sphi 0, %s294
      %s311 = sphi 0, %s295
      %s317 = sphi 0, %s319
      %s320 = sphi 0, %s317
      %s321 = sphi 0, %s320
      %s337 = sphi 0, %s321
      %s343 = sphi 0, %s345
      %s346 = sphi 0, %s343
      %s347 = sphi 0, %s346
      %s363 = sphi 0, %s347
      %s369 = sphi 0, %s371
      %s372 = sphi 0, %s369
      %s373 = sphi 0, %s372
      %s389 = sphi 0, %s373
      %s395 = sphi 0, %s397
      %s398 = sphi 0, %s395
      %s399 = sphi 0, %s398
      %s415 = sphi 0, %s399
      %s421 = sphi 0, %s423
      %s424 = sphi 0, %s421
      %s425 = sphi 0, %s424
      %s441 = sphi 0, %s425
      %s447 = sphi 0, %s449
      %s450 = sphi 0, %s447
      %s451 = sphi 0, %s450
      %s467 = sphi 0, %s451
      %s473 = sphi 0, %s475
      %s476 = sphi 0, %s473
      %s477 = sphi 0, %s476
      %s493 = sphi 0, %s477
    $region4: #{hmte_forward.1} parent=1 // loop_header_branch
      %27 = sbr.rel (%p25) target = $region8
    $region5: #{hmte_forward.1} parent=1 // loop_body
      %s29 = ssub.s32 %s24, 1
      %s30 = ssub.s32 %s24, 2
      %s37 = sadd.s32 1, %s32
      %p38 = scmp.ge.s32.totalorder %s37, 2
      %s39 = scalar_select %p38, 0, %s37
      %s40 = sadd.s32 1, %s31
      %s41 = scalar_select %p38, %s40, %s31
      %p42 = scmp.ge.s32.totalorder %s41, 1
      %s43 = scalar_select %p42, 0, %s41
      %s44 = ssub.s32 %s31, %s43
      %p45 = scmp.eq.s32.totalorder %s44, 0
      %s47 = sadd.s32 %s46, 1
      %s48 = scalar_select %p45, %s46, %s47
      %p51 = pneg %p45
      %p52 = scmp.eq.s32.totalorder %s24, 1
      %p53 = por %p51, %p52
      %p54 = scmp.ne.s32.totalorder %s46, %s49
      %p55 = scmp.eq.s32.totalorder %s24, 0
      %p56 = por %p54, %p55
      %p57 = scmp.ne.s32.totalorder %s46, %s49
      %p58 = scmp.eq.s32.totalorder %s29, 1
      %p59 = por %p57, %p58
      %p60 = scmp.ne.s32.totalorder %s49, %s50
      %p61 = scmp.eq.s32.totalorder %s29, 0
      %p62 = por %p60, %p61
      %p63 = scmp.ne.s32.totalorder %s49, %s50
      %p64 = scmp.eq.s32.totalorder %s30, 1
      %p65 = por %p63, %p64
      %p67 = scmp.ne.s32.totalorder %s50, %s66
      %p68 = scmp.eq.s32.totalorder %s30, 0
      %p69 = por %p67, %p68
      %s71 = sadd.s32 %s70, 1
      %p74 = scmp.eq.s32.totalorder %s24, 1
      %p75 = scmp.ne.s32.totalorder %s70, %s72
      %p76 = scmp.eq.s32.totalorder %s24, 0
      %p77 = por %p75, %p76
      %p78 = scmp.ne.s32.totalorder %s70, %s72
      %p79 = scmp.eq.s32.totalorder %s29, 1
      %p80 = por %p78, %p79
      %p81 = scmp.ne.s32.totalorder %s72, %s73
      %p82 = scmp.eq.s32.totalorder %s29, 0
      %p83 = por %p81, %p82
      %p84 = scmp.ne.s32.totalorder %s72, %s73
      %p85 = scmp.eq.s32.totalorder %s30, 1
      %p86 = por %p84, %p85
      %p88 = scmp.ne.s32.totalorder %s73, %s87
      %p89 = scmp.eq.s32.totalorder %s30, 0
      %p90 = por %p88, %p89
      %s92 = sadd.s32 %s91, 1
      %p95 = scmp.eq.s32.totalorder %s24, 1
      %p96 = scmp.ne.s32.totalorder %s91, %s93
      %p97 = scmp.eq.s32.totalorder %s24, 0
      %p98 = por %p96, %p97
      %p99 = scmp.ne.s32.totalorder %s91, %s93
      %p100 = scmp.eq.s32.totalorder %s29, 1
      %p101 = por %p99, %p100
      %p102 = scmp.ne.s32.totalorder %s93, %s94
      %p103 = scmp.eq.s32.totalorder %s29, 0
      %p104 = por %p102, %p103
      %p105 = scmp.ne.s32.totalorder %s93, %s94
      %p106 = scmp.eq.s32.totalorder %s30, 1
      %p107 = por %p105, %p106
      %p109 = scmp.ne.s32.totalorder %s94, %s108
      %p110 = scmp.eq.s32.totalorder %s30, 0
      %p111 = por %p109, %p110
      %s113 = sadd.s32 %s112, 1
      %p116 = scmp.eq.s32.totalorder %s24, 1
      %p117 = scmp.ne.s32.totalorder %s112, %s114
      %p118 = scmp.eq.s32.totalorder %s24, 0
      %p119 = por %p117, %p118
      %p120 = scmp.ne.s32.totalorder %s112, %s114
      %p121 = scmp.eq.s32.totalorder %s29, 1
      %p122 = por %p120, %p121
      %p123 = scmp.ne.s32.totalorder %s114, %s115
      %p124 = scmp.eq.s32.totalorder %s29, 0
      %p125 = por %p123, %p124
      %p126 = scmp.ne.s32.totalorder %s114, %s115
      %p127 = scmp.eq.s32.totalorder %s30, 1
      %p128 = por %p126, %p127
      %p130 = scmp.ne.s32.totalorder %s115, %s129
      %p131 = scmp.eq.s32.totalorder %s30, 0
      %p132 = por %p130, %p131
      %s133 = ssub.s32 %s32, %s39
      %p134 = scmp.eq.s32.totalorder %s133, 0
      %s136 = sadd.s32 %s135, 1
      %s137 = scalar_select %p134, %s135, %s136
      %p140 = pneg %p134
      %p141 = scmp.eq.s32.totalorder %s24, 1
      %p142 = por %p140, %p141
      %p143 = scmp.ne.s32.totalorder %s135, %s138
      %p144 = scmp.eq.s32.totalorder %s24, 0
      %p145 = por %p143, %p144
      %p146 = scmp.ne.s32.totalorder %s135, %s138
      %p147 = scmp.eq.s32.totalorder %s29, 1
      %p148 = por %p146, %p147
      %p149 = scmp.ne.s32.totalorder %s138, %s139
      %p150 = scmp.eq.s32.totalorder %s29, 0
      %p151 = por %p149, %p150
      %p152 = scmp.ne.s32.totalorder %s138, %s139
      %p153 = scmp.eq.s32.totalorder %s30, 1
      %p154 = por %p152, %p153
      %p156 = scmp.ne.s32.totalorder %s139, %s155
      %p157 = scmp.eq.s32.totalorder %s30, 0
      %p158 = por %p156, %p157
      %s159 = ssub.s32 %s32, %s39
      %p160 = scmp.eq.s32.totalorder %s159, 0
      %s162 = sadd.s32 %s161, 1
      %s163 = scalar_select %p160, %s161, %s162
      %p166 = pneg %p160
      %p167 = scmp.eq.s32.totalorder %s24, 1
      %p168 = por %p166, %p167
      %p169 = scmp.ne.s32.totalorder %s161, %s164
      %p170 = scmp.eq.s32.totalorder %s24, 0
      %p171 = por %p169, %p170
      %p172 = scmp.ne.s32.totalorder %s161, %s164
      %p173 = scmp.eq.s32.totalorder %s29, 1
      %p174 = por %p172, %p173
      %p175 = scmp.ne.s32.totalorder %s164, %s165
      %p176 = scmp.eq.s32.totalorder %s29, 0
      %p177 = por %p175, %p176
      %p178 = scmp.ne.s32.totalorder %s164, %s165
      %p179 = scmp.eq.s32.totalorder %s30, 1
      %p180 = por %p178, %p179
      %p182 = scmp.ne.s32.totalorder %s165, %s181
      %p183 = scmp.eq.s32.totalorder %s30, 0
      %p184 = por %p182, %p183
      %s185 = ssub.s32 %s32, %s39
      %p186 = scmp.eq.s32.totalorder %s185, 0
      %s188 = sadd.s32 %s187, 1
      %s189 = scalar_select %p186, %s187, %s188
      %p192 = pneg %p186
      %p193 = scmp.eq.s32.totalorder %s24, 1
      %p194 = por %p192, %p193
      %p195 = scmp.ne.s32.totalorder %s187, %s190
      %p196 = scmp.eq.s32.totalorder %s24, 0
      %p197 = por %p195, %p196
      %p198 = scmp.ne.s32.totalorder %s187, %s190
      %p199 = scmp.eq.s32.totalorder %s29, 1
      %p200 = por %p198, %p199
      %p201 = scmp.ne.s32.totalorder %s190, %s191
      %p202 = scmp.eq.s32.totalorder %s29, 0
      %p203 = por %p201, %p202
      %p204 = scmp.ne.s32.totalorder %s190, %s191
      %p205 = scmp.eq.s32.totalorder %s30, 1
      %p206 = por %p204, %p205
      %p208 = scmp.ne.s32.totalorder %s191, %s207
      %p209 = scmp.eq.s32.totalorder %s30, 0
      %p210 = por %p208, %p209
      %s211 = ssub.s32 %s32, %s39
      %p212 = scmp.eq.s32.totalorder %s211, 0
      %s214 = sadd.s32 %s213, 1
      %s215 = scalar_select %p212, %s213, %s214
      %p218 = pneg %p212
      %p219 = scmp.eq.s32.totalorder %s24, 1
      %p220 = por %p218, %p219
      %p221 = scmp.ne.s32.totalorder %s213, %s216
      %p222 = scmp.eq.s32.totalorder %s24, 0
      %p223 = por %p221, %p222
      %p224 = scmp.ne.s32.totalorder %s213, %s216
      %p225 = scmp.eq.s32.totalorder %s29, 1
      %p226 = por %p224, %p225
      %p227 = scmp.ne.s32.totalorder %s216, %s217
      %p228 = scmp.eq.s32.totalorder %s29, 0
      %p229 = por %p227, %p228
      %p230 = scmp.ne.s32.totalorder %s216, %s217
      %p231 = scmp.eq.s32.totalorder %s30, 1
      %p232 = por %p230, %p231
      %p234 = scmp.ne.s32.totalorder %s217, %s233
      %p235 = scmp.eq.s32.totalorder %s30, 0
      %p236 = por %p234, %p235
      %s237 = ssub.s32 %s32, %s39
      %p238 = scmp.eq.s32.totalorder %s237, 0
      %s240 = sadd.s32 %s239, 1
      %s241 = scalar_select %p238, %s239, %s240
      %p244 = pneg %p238
      %p245 = scmp.eq.s32.totalorder %s24, 1
      %p246 = por %p244, %p245
      %p247 = scmp.ne.s32.totalorder %s239, %s242
      %p248 = scmp.eq.s32.totalorder %s24, 0
      %p249 = por %p247, %p248
      %p250 = scmp.ne.s32.totalorder %s239, %s242
      %p251 = scmp.eq.s32.totalorder %s29, 1
      %p252 = por %p250, %p251
      %p253 = scmp.ne.s32.totalorder %s242, %s243
      %p254 = scmp.eq.s32.totalorder %s29, 0
      %p255 = por %p253, %p254
      %p256 = scmp.ne.s32.totalorder %s242, %s243
      %p257 = scmp.eq.s32.totalorder %s30, 1
      %p258 = por %p256, %p257
      %p260 = scmp.ne.s32.totalorder %s243, %s259
      %p261 = scmp.eq.s32.totalorder %s30, 0
      %p262 = por %p260, %p261
      %s263 = ssub.s32 %s32, %s39
      %p264 = scmp.eq.s32.totalorder %s263, 0
      %s266 = sadd.s32 %s265, 1
      %s267 = scalar_select %p264, %s265, %s266
      %p270 = pneg %p264
      %p271 = scmp.eq.s32.totalorder %s24, 1
      %p272 = por %p270, %p271
      %p273 = scmp.ne.s32.totalorder %s265, %s268
      %p274 = scmp.eq.s32.totalorder %s24, 0
      %p275 = por %p273, %p274
      %p276 = scmp.ne.s32.totalorder %s265, %s268
      %p277 = scmp.eq.s32.totalorder %s29, 1
      %p278 = por %p276, %p277
      %p279 = scmp.ne.s32.totalorder %s268, %s269
      %p280 = scmp.eq.s32.totalorder %s29, 0
      %p281 = por %p279, %p280
      %p282 = scmp.ne.s32.totalorder %s268, %s269
      %p283 = scmp.eq.s32.totalorder %s30, 1
      %p284 = por %p282, %p283
      %p286 = scmp.ne.s32.totalorder %s269, %s285
      %p287 = scmp.eq.s32.totalorder %s30, 0
      %p288 = por %p286, %p287
      %s289 = ssub.s32 %s32, %s39
      %p290 = scmp.eq.s32.totalorder %s289, 0
      %s292 = sadd.s32 %s291, 1
      %s293 = scalar_select %p290, %s291, %s292
      %p296 = pneg %p290
      %p297 = scmp.eq.s32.totalorder %s24, 1
      %p298 = por %p296, %p297
      %p299 = scmp.ne.s32.totalorder %s291, %s294
      %p300 = scmp.eq.s32.totalorder %s24, 0
      %p301 = por %p299, %p300
      %p302 = scmp.ne.s32.totalorder %s291, %s294
      %p303 = scmp.eq.s32.totalorder %s29, 1
      %p304 = por %p302, %p303
      %p305 = scmp.ne.s32.totalorder %s294, %s295
      %p306 = scmp.eq.s32.totalorder %s29, 0
      %p307 = por %p305, %p306
      %p308 = scmp.ne.s32.totalorder %s294, %s295
      %p309 = scmp.eq.s32.totalorder %s30, 1
      %p310 = por %p308, %p309
      %p312 = scmp.ne.s32.totalorder %s295, %s311
      %p313 = scmp.eq.s32.totalorder %s30, 0
      %p314 = por %p312, %p313
      %s315 = ssub.s32 %s32, %s39
      %p316 = scmp.eq.s32.totalorder %s315, 0
      %s318 = sadd.s32 %s317, 1
      %s319 = scalar_select %p316, %s317, %s318
      %p322 = pneg %p316
      %p323 = scmp.eq.s32.totalorder %s24, 1
      %p324 = por %p322, %p323
      %p325 = scmp.ne.s32.totalorder %s317, %s320
      %p326 = scmp.eq.s32.totalorder %s24, 0
      %p327 = por %p325, %p326
      %p328 = scmp.ne.s32.totalorder %s317, %s320
      %p329 = scmp.eq.s32.totalorder %s29, 1
      %p330 = por %p328, %p329
      %p331 = scmp.ne.s32.totalorder %s320, %s321
      %p332 = scmp.eq.s32.totalorder %s29, 0
      %p333 = por %p331, %p332
      %p334 = scmp.ne.s32.totalorder %s320, %s321
      %p335 = scmp.eq.s32.totalorder %s30, 1
      %p336 = por %p334, %p335
      %p338 = scmp.ne.s32.totalorder %s321, %s337
      %p339 = scmp.eq.s32.totalorder %s30, 0
      %p340 = por %p338, %p339
      %s341 = ssub.s32 %s32, %s39
      %p342 = scmp.eq.s32.totalorder %s341, 0
      %s344 = sadd.s32 %s343, 1
      %s345 = scalar_select %p342, %s343, %s344
      %p348 = pneg %p342
      %p349 = scmp.eq.s32.totalorder %s24, 1
      %p350 = por %p348, %p349
      %p351 = scmp.ne.s32.totalorder %s343, %s346
      %p352 = scmp.eq.s32.totalorder %s24, 0
      %p353 = por %p351, %p352
      %p354 = scmp.ne.s32.totalorder %s343, %s346
      %p355 = scmp.eq.s32.totalorder %s29, 1
      %p356 = por %p354, %p355
      %p357 = scmp.ne.s32.totalorder %s346, %s347
      %p358 = scmp.eq.s32.totalorder %s29, 0
      %p359 = por %p357, %p358
      %p360 = scmp.ne.s32.totalorder %s346, %s347
      %p361 = scmp.eq.s32.totalorder %s30, 1
      %p362 = por %p360, %p361
      %p364 = scmp.ne.s32.totalorder %s347, %s363
      %p365 = scmp.eq.s32.totalorder %s30, 0
      %p366 = por %p364, %p365
      %s367 = ssub.s32 %s32, %s39
      %p368 = scmp.eq.s32.totalorder %s367, 0
      %s370 = sadd.s32 %s369, 1
      %s371 = scalar_select %p368, %s369, %s370
      %p374 = pneg %p368
      %p375 = scmp.eq.s32.totalorder %s24, 1
      %p376 = por %p374, %p375
      %p377 = scmp.ne.s32.totalorder %s369, %s372
      %p378 = scmp.eq.s32.totalorder %s24, 0
      %p379 = por %p377, %p378
      %p380 = scmp.ne.s32.totalorder %s369, %s372
      %p381 = scmp.eq.s32.totalorder %s29, 1
      %p382 = por %p380, %p381
      %p383 = scmp.ne.s32.totalorder %s372, %s373
      %p384 = scmp.eq.s32.totalorder %s29, 0
      %p385 = por %p383, %p384
      %p386 = scmp.ne.s32.totalorder %s372, %s373
      %p387 = scmp.eq.s32.totalorder %s30, 1
      %p388 = por %p386, %p387
      %p390 = scmp.ne.s32.totalorder %s373, %s389
      %p391 = scmp.eq.s32.totalorder %s30, 0
      %p392 = por %p390, %p391
      %s393 = ssub.s32 %s32, %s39
      %p394 = scmp.eq.s32.totalorder %s393, 0
      %s396 = sadd.s32 %s395, 1
      %s397 = scalar_select %p394, %s395, %s396
      %p400 = pneg %p394
      %p401 = scmp.eq.s32.totalorder %s24, 1
      %p402 = por %p400, %p401
      %p403 = scmp.ne.s32.totalorder %s395, %s398
      %p404 = scmp.eq.s32.totalorder %s24, 0
      %p405 = por %p403, %p404
      %p406 = scmp.ne.s32.totalorder %s395, %s398
      %p407 = scmp.eq.s32.totalorder %s29, 1
      %p408 = por %p406, %p407
      %p409 = scmp.ne.s32.totalorder %s398, %s399
      %p410 = scmp.eq.s32.totalorder %s29, 0
      %p411 = por %p409, %p410
      %p412 = scmp.ne.s32.totalorder %s398, %s399
      %p413 = scmp.eq.s32.totalorder %s30, 1
      %p414 = por %p412, %p413
      %p416 = scmp.ne.s32.totalorder %s399, %s415
      %p417 = scmp.eq.s32.totalorder %s30, 0
      %p418 = por %p416, %p417
      %s419 = ssub.s32 %s32, %s39
      %p420 = scmp.eq.s32.totalorder %s419, 0
      %s422 = sadd.s32 %s421, 1
      %s423 = scalar_select %p420, %s421, %s422
      %p426 = pneg %p420
      %p427 = scmp.eq.s32.totalorder %s24, 1
      %p428 = por %p426, %p427
      %p429 = scmp.ne.s32.totalorder %s421, %s424
      %p430 = scmp.eq.s32.totalorder %s24, 0
      %p431 = por %p429, %p430
      %p432 = scmp.ne.s32.totalorder %s421, %s424
      %p433 = scmp.eq.s32.totalorder %s29, 1
      %p434 = por %p432, %p433
      %p435 = scmp.ne.s32.totalorder %s424, %s425
      %p436 = scmp.eq.s32.totalorder %s29, 0
      %p437 = por %p435, %p436
      %p438 = scmp.ne.s32.totalorder %s424, %s425
      %p439 = scmp.eq.s32.totalorder %s30, 1
      %p440 = por %p438, %p439
      %p442 = scmp.ne.s32.totalorder %s425, %s441
      %p443 = scmp.eq.s32.totalorder %s30, 0
      %p444 = por %p442, %p443
      %s445 = ssub.s32 %s32, %s39
      %p446 = scmp.eq.s32.totalorder %s445, 0
      %s448 = sadd.s32 %s447, 1
      %s449 = scalar_select %p446, %s447, %s448
      %p452 = pneg %p446
      %p453 = scmp.eq.s32.totalorder %s24, 1
      %p454 = por %p452, %p453
      %p455 = scmp.ne.s32.totalorder %s447, %s450
      %p456 = scmp.eq.s32.totalorder %s24, 0
      %p457 = por %p455, %p456
      %p458 = scmp.ne.s32.totalorder %s447, %s450
      %p459 = scmp.eq.s32.totalorder %s29, 1
      %p460 = por %p458, %p459
      %p461 = scmp.ne.s32.totalorder %s450, %s451
      %p462 = scmp.eq.s32.totalorder %s29, 0
      %p463 = por %p461, %p462
      %p464 = scmp.ne.s32.totalorder %s450, %s451
      %p465 = scmp.eq.s32.totalorder %s30, 1
      %p466 = por %p464, %p465
      %p468 = scmp.ne.s32.totalorder %s451, %s467
      %p469 = scmp.eq.s32.totalorder %s30, 0
      %p470 = por %p468, %p469
      %s471 = ssub.s32 %s31, %s43
      %p472 = scmp.eq.s32.totalorder %s471, 0
      %s474 = sadd.s32 %s473, 1
      %s475 = scalar_select %p472, %s473, %s474
      %p478 = pneg %p472
      %p479 = scmp.eq.s32.totalorder %s24, 1
      %p480 = por %p478, %p479
      %p481 = scmp.ne.s32.totalorder %s473, %s476
      %p482 = scmp.eq.s32.totalorder %s24, 0
      %p483 = por %p481, %p482
      %p484 = scmp.ne.s32.totalorder %s473, %s476
      %p485 = scmp.eq.s32.totalorder %s29, 1
      %p486 = por %p484, %p485
      %p487 = scmp.ne.s32.totalorder %s476, %s477
      %p488 = scmp.eq.s32.totalorder %s29, 0
      %p489 = por %p487, %p488
      %p490 = scmp.ne.s32.totalorder %s476, %s477
      %p491 = scmp.eq.s32.totalorder %s30, 1
      %p492 = por %p490, %p491
      %p494 = scmp.ne.s32.totalorder %s477, %s493
      %p495 = scmp.eq.s32.totalorder %s30, 0
      %p496 = por %p494, %p495
      %p497 = scmp.le.s32.totalorder 1, %s24
      %p498 = scmp.lt.s32.totalorder %s24, 3
      %p499 = pnand %p497, %p498
      %p500 = pneg %p499
      // Predicated region
      $region9: #{hmte_forward.1} parent=5 // pred_check
        _
      $region10: #{hmte_forward.1} parent=5 // pred_check_branch
        %502 = sbr.rel (%p499) target = $region12
      $region11: #{hmte_forward.1} parent=5 // pred_region
        %s503 = ssub.s32 %s24, 1
        // Predicated region
        $region13: #{hmte_forward.1} parent=11 // pred_check
          %p504 = pneg %p62
        $region14: #{hmte_forward.1} parent=11 // pred_check_branch
          %506 = sbr.rel (%p504) target = $region16
        $region15: #{hmte_forward.1} parent=11 // pred_region
          %s507 = smul.u32 4, %s33
          %p508 = scmp.lt.s32.totalorder %s507, 3
          %s509 = scalar_select %p508, %s507, 3
          %s510 = smul.addr %s509, 8
          %s511 = scalar_lea.vmem %s0, %s510
          %s512 = smul.u32 4, %s33
        $region16: #{hmte_forward.1} parent=11 // pred_fallthru
          _
        // Predicated region
        $region17: #{hmte_forward.1} parent=11 // pred_check
          %p513 = pneg %p83
        $region18: #{hmte_forward.1} parent=11 // pred_check_branch
          %515 = sbr.rel (%p513) target = $region20
        $region19: #{hmte_forward.1} parent=11 // pred_region
          _
        $region20: #{hmte_forward.1} parent=11 // pred_fallthru
          _
        // Predicated region
        $region21: #{hmte_forward.1} parent=11 // pred_check
          %p516 = pneg %p104
        $region22: #{hmte_forward.1} parent=11 // pred_check_branch
          %518 = sbr.rel (%p516) target = $region24
        $region23: #{hmte_forward.1} parent=11 // pred_region
          _
        $region24: #{hmte_forward.1} parent=11 // pred_fallthru
          _
        // Predicated region
        $region25: #{hmte_forward.1} parent=11 // pred_check
          %p519 = pneg %p125
        $region26: #{hmte_forward.1} parent=11 // pred_check_branch
          %521 = sbr.rel (%p519) target = $region28
        $region27: #{hmte_forward.1} parent=11 // pred_region
          %s523 = ssub.s32 16, 16
          %524 = vsyncadd [#allocation4], %s523
          %s526 = sshll.u32 %s3, 4
          %s527 = int_to_ptr.vmem [resolvable:$true] %s526
          %529 = dma.vmem_to_smem %s527, 16, [#allocation3], [#allocation4]
        $region28: #{hmte_forward.1} parent=11 // pred_fallthru
          _
      $region12: #{hmte_forward.1} parent=5 // pred_fallthru
        _
      %p530 = scmp.lt.s32.totalorder %s24, 2
      // Predicated region
      $region29: #{hmte_forward.1} parent=5 // pred_check
        %p531 = pneg %p530
      $region30: #{hmte_forward.1} parent=5 // pred_check_branch
        %533 = sbr.rel (%p531) target = $region32
      $region31: #{hmte_forward.1} parent=5 // pred_region
        // Predicated region
        $region33: #{hmte_forward.1} parent=31 // pred_check
          %p534 = pneg %p145
        $region34: #{hmte_forward.1} parent=31 // pred_check_branch
          %536 = sbr.rel (%p534) target = $region36
        $region35: #{hmte_forward.1} parent=31 // pred_region
          %p537 = scmp.lt.s32.totalorder %s32, 1
          %s538 = scalar_select %p537, %s32, 1
          %s539 = scalar_lea.vmem %s4, %s538
        $region36: #{hmte_forward.1} parent=31 // pred_fallthru
          _
        // Predicated region
        $region37: #{hmte_forward.1} parent=31 // pred_check
          %p540 = pneg %p171
        $region38: #{hmte_forward.1} parent=31 // pred_check_branch
          %542 = sbr.rel (%p540) target = $region40
        $region39: #{hmte_forward.1} parent=31 // pred_region
          %p543 = scmp.lt.s32.totalorder %s32, 1
          %s544 = scalar_select %p543, %s32, 1
          %s545 = scalar_lea.vmem %s5, %s544
        $region40: #{hmte_forward.1} parent=31 // pred_fallthru
          _
        // Predicated region
        $region41: #{hmte_forward.1} parent=31 // pred_check
          %p546 = pneg %p197
        $region42: #{hmte_forward.1} parent=31 // pred_check_branch
          %548 = sbr.rel (%p546) target = $region44
        $region43: #{hmte_forward.1} parent=31 // pred_region
          %p549 = scmp.lt.s32.totalorder %s32, 1
          %s550 = scalar_select %p549, %s32, 1
          %s551 = smul.addr %s550, 8
          %s552 = smul.addr %s551, 4
          %s553 = scalar_lea.vmem %s6, %s552
        $region44: #{hmte_forward.1} parent=31 // pred_fallthru
          _
        // Predicated region
        $region45: #{hmte_forward.1} parent=31 // pred_check
          %p554 = pneg %p223
        $region46: #{hmte_forward.1} parent=31 // pred_check_branch
          %556 = sbr.rel (%p554) target = $region48
        $region47: #{hmte_forward.1} parent=31 // pred_region
          %p557 = scmp.lt.s32.totalorder %s32, 1
          %s558 = scalar_select %p557, %s32, 1
          %s559 = smul.addr %s558, 8
          %s560 = smul.addr %s559, 4
          %s561 = scalar_lea.vmem %s7, %s560
        $region48: #{hmte_forward.1} parent=31 // pred_fallthru
          _
        // Predicated region
        $region49: #{hmte_forward.1} parent=31 // pred_check
          %p562 = pneg %p249
        $region50: #{hmte_forward.1} parent=31 // pred_check_branch
          %564 = sbr.rel (%p562) target = $region52
        $region51: #{hmte_forward.1} parent=31 // pred_region
          %p565 = scmp.lt.s32.totalorder %s32, 1
          %s566 = scalar_select %p565, %s32, 1
          %s567 = smul.addr %s566, 8
          %s568 = smul.addr %s567, 4
          %s569 = scalar_lea.vmem %s8, %s568
        $region52: #{hmte_forward.1} parent=31 // pred_fallthru
          _
        // Predicated region
        $region53: #{hmte_forward.1} parent=31 // pred_check
          %p570 = pneg %p275
        $region54: #{hmte_forward.1} parent=31 // pred_check_branch
          %572 = sbr.rel (%p570) target = $region56
        $region55: #{hmte_forward.1} parent=31 // pred_region
          %p573 = scmp.lt.s32.totalorder %s32, 1
          %s574 = scalar_select %p573, %s32, 1
          %s575 = smul.addr %s574, 4
          %s576 = smul.addr %s575, 4
          %s577 = scalar_lea.vmem %s9, %s576
        $region56: #{hmte_forward.1} parent=31 // pred_fallthru
          _
        // Predicated region
        $region57: #{hmte_forward.1} parent=31 // pred_check
          %p578 = pneg %p301
        $region58: #{hmte_forward.1} parent=31 // pred_check_branch
          %580 = sbr.rel (%p578) target = $region60
        $region59: #{hmte_forward.1} parent=31 // pred_region
          %p581 = scmp.lt.s32.totalorder %s32, 1
          %s582 = scalar_select %p581, %s32, 1
          %s583 = smul.addr %s582, 2
          %s584 = scalar_lea.vmem %s10, %s583
        $region60: #{hmte_forward.1} parent=31 // pred_fallthru
          _
        // Predicated region
        $region61: #{hmte_forward.1} parent=31 // pred_check
          %p585 = pneg %p327
        $region62: #{hmte_forward.1} parent=31 // pred_check_branch
          %587 = sbr.rel (%p585) target = $region64
        $region63: #{hmte_forward.1} parent=31 // pred_region
          %p588 = scmp.lt.s32.totalorder %s32, 1
          %s589 = scalar_select %p588, %s32, 1
          %s590 = smul.addr %s589, 2
          %s591 = scalar_lea.vmem %s11, %s590
        $region64: #{hmte_forward.1} parent=31 // pred_fallthru
          _
        // Predicated region
        $region65: #{hmte_forward.1} parent=31 // pred_check
          %p592 = pneg %p353
        $region66: #{hmte_forward.1} parent=31 // pred_check_branch
          %594 = sbr.rel (%p592) target = $region68
        $region67: #{hmte_forward.1} parent=31 // pred_region
          %p595 = scmp.lt.s32.totalorder %s32, 1
          %s596 = scalar_select %p595, %s32, 1
          %s597 = scalar_lea.vmem %s12, %s596
        $region68: #{hmte_forward.1} parent=31 // pred_fallthru
          _
        // Predicated region
        $region69: #{hmte_forward.1} parent=31 // pred_check
          %p598 = pneg %p379
        $region70: #{hmte_forward.1} parent=31 // pred_check_branch
          %600 = sbr.rel (%p598) target = $region72
        $region71: #{hmte_forward.1} parent=31 // pred_region
          %p601 = scmp.lt.s32.totalorder %s32, 1
          %s602 = scalar_select %p601, %s32, 1
          %s603 = scalar_lea.vmem %s13, %s602
        $region72: #{hmte_forward.1} parent=31 // pred_fallthru
          _
        // Predicated region
        $region73: #{hmte_forward.1} parent=31 // pred_check
          %p604 = pneg %p405
        $region74: #{hmte_forward.1} parent=31 // pred_check_branch
          %606 = sbr.rel (%p604) target = $region76
        $region75: #{hmte_forward.1} parent=31 // pred_region
          %p607 = scmp.lt.s32.totalorder %s32, 1
          %s608 = scalar_select %p607, %s32, 1
          %s609 = smul.addr %s608, 4
          %s610 = smul.addr %s609, 4
          %s611 = scalar_lea.vmem %s14, %s610
        $region76: #{hmte_forward.1} parent=31 // pred_fallthru
          _
        // Predicated region
        $region77: #{hmte_forward.1} parent=31 // pred_check
          %p612 = pneg %p431
        $region78: #{hmte_forward.1} parent=31 // pred_check_branch
          %614 = sbr.rel (%p612) target = $region80
        $region79: #{hmte_forward.1} parent=31 // pred_region
          %p615 = scmp.lt.s32.totalorder %s32, 1
          %s616 = scalar_select %p615, %s32, 1
          %s617 = smul.addr %s616, 4
          %s618 = smul.addr %s617, 4
          %s619 = scalar_lea.vmem %s15, %s618
        $region80: #{hmte_forward.1} parent=31 // pred_fallthru
          _
        // Predicated region
        $region81: #{hmte_forward.1} parent=31 // pred_check
          %p620 = pneg %p457
        $region82: #{hmte_forward.1} parent=31 // pred_check_branch
          %622 = sbr.rel (%p620) target = $region84
        $region83: #{hmte_forward.1} parent=31 // pred_region
          %p623 = scmp.lt.s32.totalorder %s32, 1
          %s624 = scalar_select %p623, %s32, 1
          %s625 = smul.addr %s624, 8
          %s626 = smul.addr %s625, 4
          %s627 = scalar_lea.vmem %s16, %s626
        $region84: #{hmte_forward.1} parent=31 // pred_fallthru
          _
      $region32: #{hmte_forward.1} parent=5 // pred_fallthru
        _
      %p628 = scmp.le.s32.totalorder 1, %s24
      %p629 = scmp.lt.s32.totalorder %s24, 3
      %p630 = pnand %p628, %p629
      %p631 = pneg %p630
      // Predicated region
      $region85: #{hmte_forward.1} parent=5 // pred_check
        _
      $region86: #{hmte_forward.1} parent=5 // pred_check_branch
        %633 = sbr.rel (%p630) target = $region88
      $region87: #{hmte_forward.1} parent=5 // pred_region
        %s634 = ssub.s32 %s24, 1
        // Predicated region
        $region89: #{hmte_forward.1} parent=87 // pred_check
          %p635 = pneg %p125
        $region90: #{hmte_forward.1} parent=87 // pred_check_branch
          %637 = sbr.rel (%p635) target = $region92
        $region91: #{hmte_forward.1} parent=87 // pred_region
          %638 = dma.done [#allocation4], 16
        $region92: #{hmte_forward.1} parent=87 // pred_fallthru
          _
        %639 = sfence
        %s640 = smul.u32 4, %s33
        %p641 = scmp.lt.s32.totalorder %s640, 3
        %s642 = scalar_select %p641, %s640, 3
        %s643 = smul.addr %s642, 8
        %s644 = scalar_lea.vmem %s0, %s643
        %p645 = pneg %p62
        %p646 = pneg %p59
        %p647 = pneg %p83
        %p648 = pneg %p80
        %p649 = pneg %p104
        %p650 = pneg %p101
        %p651 = pneg %p125
        %p652 = pneg %p122
        %p653 = scmp.lt.s32.totalorder %s34, 1
        %s654 = scalar_select %p653, %s34, 1
        %s655 = scalar_lea.vmem %s4, %s654
        %p656 = pneg %p151
        %p657 = pneg %p148
        %p658 = scmp.lt.s32.totalorder %s34, 1
        %s659 = scalar_select %p658, %s34, 1
        %s660 = scalar_lea.vmem %s5, %s659
        %p661 = pneg %p177
        %p662 = pneg %p174
        %p663 = scmp.lt.s32.totalorder %s34, 1
        %s664 = scalar_select %p663, %s34, 1
        %s665 = smul.addr %s664, 8
        %s666 = smul.addr %s665, 4
        %s667 = scalar_lea.vmem %s6, %s666
        %p668 = pneg %p203
        %p669 = pneg %p200
        %p670 = scmp.lt.s32.totalorder %s34, 1
        %s671 = scalar_select %p670, %s34, 1
        %s672 = smul.addr %s671, 8
        %s673 = smul.addr %s672, 4
        %s674 = scalar_lea.vmem %s7, %s673
        %p675 = pneg %p229
        %p676 = pneg %p226
        %p677 = scmp.lt.s32.totalorder %s34, 1
        %s678 = scalar_select %p677, %s34, 1
        %s679 = smul.addr %s678, 8
        %s680 = smul.addr %s679, 4
        %s681 = scalar_lea.vmem %s8, %s680
        %p682 = pneg %p255
        %p683 = pneg %p252
        %p684 = scmp.lt.s32.totalorder %s34, 1
        %s685 = scalar_select %p684, %s34, 1
        %s686 = smul.addr %s685, 4
        %s687 = smul.addr %s686, 4
        %s688 = scalar_lea.vmem %s9, %s687
        %p689 = pneg %p281
        %p690 = pneg %p278
        %p691 = scmp.lt.s32.totalorder %s34, 1
        %s692 = scalar_select %p691, %s34, 1
        %s693 = smul.addr %s692, 2
        %s694 = scalar_lea.vmem %s10, %s693
        %p695 = pneg %p307
        %p696 = pneg %p304
        %p697 = scmp.lt.s32.totalorder %s34, 1
        %s698 = scalar_select %p697, %s34, 1
        %s699 = smul.addr %s698, 2
        %s700 = scalar_lea.vmem %s11, %s699
        %p701 = pneg %p333
        %p702 = pneg %p330
        %p703 = scmp.lt.s32.totalorder %s34, 1
        %s704 = scalar_select %p703, %s34, 1
        %s705 = scalar_lea.vmem %s12, %s704
        %p706 = pneg %p359
        %p707 = pneg %p356
        %p708 = scmp.lt.s32.totalorder %s34, 1
        %s709 = scalar_select %p708, %s34, 1
        %s710 = scalar_lea.vmem %s13, %s709
        %p711 = pneg %p385
        %p712 = pneg %p382
        %p713 = scmp.lt.s32.totalorder %s34, 1
        %s714 = scalar_select %p713, %s34, 1
        %s715 = smul.addr %s714, 4
        %s716 = smul.addr %s715, 4
        %s717 = scalar_lea.vmem %s14, %s716
        %p718 = pneg %p411
        %p719 = pneg %p408
        %p720 = scmp.lt.s32.totalorder %s34, 1
        %s721 = scalar_select %p720, %s34, 1
        %s722 = smul.addr %s721, 4
        %s723 = smul.addr %s722, 4
        %s724 = scalar_lea.vmem %s15, %s723
        %p725 = pneg %p437
        %p726 = pneg %p434
        %p727 = scmp.lt.s32.totalorder %s34, 1
        %s728 = scalar_select %p727, %s34, 1
        %s729 = smul.addr %s728, 8
        %s730 = smul.addr %s729, 4
        %s731 = scalar_lea.vmem %s16, %s730
        %p732 = pneg %p463
        %p733 = pneg %p460
        %p734 = pneg %p489
        %p735 = pneg %p486
        %s736 = smul.u32 4, %s33
        %p737 = scmp.lt.s32.totalorder %s736, 3
        %s738 = scalar_select %p737, %s736, 3
        %s739 = smul.addr %s738, 8
        %s740 = scalar_lea.vmem %s17, %s739
        %s741 = smul.u32 4, %s33
        %p742 = scmp.lt.s32.totalorder %s741, 3
        %s743 = scalar_select %p742, %s741, 3
        %s744 = smul.addr %s743, 8
        %s745 = scalar_lea.vmem %s0, %s744
        %s746 = smul.u32 4, %s33
        %p747 = scmp.lt.s32.totalorder %s34, 1
        %s748 = scalar_select %p747, %s34, 1
        %s749 = scalar_lea.vmem %s4, %s748
        %p750 = scmp.lt.s32.totalorder %s34, 1
        %s751 = scalar_select %p750, %s34, 1
        %s752 = scalar_lea.vmem %s5, %s751
        %p753 = scmp.lt.s32.totalorder %s34, 1
        %s754 = scalar_select %p753, %s34, 1
        %s755 = smul.addr %s754, 8
        %s756 = smul.addr %s755, 4
        %s757 = scalar_lea.vmem %s6, %s756
        %p758 = scmp.lt.s32.totalorder %s34, 1
        %s759 = scalar_select %p758, %s34, 1
        %s760 = smul.addr %s759, 8
        %s761 = smul.addr %s760, 4
        %s762 = scalar_lea.vmem %s7, %s761
        %p763 = scmp.lt.s32.totalorder %s34, 1
        %s764 = scalar_select %p763, %s34, 1
        %s765 = smul.addr %s764, 8
        %s766 = smul.addr %s765, 4
        %s767 = scalar_lea.vmem %s8, %s766
        %p768 = scmp.lt.s32.totalorder %s34, 1
        %s769 = scalar_select %p768, %s34, 1
        %s770 = smul.addr %s769, 4
        %s771 = smul.addr %s770, 4
        %s772 = scalar_lea.vmem %s9, %s771
        %p773 = scmp.lt.s32.totalorder %s34, 1
        %s774 = scalar_select %p773, %s34, 1
        %s775 = smul.addr %s774, 2
        %s776 = scalar_lea.vmem %s10, %s775
        %p777 = scmp.lt.s32.totalorder %s34, 1
        %s778 = scalar_select %p777, %s34, 1
        %s779 = smul.addr %s778, 2
        %s780 = scalar_lea.vmem %s11, %s779
        %p781 = scmp.lt.s32.totalorder %s34, 1
        %s782 = scalar_select %p781, %s34, 1
        %s783 = scalar_lea.vmem %s12, %s782
        %p784 = scmp.lt.s32.totalorder %s34, 1
        %s785 = scalar_select %p784, %s34, 1
        %s786 = scalar_lea.vmem %s13, %s785
        %p787 = scmp.lt.s32.totalorder %s34, 1
        %s788 = scalar_select %p787, %s34, 1
        %s789 = smul.addr %s788, 4
        %s790 = smul.addr %s789, 4
        %s791 = scalar_lea.vmem %s14, %s790
        %p792 = scmp.lt.s32.totalorder %s34, 1
        %s793 = scalar_select %p792, %s34, 1
        %s794 = smul.addr %s793, 4
        %s795 = smul.addr %s794, 4
        %s796 = scalar_lea.vmem %s15, %s795
        %p797 = scmp.lt.s32.totalorder %s34, 1
        %s798 = scalar_select %p797, %s34, 1
        %s799 = smul.addr %s798, 8
        %s800 = smul.addr %s799, 4
        %s801 = scalar_lea.vmem %s16, %s800
        %s802 = smul.u32 4, %s33
        %p803 = scmp.lt.s32.totalorder %s802, 3
        %s804 = scalar_select %p803, %s802, 3
        %s805 = smul.addr %s804, 8
        %s806 = scalar_lea.vmem %s17, %s805
        %s807 = smul.u32 4, %s33
        %p809 = scmp.eq.s32.totalorder %s34, 0
        // Predicated region
        $region93: #{hmte_forward.1} parent=87 // pred_check
          %p810 = pneg %p809
        $region94: #{hmte_forward.1} parent=87 // pred_check_branch
          %812 = sbr.rel (%p810) target = $region96
        $region95: #{hmte_forward.1} parent=87 // pred_region
          %v813 = vld [vmem:[%s745] sm:$0xff]
          %v814 = vld [vmem:[%s745 + $0x8] sm:$0xff]
          %v815 = vld [vmem:[%s745 + $0x10] sm:$0xff]
          %v816 = vld [vmem:[%s745 + $0x18] sm:$0xff]
          %vm817 = vcmask 261120
          %818 = vst.msk [vmem:[#allocation2] sm:$0xff] %vm817, %v813
          %819 = vst.msk [vmem:[#allocation2 + $0x8] sm:$0xff] %vm817, %v814
          %820 = vst.msk [vmem:[#allocation2 + $0x10] sm:$0xff] %vm817, %v815
          %821 = vst.msk [vmem:[#allocation2 + $0x18] sm:$0xff] %vm817, %v816
        $region96: #{hmte_forward.1} parent=87 // pred_fallthru
          _
        %v822 = vld [vmem:[#allocation2] sm:$0xff]
        %v823 = vld [vmem:[#allocation2 + $0x8] sm:$0xff]
        %v824 = vld [vmem:[#allocation2 + $0x10] sm:$0xff]
        %v825 = vld [vmem:[#allocation2 + $0x18] sm:$0xff]
        %v826 = vld [vmem:[%s749] sm:$0x1]
        %v827 = vld [vmem:[%s752] sm:$0x1]
        %vm828 = vcmask 261120
        %v829 = vsel %vm828, %v822, 0.0
        %830 = vadd.xlane.f32.xlu0 %v829
        %v831 = vpop.xlane.xlu0 %830
        %v832 = vsel %vm828, %v823, 0.0
        %833 = vadd.xlane.f32.xlu0 %v832
        %v834 = vpop.xlane.xlu0 %833
        %v835 = vsel %vm828, %v824, 0.0
        %836 = vadd.xlane.f32.xlu0 %v835
        %v837 = vpop.xlane.xlu0 %836
        %v838 = vsel %vm828, %v825, 0.0
        %839 = vadd.xlane.f32.xlu0 %v838
        %v840 = vpop.xlane.xlu0 %839
        %v841 = vrcp.pop 32.0
        %v842 = vmul.f32 %v831, %v841
        %v843 = vmul.f32 %v834, %v841
        %v844 = vmul.f32 %v837, %v841
        %v845 = vmul.f32 %v840, %v841
        %v846 = vsub.f32 %v822, %v842
        %v847 = vsub.f32 %v823, %v843
        %v848 = vsub.f32 %v824, %v844
        %v849 = vsub.f32 %v825, %v845
        %v850 = vmul.f32 %v846, %v846
        %v851 = vmul.f32 %v847, %v847
        %v852 = vmul.f32 %v848, %v848
        %v853 = vmul.f32 %v849, %v849
        %v854 = vsel %vm828, %v850, 0.0
        %855 = vadd.xlane.f32.xlu0 %v854
        %v856 = vpop.xlane.xlu0 %855
        %v857 = vsel %vm828, %v851, 0.0
        %858 = vadd.xlane.f32.xlu0 %v857
        %v859 = vpop.xlane.xlu0 %858
        %v860 = vsel %vm828, %v852, 0.0
        %861 = vadd.xlane.f32.xlu0 %v860
        %v862 = vpop.xlane.xlu0 %861
        %v863 = vsel %vm828, %v853, 0.0
        %864 = vadd.xlane.f32.xlu0 %v863
        %v865 = vpop.xlane.xlu0 %864
        %v866 = vmul.f32 %v856, %v841
        %v867 = vmul.f32 %v859, %v841
        %v868 = vmul.f32 %v862, %v841
        %v869 = vmul.f32 %v865, %v841
        %v870 = vadd.f32 %v866, 1e-05
        %v871 = vadd.f32 %v867, 1e-05
        %v872 = vadd.f32 %v868, 1e-05
        %v873 = vadd.f32 %v869, 1e-05
        %v874 = vrsqrt.pop %v870
        %v875 = vrsqrt.pop %v871
        %v876 = vrsqrt.pop %v872
        %v877 = vrsqrt.pop %v873
        %v878 = vmul.f32 %v846, %v874
        %v879 = vmul.f32 %v847, %v875
        %v880 = vmul.f32 %v848, %v876
        %v881 = vmul.f32 %v849, %v877
        %v883 = vlaneseq
        %v884 = vshrl.u32 %v883, 7
        %v885 = vsub.s32 0, %v884
        %v886 = vrot.slane %v826, %v885
        %v888 = vmul.f32 %v878, %v886
        %v889 = vmul.f32 %v879, %v886
        %v890 = vmul.f32 %v880, %v886
        %v891 = vmul.f32 %v881, %v886
        %v893 = vlaneseq
        %v894 = vshrl.u32 %v893, 7
        %v895 = vsub.s32 0, %v894
        %v896 = vrot.slane %v827, %v895
        %v898 = vadd.f32 %v888, %v896
        %v899 = vadd.f32 %v889, %v896
        %v900 = vadd.f32 %v890, %v896
        %v901 = vadd.f32 %v891, %v896
        %v902 = vpack.c.bf16 %v899, %v898
        %v903 = vpack.c.bf16 %v901, %v900
        %s904 = sld [smem:[#allocation3 + %s34]]
        %p905 = scmp.ne.s32.totalorder %s904, 0
        %v906 = vld [vmem:[%s1] sm:$0xff]
        %v907 = vld [vmem:[%s1 + $0x8] sm:$0xff]
        %v908 = vld [vmem:[%s1 + $0x10] sm:$0xff]
        %v909 = vld [vmem:[%s1 + $0x18] sm:$0xff]
        %s910 = scalar_lea.vmem %s1, 32
        %v911 = vld [vmem:[%s910] sm:$0xff]
        %v912 = vld [vmem:[%s910 + $0x8] sm:$0xff]
        %v913 = vld [vmem:[%s910 + $0x10] sm:$0xff]
        %v914 = vld [vmem:[%s910 + $0x18] sm:$0xff]
        %s915 = scalar_lea.vmem %s1, 64
        %v916 = vld [vmem:[%s915] sm:$0xff]
        %v917 = vld [vmem:[%s915 + $0x8] sm:$0xff]
        %v918 = vld [vmem:[%s915 + $0x10] sm:$0xff]
        %v919 = vld [vmem:[%s915 + $0x18] sm:$0xff]
        %s920 = scalar_lea.vmem %s1, 96
        %v921 = vld [vmem:[%s920] sm:$0xff]
        %v922 = vld [vmem:[%s920 + $0x8] sm:$0xff]
        %v923 = vld [vmem:[%s920 + $0x10] sm:$0xff]
        %v924 = vld [vmem:[%s920 + $0x18] sm:$0xff]
        %v925 = vld [vmem:[%s2] sm:$0xff]
        %v926 = vld [vmem:[%s2 + $0x8] sm:$0xff]
        %v927 = vlaneseq
        %v928 = vshrl.u32 %v927, 7
        %v929 = vlaneseq
        %v930 = vand.u32 %v929, 127
        %vm931 = vcmp.le.s32.totalorder %v930, %v928
        %v932 = vld [vmem:[%s757] sm:$0xf]
        %v933 = vld [vmem:[%s757 + $0x4] sm:$0xf]
        %v934 = vld [vmem:[%s757 + $0x8] sm:$0xf]
        %v935 = vld [vmem:[%s757 + $0xc] sm:$0xf]
        %v940 = vunpack.c.l.b16 %v932
        %v941 = vunpack.c.l.b16 %v933
        %v942 = vunpack.c.l.b16 %v934
        %v943 = vunpack.c.l.b16 %v935
        %v944 = vpack.c.b16 %v941, %v940
        %v945 = vpack.c.b16 %v943, %v942
        %v949 = vsel %vm828, %v902, 0
        %v952 = vsel %vm828, %v903, 0
        %954 = vmatprep.subr.bf16.mxu0 0
        %955 = vmatpush1.bf16.msra.mxu0 0
        %956 = vmatprep.subr.bf16.mxu0 0
        %957 = vmatpush1.bf16.msra.mxu0 0
        %958 = vmatprep.subr.bf16.mxu0 0
        %959 = vmatpush1.bf16.msra.mxu0 0
        %960 = vmatprep.subr.bf16.mxu0 0
        %961 = vmatpush1.bf16.msra.mxu0 0
        %962 = vmatprep.subr.bf16.mxu0 0
        %963 = vmatpush1.bf16.msra.mxu0 0
        %964 = vmatprep.subr.bf16.mxu0 0
        %965 = vmatpush1.bf16.msra.mxu0 0
        %966 = vmatprep.subr.bf16.mxu0 0
        %967 = vmatpush1.bf16.msra.mxu0 %v945
        %968 = vmatprep.subr.bf16.mxu0 0
        %969 = vmatpush1.bf16.msra.mxu0 %v944
        %970 = vmatprep.subr.bf16.mxu0 0
        %971 = vmatpush2.bf16.msra.mxu0 0
        %972 = vmatprep.subr.bf16.mxu0 0
        %973 = vmatpush2.bf16.msra.mxu0 0
        %974 = vmatprep.subr.bf16.mxu0 0
        %975 = vmatpush2.bf16.msra.mxu0 0
        %976 = vmatprep.subr.bf16.mxu0 0
        %977 = vmatpush2.bf16.msra.mxu0 0
        %978 = vmatprep.subr.bf16.mxu0 0
        %979 = vmatpush2.bf16.msra.mxu0 0
        %980 = vmatprep.subr.bf16.mxu0 0
        %981 = vmatpush2.bf16.msra.mxu0 0
        %982 = vmatprep.subr.bf16.mxu0 0
        %983 = vmatpush2.bf16.msra.mxu0 0
        %984 = vmatprep.subr.bf16.mxu0 0
        %985 = vmatpush2.bf16.msra.mxu0 0
        %986 = vmatprep.mubr.bf16.mxu0 0
        %987 = vmatmul.mubr.bf16.gmra.mxu0 %v949
        %v988 = vpop.f32.mrf.mxu0
        %v989 = vadd.f32 0.0, %v988
        %v990 = vpop.f32.mrf.mxu0
        %v991 = vpop.f32.mrf.mxu0
        %v992 = vadd.f32 0.0, %v991
        %v993 = vpop.f32.mrf.mxu0
        %994 = vmatprep.mubr.bf16.mxu0 0
        %995 = vmatmul.mubr.bf16.gmra.mxu0 %v952
        %v996 = vpop.f32.mrf.mxu0
        %v997 = vadd.f32 0.0, %v996
        %v998 = vpop.f32.mrf.mxu0
        %v999 = vpop.f32.mrf.mxu0
        %v1000 = vadd.f32 0.0, %v999
        %v1001 = vpop.f32.mrf.mxu0
        %1002 = vdwg.mxu0
        %v1003 = vld [vmem:[%s762] sm:$0xf]
        %v1004 = vld [vmem:[%s762 + $0x4] sm:$0xf]
        %v1005 = vld [vmem:[%s762 + $0x8] sm:$0xf]
        %v1006 = vld [vmem:[%s762 + $0xc] sm:$0xf]
        %v1011 = vunpack.c.l.b16 %v1003
        %v1012 = vunpack.c.l.b16 %v1004
        %v1013 = vunpack.c.l.b16 %v1005
        %v1014 = vunpack.c.l.b16 %v1006
        %v1015 = vpack.c.b16 %v1012, %v1011
        %v1016 = vpack.c.b16 %v1014, %v1013
        %1019 = vmatprep.subr.bf16.mxu0 0
        %1020 = vmatpush1.bf16.msra.mxu0 0
        %1021 = vmatprep.subr.bf16.mxu0 0
        %1022 = vmatpush1.bf16.msra.mxu0 0
        %1023 = vmatprep.subr.bf16.mxu0 0
        %1024 = vmatpush1.bf16.msra.mxu0 0
        %1025 = vmatprep.subr.bf16.mxu0 0
        %1026 = vmatpush1.bf16.msra.mxu0 0
        %1027 = vmatprep.subr.bf16.mxu0 0
        %1028 = vmatpush1.bf16.msra.mxu0 0
        %1029 = vmatprep.subr.bf16.mxu0 0
        %1030 = vmatpush1.bf16.msra.mxu0 0
        %1031 = vmatprep.subr.bf16.mxu0 0
        %1032 = vmatpush1.bf16.msra.mxu0 %v1016
        %1033 = vmatprep.subr.bf16.mxu0 0
        %1034 = vmatpush1.bf16.msra.mxu0 %v1015
        %1035 = vmatprep.subr.bf16.mxu0 0
        %1036 = vmatpush2.bf16.msra.mxu0 0
        %1037 = vmatprep.subr.bf16.mxu0 0
        %1038 = vmatpush2.bf16.msra.mxu0 0
        %1039 = vmatprep.subr.bf16.mxu0 0
        %1040 = vmatpush2.bf16.msra.mxu0 0
        %1041 = vmatprep.subr.bf16.mxu0 0
        %1042 = vmatpush2.bf16.msra.mxu0 0
        %1043 = vmatprep.subr.bf16.mxu0 0
        %1044 = vmatpush2.bf16.msra.mxu0 0
        %1045 = vmatprep.subr.bf16.mxu0 0
        %1046 = vmatpush2.bf16.msra.mxu0 0
        %1047 = vmatprep.subr.bf16.mxu0 0
        %1048 = vmatpush2.bf16.msra.mxu0 0
        %1049 = vmatprep.subr.bf16.mxu0 0
        %1050 = vmatpush2.bf16.msra.mxu0 0
        %1051 = vmatprep.mubr.bf16.mxu0 0
        %1052 = vmatmul.mubr.bf16.gmra.mxu0 %v949
        %v1053 = vpop.f32.mrf.mxu0
        %v1054 = vadd.f32 0.0, %v1053
        %v1055 = vpop.f32.mrf.mxu0
        %v1056 = vpop.f32.mrf.mxu0
        %v1057 = vadd.f32 0.0, %v1056
        %v1058 = vpop.f32.mrf.mxu0
        %1059 = vmatprep.mubr.bf16.mxu0 0
        %1060 = vmatmul.mubr.bf16.gmra.mxu0 %v952
        %v1061 = vpop.f32.mrf.mxu0
        %v1062 = vadd.f32 0.0, %v1061
        %v1063 = vpop.f32.mrf.mxu0
        %v1064 = vpop.f32.mrf.mxu0
        %v1065 = vadd.f32 0.0, %v1064
        %v1066 = vpop.f32.mrf.mxu0
        %1067 = vdwg.mxu0
        %v1068 = vld [vmem:[%s767] sm:$0xf]
        %v1069 = vld [vmem:[%s767 + $0x4] sm:$0xf]
        %v1070 = vld [vmem:[%s767 + $0x8] sm:$0xf]
        %v1071 = vld [vmem:[%s767 + $0xc] sm:$0xf]
        %v1076 = vunpack.c.l.b16 %v1068
        %v1077 = vunpack.c.l.b16 %v1069
        %v1078 = vunpack.c.l.b16 %v1070
        %v1079 = vunpack.c.l.b16 %v1071
        %v1080 = vpack.c.b16 %v1077, %v1076
        %v1081 = vpack.c.b16 %v1079, %v1078
        %1084 = vmatprep.subr.bf16.mxu0 0
        %1085 = vmatpush1.bf16.msra.mxu0 0
        %1086 = vmatprep.subr.bf16.mxu0 0
        %1087 = vmatpush1.bf16.msra.mxu0 0
        %1088 = vmatprep.subr.bf16.mxu0 0
        %1089 = vmatpush1.bf16.msra.mxu0 0
        %1090 = vmatprep.subr.bf16.mxu0 0
        %1091 = vmatpush1.bf16.msra.mxu0 0
        %1092 = vmatprep.subr.bf16.mxu0 0
        %1093 = vmatpush1.bf16.msra.mxu0 0
        %1094 = vmatprep.subr.bf16.mxu0 0
        %1095 = vmatpush1.bf16.msra.mxu0 0
        %1096 = vmatprep.subr.bf16.mxu0 0
        %1097 = vmatpush1.bf16.msra.mxu0 %v1081
        %1098 = vmatprep.subr.bf16.mxu0 0
        %1099 = vmatpush1.bf16.msra.mxu0 %v1080
        %1100 = vmatprep.subr.bf16.mxu0 0
        %1101 = vmatpush2.bf16.msra.mxu0 0
        %1102 = vmatprep.subr.bf16.mxu0 0
        %1103 = vmatpush2.bf16.msra.mxu0 0
        %1104 = vmatprep.subr.bf16.mxu0 0
        %1105 = vmatpush2.bf16.msra.mxu0 0
        %1106 = vmatprep.subr.bf16.mxu0 0
        %1107 = vmatpush2.bf16.msra.mxu0 0
        %1108 = vmatprep.subr.bf16.mxu0 0
        %1109 = vmatpush2.bf16.msra.mxu0 0
        %1110 = vmatprep.subr.bf16.mxu0 0
        %1111 = vmatpush2.bf16.msra.mxu0 0
        %1112 = vmatprep.subr.bf16.mxu0 0
        %1113 = vmatpush2.bf16.msra.mxu0 0
        %1114 = vmatprep.subr.bf16.mxu0 0
        %1115 = vmatpush2.bf16.msra.mxu0 0
        %1116 = vmatprep.mubr.bf16.mxu0 0
        %1117 = vmatmul.mubr.bf16.gmra.mxu0 %v949
        %v1118 = vpop.f32.mrf.mxu0
        %v1119 = vadd.f32 0.0, %v1118
        %v1120 = vpop.f32.mrf.mxu0
        %v1121 = vpop.f32.mrf.mxu0
        %v1122 = vadd.f32 0.0, %v1121
        %v1123 = vpop.f32.mrf.mxu0
        %1124 = vmatprep.mubr.bf16.mxu0 0
        %1125 = vmatmul.mubr.bf16.gmra.mxu0 %v952
        %v1126 = vpop.f32.mrf.mxu0
        %v1127 = vadd.f32 0.0, %v1126
        %v1128 = vpop.f32.mrf.mxu0
        %v1129 = vpop.f32.mrf.mxu0
        %v1130 = vadd.f32 0.0, %v1129
        %v1131 = vpop.f32.mrf.mxu0
        %1132 = vdwg.mxu0
        %v1133 = vmul.f32 %v989, %v989
        %v1134 = vmul.f32 %v992, %v992
        %v1135 = vmul.f32 %v997, %v997
        %v1136 = vmul.f32 %v1000, %v1000
        %vm1137 = vcmask 130048
        %v1138 = vsel %vm1137, %v1133, 0.0
        %1139 = vadd.xlane.f32.xlu0 %v1138
        %v1140 = vpop.xlane.xlu0 %1139
        %v1141 = vsel %vm1137, %v1134, 0.0
        %1142 = vadd.xlane.f32.xlu0 %v1141
        %v1143 = vpop.xlane.xlu0 %1142
        %v1144 = vsel %vm1137, %v1135, 0.0
        %1145 = vadd.xlane.f32.xlu0 %v1144
        %v1146 = vpop.xlane.xlu0 %1145
        %v1147 = vsel %vm1137, %v1136, 0.0
        %1148 = vadd.xlane.f32.xlu0 %v1147
        %v1149 = vpop.xlane.xlu0 %1148
        %v1150 = vadd.f32 %v1140, 1e-08
        %v1151 = vadd.f32 %v1143, 1e-08
        %v1152 = vadd.f32 %v1146, 1e-08
        %v1153 = vadd.f32 %v1149, 1e-08
        %v1154 = vrsqrt.pop %v1150
        %v1155 = vrsqrt.pop %v1151
        %v1156 = vrsqrt.pop %v1152
        %v1157 = vrsqrt.pop %v1153
        %v1158 = vmul.f32 %v989, %v1154
        %v1159 = vmul.f32 %v992, %v1155
        %v1160 = vmul.f32 %v997, %v1156
        %v1161 = vmul.f32 %v1000, %v1157
        %v1162 = vld [vmem:[%s776] sm:$0x1]
        %v1164 = vlaneseq
        %v1165 = vshrl.u32 %v1164, 7
        %v1166 = vsub.s32 0, %v1165
        %v1167 = vrot.slane %v1162, %v1166
        %v1169 = vmul.f32 %v1158, %v1167
        %v1170 = vmul.f32 %v1159, %v1167
        %v1171 = vmul.f32 %v1160, %v1167
        %v1172 = vmul.f32 %v1161, %v1167
        %v1173 = vmul.f32 %v1054, %v1054
        %v1174 = vmul.f32 %v1057, %v1057
        %v1175 = vmul.f32 %v1062, %v1062
        %v1176 = vmul.f32 %v1065, %v1065
        %v1177 = vsel %vm1137, %v1173, 0.0
        %1178 = vadd.xlane.f32.xlu0 %v1177
        %v1179 = vpop.xlane.xlu0 %1178
        %v1180 = vsel %vm1137, %v1174, 0.0
        %1181 = vadd.xlane.f32.xlu0 %v1180
        %v1182 = vpop.xlane.xlu0 %1181
        %v1183 = vsel %vm1137, %v1175, 0.0
        %1184 = vadd.xlane.f32.xlu0 %v1183
        %v1185 = vpop.xlane.xlu0 %1184
        %v1186 = vsel %vm1137, %v1176, 0.0
        %1187 = vadd.xlane.f32.xlu0 %v1186
        %v1188 = vpop.xlane.xlu0 %1187
        %v1189 = vadd.f32 %v1179, 1e-08
        %v1190 = vadd.f32 %v1182, 1e-08
        %v1191 = vadd.f32 %v1185, 1e-08
        %v1192 = vadd.f32 %v1188, 1e-08
        %v1193 = vrsqrt.pop %v1189
        %v1194 = vrsqrt.pop %v1190
        %v1195 = vrsqrt.pop %v1191
        %v1196 = vrsqrt.pop %v1192
        %v1197 = vmul.f32 %v1054, %v1193
        %v1198 = vmul.f32 %v1057, %v1194
        %v1199 = vmul.f32 %v1062, %v1195
        %v1200 = vmul.f32 %v1065, %v1196
        %v1201 = vld [vmem:[%s780] sm:$0x1]
        %v1203 = vlaneseq
        %v1204 = vshrl.u32 %v1203, 7
        %v1205 = vsub.s32 0, %v1204
        %v1206 = vrot.slane %v1201, %v1205
        %v1208 = vmul.f32 %v1197, %v1206
        %v1209 = vmul.f32 %v1198, %v1206
        %v1210 = vmul.f32 %v1199, %v1206
        %v1211 = vmul.f32 %v1200, %v1206
        %s1212 = scalar_select %p905, 1, 0
        %v1213 = vstv %s1212
        %vm1214 = vcmp.eq.s32.totalorder %v1213, 1
        %v1215 = vsel %vm1214, %v1169, %v989
        %v1216 = vsel %vm1214, %v1170, %v992
        %v1217 = vsel %vm1214, %v1171, %v997
        %v1218 = vsel %vm1214, %v1172, %v1000
        %v1219 = vsel %vm1214, %v1208, %v1054
        %v1220 = vsel %vm1214, %v1209, %v1057
        %v1221 = vsel %vm1214, %v1210, %v1062
        %v1222 = vsel %vm1214, %v1211, %v1065
        %v1223 = vmul.f32 %v1215, %v906
        %v1224 = vmul.f32 %v1216, %v907
        %v1225 = vmul.f32 %v1217, %v908
        %v1226 = vmul.f32 %v1218, %v909
        %v1228 = vsel %vm1137, %v1215, 0
        %v1231 = vsel %vm1137, %v1216, 0
        %v1234 = vsel %vm1137, %v1217, 0
        %v1237 = vsel %vm1137, %v1218, 0
        %1239 = vmatprep.subr.mxu0 0.0
        %1240 = vmatpush1.msra.mxu0 0.0
        %1241 = vmatprep.subr.mxu0 0.0
        %1242 = vmatpush1.msra.mxu0 0.0
        %1243 = vmatprep.subr.mxu0 0.0
        %1244 = vmatpush1.msra.mxu0 0.0
        %1245 = vmatprep.subr.mxu0 0.0
        %1246 = vmatpush1.msra.mxu0 0.0
        %1247 = vmatprep.subr.mxu0 0.0
        %1248 = vmatpush1.msra.mxu0 0.0
        %1249 = vmatprep.subr.mxu0 0.0
        %1250 = vmatpush1.msra.mxu0 0.0
        %1251 = vmatprep.subr.mxu0 0.0
        %1252 = vmatpush1.msra.mxu0 0.0
        %1253 = vmatprep.subr.mxu0 0.0
        %1254 = vmatpush1.msra.mxu0 0.0
        %1255 = vmatprep.subr.mxu0 0.0
        %1256 = vmatpush1.msra.mxu0 0.0
        %1257 = vmatprep.subr.mxu0 0.0
        %1258 = vmatpush1.msra.mxu0 0.0
        %1259 = vmatprep.subr.mxu0 0.0
        %1260 = vmatpush1.msra.mxu0 0.0
        %1261 = vmatprep.subr.mxu0 0.0
        %1262 = vmatpush1.msra.mxu0 0.0
        %1263 = vmatprep.subr.mxu0 0.0
        %1264 = vmatpush1.msra.mxu0 0.0
        %1265 = vmatprep.subr.mxu0 0.0
        %1266 = vmatpush1.msra.mxu0 0.0
        %1267 = vmatprep.subr.mxu0 0.0
        %1268 = vmatpush1.msra.mxu0 %v926
        %1269 = vmatprep.subr.mxu0 0.0
        %1270 = vmatpush1.msra.mxu0 %v925
        %1271 = vmatprep.subr.mxu0 0.0
        %1272 = vmatpush2.msra.mxu0 0.0
        %1273 = vmatprep.subr.mxu0 0.0
        %1274 = vmatpush2.msra.mxu0 0.0
        %1275 = vmatprep.subr.mxu0 0.0
        %1276 = vmatpush2.msra.mxu0 0.0
        %1277 = vmatprep.subr.mxu0 0.0
        %1278 = vmatpush2.msra.mxu0 0.0
        %1279 = vmatprep.subr.mxu0 0.0
        %1280 = vmatpush2.msra.mxu0 0.0
        %1281 = vmatprep.subr.mxu0 0.0
        %1282 = vmatpush2.msra.mxu0 0.0
        %1283 = vmatprep.subr.mxu0 0.0
        %1284 = vmatpush2.msra.mxu0 0.0
        %1285 = vmatprep.subr.mxu0 0.0
        %1286 = vmatpush2.msra.mxu0 0.0
        %1287 = vmatprep.subr.mxu0 0.0
        %1288 = vmatpush2.msra.mxu0 0.0
        %1289 = vmatprep.subr.mxu0 0.0
        %1290 = vmatpush2.msra.mxu0 0.0
        %1291 = vmatprep.subr.mxu0 0.0
        %1292 = vmatpush2.msra.mxu0 0.0
        %1293 = vmatprep.subr.mxu0 0.0
        %1294 = vmatpush2.msra.mxu0 0.0
        %1295 = vmatprep.subr.mxu0 0.0
        %1296 = vmatpush2.msra.mxu0 0.0
        %1297 = vmatprep.subr.mxu0 0.0
        %1298 = vmatpush2.msra.mxu0 0.0
        %1299 = vmatprep.subr.mxu0 0.0
        %1300 = vmatpush2.msra.mxu0 0.0
        %1301 = vmatprep.subr.mxu0 0.0
        %1302 = vmatpush2.msra.mxu0 0.0
        %1303 = vmatprep.mubr.f32.mxu0 0.0
        %1304 = vmatmul.mubr.f32.gmra.mxu0 %v1228
        %v1305 = vpop.f32.mrf.mxu0
        %v1306 = vadd.f32 0.0, %v1305
        %v1307 = vpop.f32.mrf.mxu0
        %1308 = vmatprep.mubr.f32.mxu0 0.0
        %1309 = vmatmul.mubr.f32.gmra.mxu0 %v1231
        %v1310 = vpop.f32.mrf.mxu0
        %v1311 = vadd.f32 0.0, %v1310
        %v1312 = vpop.f32.mrf.mxu0
        %1313 = vmatprep.mubr.f32.mxu0 0.0
        %1314 = vmatmul.mubr.f32.gmra.mxu0 %v1234
        %v1315 = vpop.f32.mrf.mxu0
        %v1316 = vadd.f32 0.0, %v1315
        %v1317 = vpop.f32.mrf.mxu0
        %1318 = vmatprep.mubr.f32.mxu0 0.0
        %1319 = vmatmul.mubr.f32.gmra.mxu0 %v1237
        %v1320 = vpop.f32.mrf.mxu0
        %v1321 = vadd.f32 0.0, %v1320
        %v1322 = vpop.f32.mrf.mxu0
        %1323 = vdwg.mxu0
        %v1324 = vmul.f32 %v1306, %v911
        %v1325 = vmul.f32 %v1311, %v912
        %v1326 = vmul.f32 %v1316, %v913
        %v1327 = vmul.f32 %v1321, %v914
        %v1328 = vadd.f32 %v1223, %v1324
        %v1329 = vadd.f32 %v1224, %v1325
        %v1330 = vadd.f32 %v1225, %v1326
        %v1331 = vadd.f32 %v1226, %v1327
        %v1332 = vmul.f32 %v1219, %v916
        %v1333 = vmul.f32 %v1220, %v917
        %v1334 = vmul.f32 %v1221, %v918
        %v1335 = vmul.f32 %v1222, %v919
        %v1337 = vsel %vm1137, %v1219, 0
        %v1340 = vsel %vm1137, %v1220, 0
        %v1343 = vsel %vm1137, %v1221, 0
        %v1346 = vsel %vm1137, %v1222, 0
        %1348 = vmatprep.subr.mxu0 0.0
        %1349 = vmatpush1.msra.mxu0 0.0
        %1350 = vmatprep.subr.mxu0 0.0
        %1351 = vmatpush1.msra.mxu0 0.0
        %1352 = vmatprep.subr.mxu0 0.0
        %1353 = vmatpush1.msra.mxu0 0.0
        %1354 = vmatprep.subr.mxu0 0.0
        %1355 = vmatpush1.msra.mxu0 0.0
        %1356 = vmatprep.subr.mxu0 0.0
        %1357 = vmatpush1.msra.mxu0 0.0
        %1358 = vmatprep.subr.mxu0 0.0
        %1359 = vmatpush1.msra.mxu0 0.0
        %1360 = vmatprep.subr.mxu0 0.0
        %1361 = vmatpush1.msra.mxu0 0.0
        %1362 = vmatprep.subr.mxu0 0.0
        %1363 = vmatpush1.msra.mxu0 0.0
        %1364 = vmatprep.subr.mxu0 0.0
        %1365 = vmatpush1.msra.mxu0 0.0
        %1366 = vmatprep.subr.mxu0 0.0
        %1367 = vmatpush1.msra.mxu0 0.0
        %1368 = vmatprep.subr.mxu0 0.0
        %1369 = vmatpush1.msra.mxu0 0.0
        %1370 = vmatprep.subr.mxu0 0.0
        %1371 = vmatpush1.msra.mxu0 0.0
        %1372 = vmatprep.subr.mxu0 0.0
        %1373 = vmatpush1.msra.mxu0 0.0
        %1374 = vmatprep.subr.mxu0 0.0
        %1375 = vmatpush1.msra.mxu0 0.0
        %1376 = vmatprep.subr.mxu0 0.0
        %1377 = vmatpush1.msra.mxu0 %v926
        %1378 = vmatprep.subr.mxu0 0.0
        %1379 = vmatpush1.msra.mxu0 %v925
        %1380 = vmatprep.subr.mxu0 0.0
        %1381 = vmatpush2.msra.mxu0 0.0
        %1382 = vmatprep.subr.mxu0 0.0
        %1383 = vmatpush2.msra.mxu0 0.0
        %1384 = vmatprep.subr.mxu0 0.0
        %1385 = vmatpush2.msra.mxu0 0.0
        %1386 = vmatprep.subr.mxu0 0.0
        %1387 = vmatpush2.msra.mxu0 0.0
        %1388 = vmatprep.subr.mxu0 0.0
        %1389 = vmatpush2.msra.mxu0 0.0
        %1390 = vmatprep.subr.mxu0 0.0
        %1391 = vmatpush2.msra.mxu0 0.0
        %1392 = vmatprep.subr.mxu0 0.0
        %1393 = vmatpush2.msra.mxu0 0.0
        %1394 = vmatprep.subr.mxu0 0.0
        %1395 = vmatpush2.msra.mxu0 0.0
        %1396 = vmatprep.subr.mxu0 0.0
        %1397 = vmatpush2.msra.mxu0 0.0
        %1398 = vmatprep.subr.mxu0 0.0
        %1399 = vmatpush2.msra.mxu0 0.0
        %1400 = vmatprep.subr.mxu0 0.0
        %1401 = vmatpush2.msra.mxu0 0.0
        %1402 = vmatprep.subr.mxu0 0.0
        %1403 = vmatpush2.msra.mxu0 0.0
        %1404 = vmatprep.subr.mxu0 0.0
        %1405 = vmatpush2.msra.mxu0 0.0
        %1406 = vmatprep.subr.mxu0 0.0
        %1407 = vmatpush2.msra.mxu0 0.0
        %1408 = vmatprep.subr.mxu0 0.0
        %1409 = vmatpush2.msra.mxu0 0.0
        %1410 = vmatprep.subr.mxu0 0.0
        %1411 = vmatpush2.msra.mxu0 0.0
        %1412 = vmatprep.mubr.f32.mxu0 0.0
        %1413 = vmatmul.mubr.f32.gmra.mxu0 %v1337
        %v1414 = vpop.f32.mrf.mxu0
        %v1415 = vadd.f32 0.0, %v1414
        %v1416 = vpop.f32.mrf.mxu0
        %1417 = vmatprep.mubr.f32.mxu0 0.0
        %1418 = vmatmul.mubr.f32.gmra.mxu0 %v1340
        %v1419 = vpop.f32.mrf.mxu0
        %v1420 = vadd.f32 0.0, %v1419
        %v1421 = vpop.f32.mrf.mxu0
        %1422 = vmatprep.mubr.f32.mxu0 0.0
        %1423 = vmatmul.mubr.f32.gmra.mxu0 %v1343
        %v1424 = vpop.f32.mrf.mxu0
        %v1425 = vadd.f32 0.0, %v1424
        %v1426 = vpop.f32.mrf.mxu0
        %1427 = vmatprep.mubr.f32.mxu0 0.0
        %1428 = vmatmul.mubr.f32.gmra.mxu0 %v1346
        %v1429 = vpop.f32.mrf.mxu0
        %v1430 = vadd.f32 0.0, %v1429
        %v1431 = vpop.f32.mrf.mxu0
        %1432 = vdwg.mxu0
        %v1433 = vmul.f32 %v1415, %v921
        %v1434 = vmul.f32 %v1420, %v922
        %v1435 = vmul.f32 %v1425, %v923
        %v1436 = vmul.f32 %v1430, %v924
        %v1437 = vadd.f32 %v1332, %v1433
        %v1438 = vadd.f32 %v1333, %v1434
        %v1439 = vadd.f32 %v1334, %v1435
        %v1440 = vadd.f32 %v1335, %v1436
        %v1441 = vpack.c.bf16 %v1328, %v1328
        %v1442 = vpack.c.bf16 %v1329, %v1329
        %v1443 = vpack.c.bf16 %v1330, %v1330
        %v1444 = vpack.c.bf16 %v1331, %v1331
        %v1445 = vpack.c.bf16 %v1437, %v1437
        %v1446 = vpack.c.bf16 %v1438, %v1438
        %v1447 = vpack.c.bf16 %v1439, %v1439
        %v1448 = vpack.c.bf16 %v1440, %v1440
        %v1449 = vpack.c.bf16 %v1119, %v1119
        %v1450 = vpack.c.bf16 %v1122, %v1122
        %v1451 = vpack.c.bf16 %v1127, %v1127
        %v1452 = vpack.c.bf16 %v1130, %v1130
        %v1454 = vsel %vm1137, %v1441, 0
        %v1457 = vsel %vm1137, %v1445, 0
        %1459 = vmatprep.subr.bf16.mxu0 0
        %1460 = vmatpush1.bf16.xpose.msra.mxu0 0
        %1461 = vmatprep.subr.bf16.mxu0 0
        %1462 = vmatpush1.bf16.xpose.msra.mxu0 0
        %1463 = vmatprep.subr.bf16.mxu0 0
        %1464 = vmatpush1.bf16.xpose.msra.mxu0 0
        %1465 = vmatprep.subr.bf16.mxu0 0
        %1466 = vmatpush1.bf16.xpose.msra.mxu0 0
        %1467 = vmatprep.subr.bf16.mxu0 0
        %1468 = vmatpush1.bf16.xpose.msra.mxu0 0
        %1469 = vmatprep.subr.bf16.mxu0 0
        %1470 = vmatpush1.bf16.xpose.msra.mxu0 0
        %1471 = vmatprep.subr.bf16.mxu0 0
        %1472 = vmatpush1.bf16.xpose.msra.mxu0 0
        %1473 = vmatprep.subr.bf16.mxu0 0
        %1474 = vmatpush1.bf16.xpose.msra.mxu0 %v1457
        %1475 = vmatprep.subr.bf16.mxu0 0
        %1476 = vmatpush2.bf16.xpose.msra.mxu0 0
        %1477 = vmatprep.subr.bf16.mxu0 0
        %1478 = vmatpush2.bf16.xpose.msra.mxu0 0
        %1479 = vmatprep.subr.bf16.mxu0 0
        %1480 = vmatpush2.bf16.xpose.msra.mxu0 0
        %1481 = vmatprep.subr.bf16.mxu0 0
        %1482 = vmatpush2.bf16.xpose.msra.mxu0 0
        %1483 = vmatprep.subr.bf16.mxu0 0
        %1484 = vmatpush2.bf16.xpose.msra.mxu0 0
        %1485 = vmatprep.subr.bf16.mxu0 0
        %1486 = vmatpush2.bf16.xpose.msra.mxu0 0
        %1487 = vmatprep.subr.bf16.mxu0 0
        %1488 = vmatpush2.bf16.xpose.msra.mxu0 0
        %1489 = vmatprep.subr.bf16.mxu0 0
        %1490 = vmatpush2.bf16.xpose.msra.mxu0 0
        %1491 = vmatprep.mubr.bf16.mxu0 0
        %1492 = vmatmul.mubr.bf16.gmra.mxu0 %v1454
        %v1493 = vpop.f32.mrf.mxu0
        %v1494 = vadd.f32 0.0, %v1493
        %v1495 = vpop.f32.mrf.mxu0
        %v1496 = vpop.f32.mrf.mxu0
        %v1497 = vpop.f32.mrf.mxu0
        %1498 = vdwg.mxu0
        %v1500 = vsel %vm1137, %v1442, 0
        %v1503 = vsel %vm1137, %v1446, 0
        %1505 = vmatprep.subr.bf16.mxu0 0
        %1506 = vmatpush1.bf16.xpose.msra.mxu0 0
        %1507 = vmatprep.subr.bf16.mxu0 0
        %1508 = vmatpush1.bf16.xpose.msra.mxu0 0
        %1509 = vmatprep.subr.bf16.mxu0 0
        %1510 = vmatpush1.bf16.xpose.msra.mxu0 0
        %1511 = vmatprep.subr.bf16.mxu0 0
        %1512 = vmatpush1.bf16.xpose.msra.mxu0 0
        %1513 = vmatprep.subr.bf16.mxu0 0
        %1514 = vmatpush1.bf16.xpose.msra.mxu0 0
        %1515 = vmatprep.subr.bf16.mxu0 0
        %1516 = vmatpush1.bf16.xpose.msra.mxu0 0
        %1517 = vmatprep.subr.bf16.mxu0 0
        %1518 = vmatpush1.bf16.xpose.msra.mxu0 0
        %1519 = vmatprep.subr.bf16.mxu0 0
        %1520 = vmatpush1.bf16.xpose.msra.mxu0 %v1503
        %1521 = vmatprep.subr.bf16.mxu0 0
        %1522 = vmatpush2.bf16.xpose.msra.mxu0 0
        %1523 = vmatprep.subr.bf16.mxu0 0
        %1524 = vmatpush2.bf16.xpose.msra.mxu0 0
        %1525 = vmatprep.subr.bf16.mxu0 0
        %1526 = vmatpush2.bf16.xpose.msra.mxu0 0
        %1527 = vmatprep.subr.bf16.mxu0 0
        %1528 = vmatpush2.bf16.xpose.msra.mxu0 0
        %1529 = vmatprep.subr.bf16.mxu0 0
        %1530 = vmatpush2.bf16.xpose.msra.mxu0 0
        %1531 = vmatprep.subr.bf16.mxu0 0
        %1532 = vmatpush2.bf16.xpose.msra.mxu0 0
        %1533 = vmatprep.subr.bf16.mxu0 0
        %1534 = vmatpush2.bf16.xpose.msra.mxu0 0
        %1535 = vmatprep.subr.bf16.mxu0 0
        %1536 = vmatpush2.bf16.xpose.msra.mxu0 0
        %1537 = vmatprep.mubr.bf16.mxu0 0
        %1538 = vmatmul.mubr.bf16.gmra.mxu0 %v1500
        %v1539 = vpop.f32.mrf.mxu0
        %v1540 = vadd.f32 0.0, %v1539
        %v1541 = vpop.f32.mrf.mxu0
        %v1542 = vpop.f32.mrf.mxu0
        %v1543 = vpop.f32.mrf.mxu0
        %1544 = vdwg.mxu0
        %v1546 = vsel %vm1137, %v1443, 0
        %v1549 = vsel %vm1137, %v1447, 0
        %1551 = vmatprep.subr.bf16.mxu0 0
        %1552 = vmatpush1.bf16.xpose.msra.mxu0 0
        %1553 = vmatprep.subr.bf16.mxu0 0
        %1554 = vmatpush1.bf16.xpose.msra.mxu0 0
        %1555 = vmatprep.subr.bf16.mxu0 0
        %1556 = vmatpush1.bf16.xpose.msra.mxu0 0
        %1557 = vmatprep.subr.bf16.mxu0 0
        %1558 = vmatpush1.bf16.xpose.msra.mxu0 0
        %1559 = vmatprep.subr.bf16.mxu0 0
        %1560 = vmatpush1.bf16.xpose.msra.mxu0 0
        %1561 = vmatprep.subr.bf16.mxu0 0
        %1562 = vmatpush1.bf16.xpose.msra.mxu0 0
        %1563 = vmatprep.subr.bf16.mxu0 0
        %1564 = vmatpush1.bf16.xpose.msra.mxu0 0
        %1565 = vmatprep.subr.bf16.mxu0 0
        %1566 = vmatpush1.bf16.xpose.msra.mxu0 %v1549
        %1567 = vmatprep.subr.bf16.mxu0 0
        %1568 = vmatpush2.bf16.xpose.msra.mxu0 0
        %1569 = vmatprep.subr.bf16.mxu0 0
        %1570 = vmatpush2.bf16.xpose.msra.mxu0 0
        %1571 = vmatprep.subr.bf16.mxu0 0
        %1572 = vmatpush2.bf16.xpose.msra.mxu0 0
        %1573 = vmatprep.subr.bf16.mxu0 0
        %1574 = vmatpush2.bf16.xpose.msra.mxu0 0
        %1575 = vmatprep.subr.bf16.mxu0 0
        %1576 = vmatpush2.bf16.xpose.msra.mxu0 0
        %1577 = vmatprep.subr.bf16.mxu0 0
        %1578 = vmatpush2.bf16.xpose.msra.mxu0 0
        %1579 = vmatprep.subr.bf16.mxu0 0
        %1580 = vmatpush2.bf16.xpose.msra.mxu0 0
        %1581 = vmatprep.subr.bf16.mxu0 0
        %1582 = vmatpush2.bf16.xpose.msra.mxu0 0
        %1583 = vmatprep.mubr.bf16.mxu0 0
        %1584 = vmatmul.mubr.bf16.gmra.mxu0 %v1546
        %v1585 = vpop.f32.mrf.mxu0
        %v1586 = vadd.f32 0.0, %v1585
        %v1587 = vpop.f32.mrf.mxu0
        %v1588 = vpop.f32.mrf.mxu0
        %v1589 = vpop.f32.mrf.mxu0
        %1590 = vdwg.mxu0
        %v1592 = vsel %vm1137, %v1444, 0
        %v1595 = vsel %vm1137, %v1448, 0
        %1597 = vmatprep.subr.bf16.mxu0 0
        %1598 = vmatpush1.bf16.xpose.msra.mxu0 0
        %1599 = vmatprep.subr.bf16.mxu0 0
        %1600 = vmatpush1.bf16.xpose.msra.mxu0 0
        %1601 = vmatprep.subr.bf16.mxu0 0
        %1602 = vmatpush1.bf16.xpose.msra.mxu0 0
        %1603 = vmatprep.subr.bf16.mxu0 0
        %1604 = vmatpush1.bf16.xpose.msra.mxu0 0
        %1605 = vmatprep.subr.bf16.mxu0 0
        %1606 = vmatpush1.bf16.xpose.msra.mxu0 0
        %1607 = vmatprep.subr.bf16.mxu0 0
        %1608 = vmatpush1.bf16.xpose.msra.mxu0 0
        %1609 = vmatprep.subr.bf16.mxu0 0
        %1610 = vmatpush1.bf16.xpose.msra.mxu0 0
        %1611 = vmatprep.subr.bf16.mxu0 0
        %1612 = vmatpush1.bf16.xpose.msra.mxu0 %v1595
        %1613 = vmatprep.subr.bf16.mxu0 0
        %1614 = vmatpush2.bf16.xpose.msra.mxu0 0
        %1615 = vmatprep.subr.bf16.mxu0 0
        %1616 = vmatpush2.bf16.xpose.msra.mxu0 0
        %1617 = vmatprep.subr.bf16.mxu0 0
        %1618 = vmatpush2.bf16.xpose.msra.mxu0 0
        %1619 = vmatprep.subr.bf16.mxu0 0
        %1620 = vmatpush2.bf16.xpose.msra.mxu0 0
        %1621 = vmatprep.subr.bf16.mxu0 0
        %1622 = vmatpush2.bf16.xpose.msra.mxu0 0
        %1623 = vmatprep.subr.bf16.mxu0 0
        %1624 = vmatpush2.bf16.xpose.msra.mxu0 0
        %1625 = vmatprep.subr.bf16.mxu0 0
        %1626 = vmatpush2.bf16.xpose.msra.mxu0 0
        %1627 = vmatprep.subr.bf16.mxu0 0
        %1628 = vmatpush2.bf16.xpose.msra.mxu0 0
        %1629 = vmatprep.mubr.bf16.mxu0 0
        %1630 = vmatmul.mubr.bf16.gmra.mxu0 %v1592
        %v1631 = vpop.f32.mrf.mxu0
        %v1632 = vadd.f32 0.0, %v1631
        %v1633 = vpop.f32.mrf.mxu0
        %v1634 = vpop.f32.mrf.mxu0
        %v1635 = vpop.f32.mrf.mxu0
        %1636 = vdwg.mxu0
        %v1637 = vmul.f32 %v1494, 0.25
        %v1638 = vmul.f32 %v1540, 0.25
        %v1639 = vmul.f32 %v1586, 0.25
        %v1640 = vmul.f32 %v1632, 0.25
        %v1641 = vsel %vm931, 1, 0
        %vm1642 = vcmp.eq.s32.totalorder %v1641, 1
        %v1643 = vsel %vm1642, %v1637, -1e+30
        %v1644 = vsel %vm1642, %v1638, -1e+30
        %v1645 = vsel %vm1642, %v1639, -1e+30
        %v1646 = vsel %vm1642, %v1640, -1e+30
        %vm1647 = vcmask 64512
        %v1648 = vsel %vm1647, %v1643, -inf
        %1649 = vmax.xlane.f32.xlu0 %v1648
        %v1650 = vpop.xlane.xlu0 %1649
        %v1651 = vsel %vm1647, %v1644, -inf
        %1652 = vmax.xlane.f32.xlu0 %v1651
        %v1653 = vpop.xlane.xlu0 %1652
        %v1654 = vsel %vm1647, %v1645, -inf
        %1655 = vmax.xlane.f32.xlu0 %v1654
        %v1656 = vpop.xlane.xlu0 %1655
        %v1657 = vsel %vm1647, %v1646, -inf
        %1658 = vmax.xlane.f32.xlu0 %v1657
        %v1659 = vpop.xlane.xlu0 %1658
        %v1660 = vsub.f32 %v1643, %v1650
        %v1661 = vsub.f32 %v1644, %v1653
        %v1662 = vsub.f32 %v1645, %v1656
        %v1663 = vsub.f32 %v1646, %v1659
        %v1664 = vmul.f32 %v1660, 1.442695
        %v1665 = vpow.pop %v1664
        %v1666 = vmul.f32 %v1661, 1.442695
        %v1667 = vpow.pop %v1666
        %v1668 = vmul.f32 %v1662, 1.442695
        %v1669 = vpow.pop %v1668
        %v1670 = vmul.f32 %v1663, 1.442695
        %v1671 = vpow.pop %v1670
        %v1672 = vsel %vm1647, %v1665, 0.0
        %1673 = vadd.xlane.f32.xlu0 %v1672
        %v1674 = vpop.xlane.xlu0 %1673
        %v1675 = vsel %vm1647, %v1667, 0.0
        %1676 = vadd.xlane.f32.xlu0 %v1675
        %v1677 = vpop.xlane.xlu0 %1676
        %v1678 = vsel %vm1647, %v1669, 0.0
        %1679 = vadd.xlane.f32.xlu0 %v1678
        %v1680 = vpop.xlane.xlu0 %1679
        %v1681 = vsel %vm1647, %v1671, 0.0
        %1682 = vadd.xlane.f32.xlu0 %v1681
        %v1683 = vpop.xlane.xlu0 %1682
        %v1684 = vrcp.pop %v1674
        %v1685 = vrcp.pop %v1677
        %v1686 = vrcp.pop %v1680
        %v1687 = vrcp.pop %v1683
        %v1688 = vmul.f32 %v1665, %v1684
        %v1689 = vmul.f32 %v1667, %v1685
        %v1690 = vmul.f32 %v1669, %v1686
        %v1691 = vmul.f32 %v1671, %v1687
        %v1692 = vpack.c.bf16 %v1688, %v1688
        %v1693 = vpack.c.bf16 %v1689, %v1689
        %v1694 = vpack.c.bf16 %v1690, %v1690
        %v1695 = vpack.c.bf16 %v1691, %v1691
        %v1697 = vsel %vm1647, %v1692, 0
        %vm1699 = vcmask 1043456
        %v1701 = vsel %vm1699, %v1449, 0
        %1703 = vmatprep.subr.bf16.mxu0 0
        %1704 = vmatpush1.bf16.msra.mxu0 0
        %1705 = vmatprep.subr.bf16.mxu0 0
        %1706 = vmatpush1.bf16.msra.mxu0 0
        %1707 = vmatprep.subr.bf16.mxu0 0
        %1708 = vmatpush1.bf16.msra.mxu0 0
        %1709 = vmatprep.subr.bf16.mxu0 0
        %1710 = vmatpush1.bf16.msra.mxu0 0
        %1711 = vmatprep.subr.bf16.mxu0 0
        %1712 = vmatpush1.bf16.msra.mxu0 0
        %1713 = vmatprep.subr.bf16.mxu0 0
        %1714 = vmatpush1.bf16.msra.mxu0 0
        %1715 = vmatprep.subr.bf16.mxu0 0
        %1716 = vmatpush1.bf16.msra.mxu0 0
        %1717 = vmatprep.subr.bf16.mxu0 0
        %1718 = vmatpush1.bf16.msra.mxu0 %v1701
        %1719 = vmatprep.subr.bf16.mxu0 0
        %1720 = vmatpush2.bf16.msra.mxu0 0
        %1721 = vmatprep.subr.bf16.mxu0 0
        %1722 = vmatpush2.bf16.msra.mxu0 0
        %1723 = vmatprep.subr.bf16.mxu0 0
        %1724 = vmatpush2.bf16.msra.mxu0 0
        %1725 = vmatprep.subr.bf16.mxu0 0
        %1726 = vmatpush2.bf16.msra.mxu0 0
        %1727 = vmatprep.subr.bf16.mxu0 0
        %1728 = vmatpush2.bf16.msra.mxu0 0
        %1729 = vmatprep.subr.bf16.mxu0 0
        %1730 = vmatpush2.bf16.msra.mxu0 0
        %1731 = vmatprep.subr.bf16.mxu0 0
        %1732 = vmatpush2.bf16.msra.mxu0 0
        %1733 = vmatprep.subr.bf16.mxu0 0
        %1734 = vmatpush2.bf16.msra.mxu0 0
        %1735 = vmatprep.mubr.bf16.mxu0 0
        %1736 = vmatmul.mubr.bf16.gmra.mxu0 %v1697
        %v1737 = vpop.f32.mrf.mxu0
        %v1738 = vadd.f32 0.0, %v1737
        %v1739 = vpop.f32.mrf.mxu0
        %v1740 = vpop.f32.mrf.mxu0
        %v1741 = vpop.f32.mrf.mxu0
        %1742 = vdwg.mxu0
        %v1744 = vsel %vm1647, %v1693, 0
        %v1747 = vsel %vm1699, %v1450, 0
        %1749 = vmatprep.subr.bf16.mxu0 0
        %1750 = vmatpush1.bf16.msra.mxu0 0
        %1751 = vmatprep.subr.bf16.mxu0 0
        %1752 = vmatpush1.bf16.msra.mxu0 0
        %1753 = vmatprep.subr.bf16.mxu0 0
        %1754 = vmatpush1.bf16.msra.mxu0 0
        %1755 = vmatprep.subr.bf16.mxu0 0
        %1756 = vmatpush1.bf16.msra.mxu0 0
        %1757 = vmatprep.subr.bf16.mxu0 0
        %1758 = vmatpush1.bf16.msra.mxu0 0
        %1759 = vmatprep.subr.bf16.mxu0 0
        %1760 = vmatpush1.bf16.msra.mxu0 0
        %1761 = vmatprep.subr.bf16.mxu0 0
        %1762 = vmatpush1.bf16.msra.mxu0 0
        %1763 = vmatprep.subr.bf16.mxu0 0
        %1764 = vmatpush1.bf16.msra.mxu0 %v1747
        %1765 = vmatprep.subr.bf16.mxu0 0
        %1766 = vmatpush2.bf16.msra.mxu0 0
        %1767 = vmatprep.subr.bf16.mxu0 0
        %1768 = vmatpush2.bf16.msra.mxu0 0
        %1769 = vmatprep.subr.bf16.mxu0 0
        %1770 = vmatpush2.bf16.msra.mxu0 0
        %1771 = vmatprep.subr.bf16.mxu0 0
        %1772 = vmatpush2.bf16.msra.mxu0 0
        %1773 = vmatprep.subr.bf16.mxu0 0
        %1774 = vmatpush2.bf16.msra.mxu0 0
        %1775 = vmatprep.subr.bf16.mxu0 0
        %1776 = vmatpush2.bf16.msra.mxu0 0
        %1777 = vmatprep.subr.bf16.mxu0 0
        %1778 = vmatpush2.bf16.msra.mxu0 0
        %1779 = vmatprep.subr.bf16.mxu0 0
        %1780 = vmatpush2.bf16.msra.mxu0 0
        %1781 = vmatprep.mubr.bf16.mxu0 0
        %1782 = vmatmul.mubr.bf16.gmra.mxu0 %v1744
        %v1783 = vpop.f32.mrf.mxu0
        %v1784 = vadd.f32 0.0, %v1783
        %v1785 = vpop.f32.mrf.mxu0
        %v1786 = vpop.f32.mrf.mxu0
        %v1787 = vpop.f32.mrf.mxu0
        %1788 = vdwg.mxu0
        %v1790 = vsel %vm1647, %v1694, 0
        %v1793 = vsel %vm1699, %v1451, 0
        %1795 = vmatprep.subr.bf16.mxu0 0
        %1796 = vmatpush1.bf16.msra.mxu0 0
        %1797 = vmatprep.subr.bf16.mxu0 0
        %1798 = vmatpush1.bf16.msra.mxu0 0
        %1799 = vmatprep.subr.bf16.mxu0 0
        %1800 = vmatpush1.bf16.msra.mxu0 0
        %1801 = vmatprep.subr.bf16.mxu0 0
        %1802 = vmatpush1.bf16.msra.mxu0 0
        %1803 = vmatprep.subr.bf16.mxu0 0
        %1804 = vmatpush1.bf16.msra.mxu0 0
        %1805 = vmatprep.subr.bf16.mxu0 0
        %1806 = vmatpush1.bf16.msra.mxu0 0
        %1807 = vmatprep.subr.bf16.mxu0 0
        %1808 = vmatpush1.bf16.msra.mxu0 0
        %1809 = vmatprep.subr.bf16.mxu0 0
        %1810 = vmatpush1.bf16.msra.mxu0 %v1793
        %1811 = vmatprep.subr.bf16.mxu0 0
        %1812 = vmatpush2.bf16.msra.mxu0 0
        %1813 = vmatprep.subr.bf16.mxu0 0
        %1814 = vmatpush2.bf16.msra.mxu0 0
        %1815 = vmatprep.subr.bf16.mxu0 0
        %1816 = vmatpush2.bf16.msra.mxu0 0
        %1817 = vmatprep.subr.bf16.mxu0 0
        %1818 = vmatpush2.bf16.msra.mxu0 0
        %1819 = vmatprep.subr.bf16.mxu0 0
        %1820 = vmatpush2.bf16.msra.mxu0 0
        %1821 = vmatprep.subr.bf16.mxu0 0
        %1822 = vmatpush2.bf16.msra.mxu0 0
        %1823 = vmatprep.subr.bf16.mxu0 0
        %1824 = vmatpush2.bf16.msra.mxu0 0
        %1825 = vmatprep.subr.bf16.mxu0 0
        %1826 = vmatpush2.bf16.msra.mxu0 0
        %1827 = vmatprep.mubr.bf16.mxu0 0
        %1828 = vmatmul.mubr.bf16.gmra.mxu0 %v1790
        %v1829 = vpop.f32.mrf.mxu0
        %v1830 = vadd.f32 0.0, %v1829
        %v1831 = vpop.f32.mrf.mxu0
        %v1832 = vpop.f32.mrf.mxu0
        %v1833 = vpop.f32.mrf.mxu0
        %1834 = vdwg.mxu0
        %v1836 = vsel %vm1647, %v1695, 0
        %v1839 = vsel %vm1699, %v1452, 0
        %1841 = vmatprep.subr.bf16.mxu0 0
        %1842 = vmatpush1.bf16.msra.mxu0 0
        %1843 = vmatprep.subr.bf16.mxu0 0
        %1844 = vmatpush1.bf16.msra.mxu0 0
        %1845 = vmatprep.subr.bf16.mxu0 0
        %1846 = vmatpush1.bf16.msra.mxu0 0
        %1847 = vmatprep.subr.bf16.mxu0 0
        %1848 = vmatpush1.bf16.msra.mxu0 0
        %1849 = vmatprep.subr.bf16.mxu0 0
        %1850 = vmatpush1.bf16.msra.mxu0 0
        %1851 = vmatprep.subr.bf16.mxu0 0
        %1852 = vmatpush1.bf16.msra.mxu0 0
        %1853 = vmatprep.subr.bf16.mxu0 0
        %1854 = vmatpush1.bf16.msra.mxu0 0
        %1855 = vmatprep.subr.bf16.mxu0 0
        %1856 = vmatpush1.bf16.msra.mxu0 %v1839
        %1857 = vmatprep.subr.bf16.mxu0 0
        %1858 = vmatpush2.bf16.msra.mxu0 0
        %1859 = vmatprep.subr.bf16.mxu0 0
        %1860 = vmatpush2.bf16.msra.mxu0 0
        %1861 = vmatprep.subr.bf16.mxu0 0
        %1862 = vmatpush2.bf16.msra.mxu0 0
        %1863 = vmatprep.subr.bf16.mxu0 0
        %1864 = vmatpush2.bf16.msra.mxu0 0
        %1865 = vmatprep.subr.bf16.mxu0 0
        %1866 = vmatpush2.bf16.msra.mxu0 0
        %1867 = vmatprep.subr.bf16.mxu0 0
        %1868 = vmatpush2.bf16.msra.mxu0 0
        %1869 = vmatprep.subr.bf16.mxu0 0
        %1870 = vmatpush2.bf16.msra.mxu0 0
        %1871 = vmatprep.subr.bf16.mxu0 0
        %1872 = vmatpush2.bf16.msra.mxu0 0
        %1873 = vmatprep.mubr.bf16.mxu0 0
        %1874 = vmatmul.mubr.bf16.gmra.mxu0 %v1836
        %v1875 = vpop.f32.mrf.mxu0
        %v1876 = vadd.f32 0.0, %v1875
        %v1877 = vpop.f32.mrf.mxu0
        %v1878 = vpop.f32.mrf.mxu0
        %v1879 = vpop.f32.mrf.mxu0
        %1880 = vdwg.mxu0
        %v1881 = vpack.c.bf16 %v1784, %v1738
        %v1882 = vpack.c.bf16 %v1876, %v1830
        %v1883 = vld [vmem:[%s772] sm:$0xf]
        %v1884 = vld [vmem:[%s772 + $0x4] sm:$0xf]
        %s1885 = scalar_lea.vmem %s757, 16
        %v1886 = vld [vmem:[%s1885] sm:$0xf]
        %v1887 = vld [vmem:[%s1885 + $0x4] sm:$0xf]
        %v1888 = vld [vmem:[%s1885 + $0x8] sm:$0xf]
        %v1889 = vld [vmem:[%s1885 + $0xc] sm:$0xf]
        %v1894 = vunpack.c.l.b16 %v1886
        %v1895 = vunpack.c.l.b16 %v1887
        %v1896 = vunpack.c.l.b16 %v1888
        %v1897 = vunpack.c.l.b16 %v1889
        %v1898 = vpack.c.b16 %v1895, %v1894
        %v1899 = vpack.c.b16 %v1897, %v1896
        %1902 = vmatprep.subr.bf16.mxu0 0
        %1903 = vmatpush1.bf16.msra.mxu0 0
        %1904 = vmatprep.subr.bf16.mxu0 0
        %1905 = vmatpush1.bf16.msra.mxu0 0
        %1906 = vmatprep.subr.bf16.mxu0 0
        %1907 = vmatpush1.bf16.msra.mxu0 0
        %1908 = vmatprep.subr.bf16.mxu0 0
        %1909 = vmatpush1.bf16.msra.mxu0 0
        %1910 = vmatprep.subr.bf16.mxu0 0
        %1911 = vmatpush1.bf16.msra.mxu0 0
        %1912 = vmatprep.subr.bf16.mxu0 0
        %1913 = vmatpush1.bf16.msra.mxu0 0
        %1914 = vmatprep.subr.bf16.mxu0 0
        %1915 = vmatpush1.bf16.msra.mxu0 %v1899
        %1916 = vmatprep.subr.bf16.mxu0 0
        %1917 = vmatpush1.bf16.msra.mxu0 %v1898
        %1918 = vmatprep.subr.bf16.mxu0 0
        %1919 = vmatpush2.bf16.msra.mxu0 0
        %1920 = vmatprep.subr.bf16.mxu0 0
        %1921 = vmatpush2.bf16.msra.mxu0 0
        %1922 = vmatprep.subr.bf16.mxu0 0
        %1923 = vmatpush2.bf16.msra.mxu0 0
        %1924 = vmatprep.subr.bf16.mxu0 0
        %1925 = vmatpush2.bf16.msra.mxu0 0
        %1926 = vmatprep.subr.bf16.mxu0 0
        %1927 = vmatpush2.bf16.msra.mxu0 0
        %1928 = vmatprep.subr.bf16.mxu0 0
        %1929 = vmatpush2.bf16.msra.mxu0 0
        %1930 = vmatprep.subr.bf16.mxu0 0
        %1931 = vmatpush2.bf16.msra.mxu0 0
        %1932 = vmatprep.subr.bf16.mxu0 0
        %1933 = vmatpush2.bf16.msra.mxu0 0
        %1934 = vmatprep.mubr.bf16.mxu0 0
        %1935 = vmatmul.mubr.bf16.gmra.mxu0 %v949
        %v1936 = vpop.f32.mrf.mxu0
        %v1937 = vadd.f32 0.0, %v1936
        %v1938 = vpop.f32.mrf.mxu0
        %v1939 = vpop.f32.mrf.mxu0
        %v1940 = vadd.f32 0.0, %v1939
        %v1941 = vpop.f32.mrf.mxu0
        %1942 = vmatprep.mubr.bf16.mxu0 0
        %1943 = vmatmul.mubr.bf16.gmra.mxu0 %v952
        %v1944 = vpop.f32.mrf.mxu0
        %v1945 = vadd.f32 0.0, %v1944
        %v1946 = vpop.f32.mrf.mxu0
        %v1947 = vpop.f32.mrf.mxu0
        %v1948 = vadd.f32 0.0, %v1947
        %v1949 = vpop.f32.mrf.mxu0
        %1950 = vdwg.mxu0
        %s1951 = scalar_lea.vmem %s762, 16
        %v1952 = vld [vmem:[%s1951] sm:$0xf]
        %v1953 = vld [vmem:[%s1951 + $0x4] sm:$0xf]
        %v1954 = vld [vmem:[%s1951 + $0x8] sm:$0xf]
        %v1955 = vld [vmem:[%s1951 + $0xc] sm:$0xf]
        %v1960 = vunpack.c.l.b16 %v1952
        %v1961 = vunpack.c.l.b16 %v1953
        %v1962 = vunpack.c.l.b16 %v1954
        %v1963 = vunpack.c.l.b16 %v1955
        %v1964 = vpack.c.b16 %v1961, %v1960
        %v1965 = vpack.c.b16 %v1963, %v1962
        %1968 = vmatprep.subr.bf16.mxu0 0
        %1969 = vmatpush1.bf16.msra.mxu0 0
        %1970 = vmatprep.subr.bf16.mxu0 0
        %1971 = vmatpush1.bf16.msra.mxu0 0
        %1972 = vmatprep.subr.bf16.mxu0 0
        %1973 = vmatpush1.bf16.msra.mxu0 0
        %1974 = vmatprep.subr.bf16.mxu0 0
        %1975 = vmatpush1.bf16.msra.mxu0 0
        %1976 = vmatprep.subr.bf16.mxu0 0
        %1977 = vmatpush1.bf16.msra.mxu0 0
        %1978 = vmatprep.subr.bf16.mxu0 0
        %1979 = vmatpush1.bf16.msra.mxu0 0
        %1980 = vmatprep.subr.bf16.mxu0 0
        %1981 = vmatpush1.bf16.msra.mxu0 %v1965
        %1982 = vmatprep.subr.bf16.mxu0 0
        %1983 = vmatpush1.bf16.msra.mxu0 %v1964
        %1984 = vmatprep.subr.bf16.mxu0 0
        %1985 = vmatpush2.bf16.msra.mxu0 0
        %1986 = vmatprep.subr.bf16.mxu0 0
        %1987 = vmatpush2.bf16.msra.mxu0 0
        %1988 = vmatprep.subr.bf16.mxu0 0
        %1989 = vmatpush2.bf16.msra.mxu0 0
        %1990 = vmatprep.subr.bf16.mxu0 0
        %1991 = vmatpush2.bf16.msra.mxu0 0
        %1992 = vmatprep.subr.bf16.mxu0 0
        %1993 = vmatpush2.bf16.msra.mxu0 0
        %1994 = vmatprep.subr.bf16.mxu0 0
        %1995 = vmatpush2.bf16.msra.mxu0 0
        %1996 = vmatprep.subr.bf16.mxu0 0
        %1997 = vmatpush2.bf16.msra.mxu0 0
        %1998 = vmatprep.subr.bf16.mxu0 0
        %1999 = vmatpush2.bf16.msra.mxu0 0
        %2000 = vmatprep.mubr.bf16.mxu0 0
        %2001 = vmatmul.mubr.bf16.gmra.mxu0 %v949
        %v2002 = vpop.f32.mrf.mxu0
        %v2003 = vadd.f32 0.0, %v2002
        %v2004 = vpop.f32.mrf.mxu0
        %v2005 = vpop.f32.mrf.mxu0
        %v2006 = vadd.f32 0.0, %v2005
        %v2007 = vpop.f32.mrf.mxu0
        %2008 = vmatprep.mubr.bf16.mxu0 0
        %2009 = vmatmul.mubr.bf16.gmra.mxu0 %v952
        %v2010 = vpop.f32.mrf.mxu0
        %v2011 = vadd.f32 0.0, %v2010
        %v2012 = vpop.f32.mrf.mxu0
        %v2013 = vpop.f32.mrf.mxu0
        %v2014 = vadd.f32 0.0, %v2013
        %v2015 = vpop.f32.mrf.mxu0
        %2016 = vdwg.mxu0
        %s2017 = scalar_lea.vmem %s767, 16
        %v2018 = vld [vmem:[%s2017] sm:$0xf]
        %v2019 = vld [vmem:[%s2017 + $0x4] sm:$0xf]
        %v2020 = vld [vmem:[%s2017 + $0x8] sm:$0xf]
        %v2021 = vld [vmem:[%s2017 + $0xc] sm:$0xf]
        %v2026 = vunpack.c.l.b16 %v2018
        %v2027 = vunpack.c.l.b16 %v2019
        %v2028 = vunpack.c.l.b16 %v2020
        %v2029 = vunpack.c.l.b16 %v2021
        %v2030 = vpack.c.b16 %v2027, %v2026
        %v2031 = vpack.c.b16 %v2029, %v2028
        %2034 = vmatprep.subr.bf16.mxu0 0
        %2035 = vmatpush1.bf16.msra.mxu0 0
        %2036 = vmatprep.subr.bf16.mxu0 0
        %2037 = vmatpush1.bf16.msra.mxu0 0
        %2038 = vmatprep.subr.bf16.mxu0 0
        %2039 = vmatpush1.bf16.msra.mxu0 0
        %2040 = vmatprep.subr.bf16.mxu0 0
        %2041 = vmatpush1.bf16.msra.mxu0 0
        %2042 = vmatprep.subr.bf16.mxu0 0
        %2043 = vmatpush1.bf16.msra.mxu0 0
        %2044 = vmatprep.subr.bf16.mxu0 0
        %2045 = vmatpush1.bf16.msra.mxu0 0
        %2046 = vmatprep.subr.bf16.mxu0 0
        %2047 = vmatpush1.bf16.msra.mxu0 %v2031
        %2048 = vmatprep.subr.bf16.mxu0 0
        %2049 = vmatpush1.bf16.msra.mxu0 %v2030
        %2050 = vmatprep.subr.bf16.mxu0 0
        %2051 = vmatpush2.bf16.msra.mxu0 0
        %2052 = vmatprep.subr.bf16.mxu0 0
        %2053 = vmatpush2.bf16.msra.mxu0 0
        %2054 = vmatprep.subr.bf16.mxu0 0
        %2055 = vmatpush2.bf16.msra.mxu0 0
        %2056 = vmatprep.subr.bf16.mxu0 0
        %2057 = vmatpush2.bf16.msra.mxu0 0
        %2058 = vmatprep.subr.bf16.mxu0 0
        %2059 = vmatpush2.bf16.msra.mxu0 0
        %2060 = vmatprep.subr.bf16.mxu0 0
        %2061 = vmatpush2.bf16.msra.mxu0 0
        %2062 = vmatprep.subr.bf16.mxu0 0
        %2063 = vmatpush2.bf16.msra.mxu0 0
        %2064 = vmatprep.subr.bf16.mxu0 0
        %2065 = vmatpush2.bf16.msra.mxu0 0
        %2066 = vmatprep.mubr.bf16.mxu0 0
        %2067 = vmatmul.mubr.bf16.gmra.mxu0 %v949
        %v2068 = vpop.f32.mrf.mxu0
        %v2069 = vadd.f32 0.0, %v2068
        %v2070 = vpop.f32.mrf.mxu0
        %v2071 = vpop.f32.mrf.mxu0
        %v2072 = vadd.f32 0.0, %v2071
        %v2073 = vpop.f32.mrf.mxu0
        %2074 = vmatprep.mubr.bf16.mxu0 0
        %2075 = vmatmul.mubr.bf16.gmra.mxu0 %v952
        %v2076 = vpop.f32.mrf.mxu0
        %v2077 = vadd.f32 0.0, %v2076
        %v2078 = vpop.f32.mrf.mxu0
        %v2079 = vpop.f32.mrf.mxu0
        %v2080 = vadd.f32 0.0, %v2079
        %v2081 = vpop.f32.mrf.mxu0
        %2082 = vdwg.mxu0
        %v2083 = vmul.f32 %v1937, %v1937
        %v2084 = vmul.f32 %v1940, %v1940
        %v2085 = vmul.f32 %v1945, %v1945
        %v2086 = vmul.f32 %v1948, %v1948
        %v2087 = vsel %vm1137, %v2083, 0.0
        %2088 = vadd.xlane.f32.xlu0 %v2087
        %v2089 = vpop.xlane.xlu0 %2088
        %v2090 = vsel %vm1137, %v2084, 0.0
        %2091 = vadd.xlane.f32.xlu0 %v2090
        %v2092 = vpop.xlane.xlu0 %2091
        %v2093 = vsel %vm1137, %v2085, 0.0
        %2094 = vadd.xlane.f32.xlu0 %v2093
        %v2095 = vpop.xlane.xlu0 %2094
        %v2096 = vsel %vm1137, %v2086, 0.0
        %2097 = vadd.xlane.f32.xlu0 %v2096
        %v2098 = vpop.xlane.xlu0 %2097
        %v2099 = vadd.f32 %v2089, 1e-08
        %v2100 = vadd.f32 %v2092, 1e-08
        %v2101 = vadd.f32 %v2095, 1e-08
        %v2102 = vadd.f32 %v2098, 1e-08
        %v2103 = vrsqrt.pop %v2099
        %v2104 = vrsqrt.pop %v2100
        %v2105 = vrsqrt.pop %v2101
        %v2106 = vrsqrt.pop %v2102
        %v2107 = vmul.f32 %v1937, %v2103
        %v2108 = vmul.f32 %v1940, %v2104
        %v2109 = vmul.f32 %v1945, %v2105
        %v2110 = vmul.f32 %v1948, %v2106
        %s2111 = scalar_lea.vmem %s776, 1
        %v2112 = vld [vmem:[%s2111] sm:$0x1]
        %v2114 = vlaneseq
        %v2115 = vshrl.u32 %v2114, 7
        %v2116 = vsub.s32 0, %v2115
        %v2117 = vrot.slane %v2112, %v2116
        %v2119 = vmul.f32 %v2107, %v2117
        %v2120 = vmul.f32 %v2108, %v2117
        %v2121 = vmul.f32 %v2109, %v2117
        %v2122 = vmul.f32 %v2110, %v2117
        %v2123 = vmul.f32 %v2003, %v2003
        %v2124 = vmul.f32 %v2006, %v2006
        %v2125 = vmul.f32 %v2011, %v2011
        %v2126 = vmul.f32 %v2014, %v2014
        %v2127 = vsel %vm1137, %v2123, 0.0
        %2128 = vadd.xlane.f32.xlu0 %v2127
        %v2129 = vpop.xlane.xlu0 %2128
        %v2130 = vsel %vm1137, %v2124, 0.0
        %2131 = vadd.xlane.f32.xlu0 %v2130
        %v2132 = vpop.xlane.xlu0 %2131
        %v2133 = vsel %vm1137, %v2125, 0.0
        %2134 = vadd.xlane.f32.xlu0 %v2133
        %v2135 = vpop.xlane.xlu0 %2134
        %v2136 = vsel %vm1137, %v2126, 0.0
        %2137 = vadd.xlane.f32.xlu0 %v2136
        %v2138 = vpop.xlane.xlu0 %2137
        %v2139 = vadd.f32 %v2129, 1e-08
        %v2140 = vadd.f32 %v2132, 1e-08
        %v2141 = vadd.f32 %v2135, 1e-08
        %v2142 = vadd.f32 %v2138, 1e-08
        %v2143 = vrsqrt.pop %v2139
        %v2144 = vrsqrt.pop %v2140
        %v2145 = vrsqrt.pop %v2141
        %v2146 = vrsqrt.pop %v2142
        %v2147 = vmul.f32 %v2003, %v2143
        %v2148 = vmul.f32 %v2006, %v2144
        %v2149 = vmul.f32 %v2011, %v2145
        %v2150 = vmul.f32 %v2014, %v2146
        %s2151 = scalar_lea.vmem %s780, 1
        %v2152 = vld [vmem:[%s2151] sm:$0x1]
        %v2154 = vlaneseq
        %v2155 = vshrl.u32 %v2154, 7
        %v2156 = vsub.s32 0, %v2155
        %v2157 = vrot.slane %v2152, %v2156
        %v2159 = vmul.f32 %v2147, %v2157
        %v2160 = vmul.f32 %v2148, %v2157
        %v2161 = vmul.f32 %v2149, %v2157
        %v2162 = vmul.f32 %v2150, %v2157
        %v2163 = vsel %vm1214, %v2119, %v1937
        %v2164 = vsel %vm1214, %v2120, %v1940
        %v2165 = vsel %vm1214, %v2121, %v1945
        %v2166 = vsel %vm1214, %v2122, %v1948
        %v2167 = vsel %vm1214, %v2159, %v2003
        %v2168 = vsel %vm1214, %v2160, %v2006
        %v2169 = vsel %vm1214, %v2161, %v2011
        %v2170 = vsel %vm1214, %v2162, %v2014
        %v2171 = vmul.f32 %v2163, %v906
        %v2172 = vmul.f32 %v2164, %v907
        %v2173 = vmul.f32 %v2165, %v908
        %v2174 = vmul.f32 %v2166, %v909
        %v2176 = vsel %vm1137, %v2163, 0
        %v2179 = vsel %vm1137, %v2164, 0
        %v2182 = vsel %vm1137, %v2165, 0
        %v2185 = vsel %vm1137, %v2166, 0
        %2187 = vmatprep.subr.mxu0 0.0
        %2188 = vmatpush1.msra.mxu0 0.0
        %2189 = vmatprep.subr.mxu0 0.0
        %2190 = vmatpush1.msra.mxu0 0.0
        %2191 = vmatprep.subr.mxu0 0.0
        %2192 = vmatpush1.msra.mxu0 0.0
        %2193 = vmatprep.subr.mxu0 0.0
        %2194 = vmatpush1.msra.mxu0 0.0
        %2195 = vmatprep.subr.mxu0 0.0
        %2196 = vmatpush1.msra.mxu0 0.0
        %2197 = vmatprep.subr.mxu0 0.0
        %2198 = vmatpush1.msra.mxu0 0.0
        %2199 = vmatprep.subr.mxu0 0.0
        %2200 = vmatpush1.msra.mxu0 0.0
        %2201 = vmatprep.subr.mxu0 0.0
        %2202 = vmatpush1.msra.mxu0 0.0
        %2203 = vmatprep.subr.mxu0 0.0
        %2204 = vmatpush1.msra.mxu0 0.0
        %2205 = vmatprep.subr.mxu0 0.0
        %2206 = vmatpush1.msra.mxu0 0.0
        %2207 = vmatprep.subr.mxu0 0.0
        %2208 = vmatpush1.msra.mxu0 0.0
        %2209 = vmatprep.subr.mxu0 0.0
        %2210 = vmatpush1.msra.mxu0 0.0
        %2211 = vmatprep.subr.mxu0 0.0
        %2212 = vmatpush1.msra.mxu0 0.0
        %2213 = vmatprep.subr.mxu0 0.0
        %2214 = vmatpush1.msra.mxu0 0.0
        %2215 = vmatprep.subr.mxu0 0.0
        %2216 = vmatpush1.msra.mxu0 %v926
        %2217 = vmatprep.subr.mxu0 0.0
        %2218 = vmatpush1.msra.mxu0 %v925
        %2219 = vmatprep.subr.mxu0 0.0
        %2220 = vmatpush2.msra.mxu0 0.0
        %2221 = vmatprep.subr.mxu0 0.0
        %2222 = vmatpush2.msra.mxu0 0.0
        %2223 = vmatprep.subr.mxu0 0.0
        %2224 = vmatpush2.msra.mxu0 0.0
        %2225 = vmatprep.subr.mxu0 0.0
        %2226 = vmatpush2.msra.mxu0 0.0
        %2227 = vmatprep.subr.mxu0 0.0
        %2228 = vmatpush2.msra.mxu0 0.0
        %2229 = vmatprep.subr.mxu0 0.0
        %2230 = vmatpush2.msra.mxu0 0.0
        %2231 = vmatprep.subr.mxu0 0.0
        %2232 = vmatpush2.msra.mxu0 0.0
        %2233 = vmatprep.subr.mxu0 0.0
        %2234 = vmatpush2.msra.mxu0 0.0
        %2235 = vmatprep.subr.mxu0 0.0
        %2236 = vmatpush2.msra.mxu0 0.0
        %2237 = vmatprep.subr.mxu0 0.0
        %2238 = vmatpush2.msra.mxu0 0.0
        %2239 = vmatprep.subr.mxu0 0.0
        %2240 = vmatpush2.msra.mxu0 0.0
        %2241 = vmatprep.subr.mxu0 0.0
        %2242 = vmatpush2.msra.mxu0 0.0
        %2243 = vmatprep.subr.mxu0 0.0
        %2244 = vmatpush2.msra.mxu0 0.0
        %2245 = vmatprep.subr.mxu0 0.0
        %2246 = vmatpush2.msra.mxu0 0.0
        %2247 = vmatprep.subr.mxu0 0.0
        %2248 = vmatpush2.msra.mxu0 0.0
        %2249 = vmatprep.subr.mxu0 0.0
        %2250 = vmatpush2.msra.mxu0 0.0
        %2251 = vmatprep.mubr.f32.mxu0 0.0
        %2252 = vmatmul.mubr.f32.gmra.mxu0 %v2176
        %v2253 = vpop.f32.mrf.mxu0
        %v2254 = vadd.f32 0.0, %v2253
        %v2255 = vpop.f32.mrf.mxu0
        %2256 = vmatprep.mubr.f32.mxu0 0.0
        %2257 = vmatmul.mubr.f32.gmra.mxu0 %v2179
        %v2258 = vpop.f32.mrf.mxu0
        %v2259 = vadd.f32 0.0, %v2258
        %v2260 = vpop.f32.mrf.mxu0
        %2261 = vmatprep.mubr.f32.mxu0 0.0
        %2262 = vmatmul.mubr.f32.gmra.mxu0 %v2182
        %v2263 = vpop.f32.mrf.mxu0
        %v2264 = vadd.f32 0.0, %v2263
        %v2265 = vpop.f32.mrf.mxu0
        %2266 = vmatprep.mubr.f32.mxu0 0.0
        %2267 = vmatmul.mubr.f32.gmra.mxu0 %v2185
        %v2268 = vpop.f32.mrf.mxu0
        %v2269 = vadd.f32 0.0, %v2268
        %v2270 = vpop.f32.mrf.mxu0
        %2271 = vdwg.mxu0
        %v2272 = vmul.f32 %v2254, %v911
        %v2273 = vmul.f32 %v2259, %v912
        %v2274 = vmul.f32 %v2264, %v913
        %v2275 = vmul.f32 %v2269, %v914
        %v2276 = vadd.f32 %v2171, %v2272
        %v2277 = vadd.f32 %v2172, %v2273
        %v2278 = vadd.f32 %v2173, %v2274
        %v2279 = vadd.f32 %v2174, %v2275
        %v2280 = vmul.f32 %v2167, %v916
        %v2281 = vmul.f32 %v2168, %v917
        %v2282 = vmul.f32 %v2169, %v918
        %v2283 = vmul.f32 %v2170, %v919
        %v2285 = vsel %vm1137, %v2167, 0
        %v2288 = vsel %vm1137, %v2168, 0
        %v2291 = vsel %vm1137, %v2169, 0
        %v2294 = vsel %vm1137, %v2170, 0
        %2296 = vmatprep.subr.mxu0 0.0
        %2297 = vmatpush1.msra.mxu0 0.0
        %2298 = vmatprep.subr.mxu0 0.0
        %2299 = vmatpush1.msra.mxu0 0.0
        %2300 = vmatprep.subr.mxu0 0.0
        %2301 = vmatpush1.msra.mxu0 0.0
        %2302 = vmatprep.subr.mxu0 0.0
        %2303 = vmatpush1.msra.mxu0 0.0
        %2304 = vmatprep.subr.mxu0 0.0
        %2305 = vmatpush1.msra.mxu0 0.0
        %2306 = vmatprep.subr.mxu0 0.0
        %2307 = vmatpush1.msra.mxu0 0.0
        %2308 = vmatprep.subr.mxu0 0.0
        %2309 = vmatpush1.msra.mxu0 0.0
        %2310 = vmatprep.subr.mxu0 0.0
        %2311 = vmatpush1.msra.mxu0 0.0
        %2312 = vmatprep.subr.mxu0 0.0
        %2313 = vmatpush1.msra.mxu0 0.0
        %2314 = vmatprep.subr.mxu0 0.0
        %2315 = vmatpush1.msra.mxu0 0.0
        %2316 = vmatprep.subr.mxu0 0.0
        %2317 = vmatpush1.msra.mxu0 0.0
        %2318 = vmatprep.subr.mxu0 0.0
        %2319 = vmatpush1.msra.mxu0 0.0
        %2320 = vmatprep.subr.mxu0 0.0
        %2321 = vmatpush1.msra.mxu0 0.0
        %2322 = vmatprep.subr.mxu0 0.0
        %2323 = vmatpush1.msra.mxu0 0.0
        %2324 = vmatprep.subr.mxu0 0.0
        %2325 = vmatpush1.msra.mxu0 %v926
        %2326 = vmatprep.subr.mxu0 0.0
        %2327 = vmatpush1.msra.mxu0 %v925
        %2328 = vmatprep.subr.mxu0 0.0
        %2329 = vmatpush2.msra.mxu0 0.0
        %2330 = vmatprep.subr.mxu0 0.0
        %2331 = vmatpush2.msra.mxu0 0.0
        %2332 = vmatprep.subr.mxu0 0.0
        %2333 = vmatpush2.msra.mxu0 0.0
        %2334 = vmatprep.subr.mxu0 0.0
        %2335 = vmatpush2.msra.mxu0 0.0
        %2336 = vmatprep.subr.mxu0 0.0
        %2337 = vmatpush2.msra.mxu0 0.0
        %2338 = vmatprep.subr.mxu0 0.0
        %2339 = vmatpush2.msra.mxu0 0.0
        %2340 = vmatprep.subr.mxu0 0.0
        %2341 = vmatpush2.msra.mxu0 0.0
        %2342 = vmatprep.subr.mxu0 0.0
        %2343 = vmatpush2.msra.mxu0 0.0
        %2344 = vmatprep.subr.mxu0 0.0
        %2345 = vmatpush2.msra.mxu0 0.0
        %2346 = vmatprep.subr.mxu0 0.0
        %2347 = vmatpush2.msra.mxu0 0.0
        %2348 = vmatprep.subr.mxu0 0.0
        %2349 = vmatpush2.msra.mxu0 0.0
        %2350 = vmatprep.subr.mxu0 0.0
        %2351 = vmatpush2.msra.mxu0 0.0
        %2352 = vmatprep.subr.mxu0 0.0
        %2353 = vmatpush2.msra.mxu0 0.0
        %2354 = vmatprep.subr.mxu0 0.0
        %2355 = vmatpush2.msra.mxu0 0.0
        %2356 = vmatprep.subr.mxu0 0.0
        %2357 = vmatpush2.msra.mxu0 0.0
        %2358 = vmatprep.subr.mxu0 0.0
        %2359 = vmatpush2.msra.mxu0 0.0
        %2360 = vmatprep.mubr.f32.mxu0 0.0
        %2361 = vmatmul.mubr.f32.gmra.mxu0 %v2285
        %v2362 = vpop.f32.mrf.mxu0
        %v2363 = vadd.f32 0.0, %v2362
        %v2364 = vpop.f32.mrf.mxu0
        %2365 = vmatprep.mubr.f32.mxu0 0.0
        %2366 = vmatmul.mubr.f32.gmra.mxu0 %v2288
        %v2367 = vpop.f32.mrf.mxu0
        %v2368 = vadd.f32 0.0, %v2367
        %v2369 = vpop.f32.mrf.mxu0
        %2370 = vmatprep.mubr.f32.mxu0 0.0
        %2371 = vmatmul.mubr.f32.gmra.mxu0 %v2291
        %v2372 = vpop.f32.mrf.mxu0
        %v2373 = vadd.f32 0.0, %v2372
        %v2374 = vpop.f32.mrf.mxu0
        %2375 = vmatprep.mubr.f32.mxu0 0.0
        %2376 = vmatmul.mubr.f32.gmra.mxu0 %v2294
        %v2377 = vpop.f32.mrf.mxu0
        %v2378 = vadd.f32 0.0, %v2377
        %v2379 = vpop.f32.mrf.mxu0
        %2380 = vdwg.mxu0
        %v2381 = vmul.f32 %v2363, %v921
        %v2382 = vmul.f32 %v2368, %v922
        %v2383 = vmul.f32 %v2373, %v923
        %v2384 = vmul.f32 %v2378, %v924
        %v2385 = vadd.f32 %v2280, %v2381
        %v2386 = vadd.f32 %v2281, %v2382
        %v2387 = vadd.f32 %v2282, %v2383
        %v2388 = vadd.f32 %v2283, %v2384
        %v2389 = vpack.c.bf16 %v2276, %v2276
        %v2390 = vpack.c.bf16 %v2277, %v2277
        %v2391 = vpack.c.bf16 %v2278, %v2278
        %v2392 = vpack.c.bf16 %v2279, %v2279
        %v2393 = vpack.c.bf16 %v2385, %v2385
        %v2394 = vpack.c.bf16 %v2386, %v2386
        %v2395 = vpack.c.bf16 %v2387, %v2387
        %v2396 = vpack.c.bf16 %v2388, %v2388
        %v2397 = vpack.c.bf16 %v2069, %v2069
        %v2398 = vpack.c.bf16 %v2072, %v2072
        %v2399 = vpack.c.bf16 %v2077, %v2077
        %v2400 = vpack.c.bf16 %v2080, %v2080
        %v2402 = vsel %vm1137, %v2389, 0
        %v2405 = vsel %vm1137, %v2393, 0
        %2407 = vmatprep.subr.bf16.mxu0 0
        %2408 = vmatpush1.bf16.xpose.msra.mxu0 0
        %2409 = vmatprep.subr.bf16.mxu0 0
        %2410 = vmatpush1.bf16.xpose.msra.mxu0 0
        %2411 = vmatprep.subr.bf16.mxu0 0
        %2412 = vmatpush1.bf16.xpose.msra.mxu0 0
        %2413 = vmatprep.subr.bf16.mxu0 0
        %2414 = vmatpush1.bf16.xpose.msra.mxu0 0
        %2415 = vmatprep.subr.bf16.mxu0 0
        %2416 = vmatpush1.bf16.xpose.msra.mxu0 0
        %2417 = vmatprep.subr.bf16.mxu0 0
        %2418 = vmatpush1.bf16.xpose.msra.mxu0 0
        %2419 = vmatprep.subr.bf16.mxu0 0
        %2420 = vmatpush1.bf16.xpose.msra.mxu0 0
        %2421 = vmatprep.subr.bf16.mxu0 0
        %2422 = vmatpush1.bf16.xpose.msra.mxu0 %v2405
        %2423 = vmatprep.subr.bf16.mxu0 0
        %2424 = vmatpush2.bf16.xpose.msra.mxu0 0
        %2425 = vmatprep.subr.bf16.mxu0 0
        %2426 = vmatpush2.bf16.xpose.msra.mxu0 0
        %2427 = vmatprep.subr.bf16.mxu0 0
        %2428 = vmatpush2.bf16.xpose.msra.mxu0 0
        %2429 = vmatprep.subr.bf16.mxu0 0
        %2430 = vmatpush2.bf16.xpose.msra.mxu0 0
        %2431 = vmatprep.subr.bf16.mxu0 0
        %2432 = vmatpush2.bf16.xpose.msra.mxu0 0
        %2433 = vmatprep.subr.bf16.mxu0 0
        %2434 = vmatpush2.bf16.xpose.msra.mxu0 0
        %2435 = vmatprep.subr.bf16.mxu0 0
        %2436 = vmatpush2.bf16.xpose.msra.mxu0 0
        %2437 = vmatprep.subr.bf16.mxu0 0
        %2438 = vmatpush2.bf16.xpose.msra.mxu0 0
        %2439 = vmatprep.mubr.bf16.mxu0 0
        %2440 = vmatmul.mubr.bf16.gmra.mxu0 %v2402
        %v2441 = vpop.f32.mrf.mxu0
        %v2442 = vadd.f32 0.0, %v2441
        %v2443 = vpop.f32.mrf.mxu0
        %v2444 = vpop.f32.mrf.mxu0
        %v2445 = vpop.f32.mrf.mxu0
        %2446 = vdwg.mxu0
        %v2448 = vsel %vm1137, %v2390, 0
        %v2451 = vsel %vm1137, %v2394, 0
        %2453 = vmatprep.subr.bf16.mxu0 0
        %2454 = vmatpush1.bf16.xpose.msra.mxu0 0
        %2455 = vmatprep.subr.bf16.mxu0 0
        %2456 = vmatpush1.bf16.xpose.msra.mxu0 0
        %2457 = vmatprep.subr.bf16.mxu0 0
        %2458 = vmatpush1.bf16.xpose.msra.mxu0 0
        %2459 = vmatprep.subr.bf16.mxu0 0
        %2460 = vmatpush1.bf16.xpose.msra.mxu0 0
        %2461 = vmatprep.subr.bf16.mxu0 0
        %2462 = vmatpush1.bf16.xpose.msra.mxu0 0
        %2463 = vmatprep.subr.bf16.mxu0 0
        %2464 = vmatpush1.bf16.xpose.msra.mxu0 0
        %2465 = vmatprep.subr.bf16.mxu0 0
        %2466 = vmatpush1.bf16.xpose.msra.mxu0 0
        %2467 = vmatprep.subr.bf16.mxu0 0
        %2468 = vmatpush1.bf16.xpose.msra.mxu0 %v2451
        %2469 = vmatprep.subr.bf16.mxu0 0
        %2470 = vmatpush2.bf16.xpose.msra.mxu0 0
        %2471 = vmatprep.subr.bf16.mxu0 0
        %2472 = vmatpush2.bf16.xpose.msra.mxu0 0
        %2473 = vmatprep.subr.bf16.mxu0 0
        %2474 = vmatpush2.bf16.xpose.msra.mxu0 0
        %2475 = vmatprep.subr.bf16.mxu0 0
        %2476 = vmatpush2.bf16.xpose.msra.mxu0 0
        %2477 = vmatprep.subr.bf16.mxu0 0
        %2478 = vmatpush2.bf16.xpose.msra.mxu0 0
        %2479 = vmatprep.subr.bf16.mxu0 0
        %2480 = vmatpush2.bf16.xpose.msra.mxu0 0
        %2481 = vmatprep.subr.bf16.mxu0 0
        %2482 = vmatpush2.bf16.xpose.msra.mxu0 0
        %2483 = vmatprep.subr.bf16.mxu0 0
        %2484 = vmatpush2.bf16.xpose.msra.mxu0 0
        %2485 = vmatprep.mubr.bf16.mxu0 0
        %2486 = vmatmul.mubr.bf16.gmra.mxu0 %v2448
        %v2487 = vpop.f32.mrf.mxu0
        %v2488 = vadd.f32 0.0, %v2487
        %v2489 = vpop.f32.mrf.mxu0
        %v2490 = vpop.f32.mrf.mxu0
        %v2491 = vpop.f32.mrf.mxu0
        %2492 = vdwg.mxu0
        %v2494 = vsel %vm1137, %v2391, 0
        %v2497 = vsel %vm1137, %v2395, 0
        %2499 = vmatprep.subr.bf16.mxu0 0
        %2500 = vmatpush1.bf16.xpose.msra.mxu0 0
        %2501 = vmatprep.subr.bf16.mxu0 0
        %2502 = vmatpush1.bf16.xpose.msra.mxu0 0
        %2503 = vmatprep.subr.bf16.mxu0 0
        %2504 = vmatpush1.bf16.xpose.msra.mxu0 0
        %2505 = vmatprep.subr.bf16.mxu0 0
        %2506 = vmatpush1.bf16.xpose.msra.mxu0 0
        %2507 = vmatprep.subr.bf16.mxu0 0
        %2508 = vmatpush1.bf16.xpose.msra.mxu0 0
        %2509 = vmatprep.subr.bf16.mxu0 0
        %2510 = vmatpush1.bf16.xpose.msra.mxu0 0
        %2511 = vmatprep.subr.bf16.mxu0 0
        %2512 = vmatpush1.bf16.xpose.msra.mxu0 0
        %2513 = vmatprep.subr.bf16.mxu0 0
        %2514 = vmatpush1.bf16.xpose.msra.mxu0 %v2497
        %2515 = vmatprep.subr.bf16.mxu0 0
        %2516 = vmatpush2.bf16.xpose.msra.mxu0 0
        %2517 = vmatprep.subr.bf16.mxu0 0
        %2518 = vmatpush2.bf16.xpose.msra.mxu0 0
        %2519 = vmatprep.subr.bf16.mxu0 0
        %2520 = vmatpush2.bf16.xpose.msra.mxu0 0
        %2521 = vmatprep.subr.bf16.mxu0 0
        %2522 = vmatpush2.bf16.xpose.msra.mxu0 0
        %2523 = vmatprep.subr.bf16.mxu0 0
        %2524 = vmatpush2.bf16.xpose.msra.mxu0 0
        %2525 = vmatprep.subr.bf16.mxu0 0
        %2526 = vmatpush2.bf16.xpose.msra.mxu0 0
        %2527 = vmatprep.subr.bf16.mxu0 0
        %2528 = vmatpush2.bf16.xpose.msra.mxu0 0
        %2529 = vmatprep.subr.bf16.mxu0 0
        %2530 = vmatpush2.bf16.xpose.msra.mxu0 0
        %2531 = vmatprep.mubr.bf16.mxu0 0
        %2532 = vmatmul.mubr.bf16.gmra.mxu0 %v2494
        %v2533 = vpop.f32.mrf.mxu0
        %v2534 = vadd.f32 0.0, %v2533
        %v2535 = vpop.f32.mrf.mxu0
        %v2536 = vpop.f32.mrf.mxu0
        %v2537 = vpop.f32.mrf.mxu0
        %2538 = vdwg.mxu0
        %v2540 = vsel %vm1137, %v2392, 0
        %v2543 = vsel %vm1137, %v2396, 0
        %2545 = vmatprep.subr.bf16.mxu0 0
        %2546 = vmatpush1.bf16.xpose.msra.mxu0 0
        %2547 = vmatprep.subr.bf16.mxu0 0
        %2548 = vmatpush1.bf16.xpose.msra.mxu0 0
        %2549 = vmatprep.subr.bf16.mxu0 0
        %2550 = vmatpush1.bf16.xpose.msra.mxu0 0
        %2551 = vmatprep.subr.bf16.mxu0 0
        %2552 = vmatpush1.bf16.xpose.msra.mxu0 0
        %2553 = vmatprep.subr.bf16.mxu0 0
        %2554 = vmatpush1.bf16.xpose.msra.mxu0 0
        %2555 = vmatprep.subr.bf16.mxu0 0
        %2556 = vmatpush1.bf16.xpose.msra.mxu0 0
        %2557 = vmatprep.subr.bf16.mxu0 0
        %2558 = vmatpush1.bf16.xpose.msra.mxu0 0
        %2559 = vmatprep.subr.bf16.mxu0 0
        %2560 = vmatpush1.bf16.xpose.msra.mxu0 %v2543
        %2561 = vmatprep.subr.bf16.mxu0 0
        %2562 = vmatpush2.bf16.xpose.msra.mxu0 0
        %2563 = vmatprep.subr.bf16.mxu0 0
        %2564 = vmatpush2.bf16.xpose.msra.mxu0 0
        %2565 = vmatprep.subr.bf16.mxu0 0
        %2566 = vmatpush2.bf16.xpose.msra.mxu0 0
        %2567 = vmatprep.subr.bf16.mxu0 0
        %2568 = vmatpush2.bf16.xpose.msra.mxu0 0
        %2569 = vmatprep.subr.bf16.mxu0 0
        %2570 = vmatpush2.bf16.xpose.msra.mxu0 0
        %2571 = vmatprep.subr.bf16.mxu0 0
        %2572 = vmatpush2.bf16.xpose.msra.mxu0 0
        %2573 = vmatprep.subr.bf16.mxu0 0
        %2574 = vmatpush2.bf16.xpose.msra.mxu0 0
        %2575 = vmatprep.subr.bf16.mxu0 0
        %2576 = vmatpush2.bf16.xpose.msra.mxu0 0
        %2577 = vmatprep.mubr.bf16.mxu0 0
        %2578 = vmatmul.mubr.bf16.gmra.mxu0 %v2540
        %v2579 = vpop.f32.mrf.mxu0
        %v2580 = vadd.f32 0.0, %v2579
        %v2581 = vpop.f32.mrf.mxu0
        %v2582 = vpop.f32.mrf.mxu0
        %v2583 = vpop.f32.mrf.mxu0
        %2584 = vdwg.mxu0
        %v2585 = vmul.f32 %v2442, 0.25
        %v2586 = vmul.f32 %v2488, 0.25
        %v2587 = vmul.f32 %v2534, 0.25
        %v2588 = vmul.f32 %v2580, 0.25
        %v2589 = vsel %vm1642, %v2585, -1e+30
        %v2590 = vsel %vm1642, %v2586, -1e+30
        %v2591 = vsel %vm1642, %v2587, -1e+30
        %v2592 = vsel %vm1642, %v2588, -1e+30
        %v2593 = vsel %vm1647, %v2589, -inf
        %2594 = vmax.xlane.f32.xlu0 %v2593
        %v2595 = vpop.xlane.xlu0 %2594
        %v2596 = vsel %vm1647, %v2590, -inf
        %2597 = vmax.xlane.f32.xlu0 %v2596
        %v2598 = vpop.xlane.xlu0 %2597
        %v2599 = vsel %vm1647, %v2591, -inf
        %2600 = vmax.xlane.f32.xlu0 %v2599
        %v2601 = vpop.xlane.xlu0 %2600
        %v2602 = vsel %vm1647, %v2592, -inf
        %2603 = vmax.xlane.f32.xlu0 %v2602
        %v2604 = vpop.xlane.xlu0 %2603
        %v2605 = vsub.f32 %v2589, %v2595
        %v2606 = vsub.f32 %v2590, %v2598
        %v2607 = vsub.f32 %v2591, %v2601
        %v2608 = vsub.f32 %v2592, %v2604
        %v2609 = vmul.f32 %v2605, 1.442695
        %v2610 = vpow.pop %v2609
        %v2611 = vmul.f32 %v2606, 1.442695
        %v2612 = vpow.pop %v2611
        %v2613 = vmul.f32 %v2607, 1.442695
        %v2614 = vpow.pop %v2613
        %v2615 = vmul.f32 %v2608, 1.442695
        %v2616 = vpow.pop %v2615
        %v2617 = vsel %vm1647, %v2610, 0.0
        %2618 = vadd.xlane.f32.xlu0 %v2617
        %v2619 = vpop.xlane.xlu0 %2618
        %v2620 = vsel %vm1647, %v2612, 0.0
        %2621 = vadd.xlane.f32.xlu0 %v2620
        %v2622 = vpop.xlane.xlu0 %2621
        %v2623 = vsel %vm1647, %v2614, 0.0
        %2624 = vadd.xlane.f32.xlu0 %v2623
        %v2625 = vpop.xlane.xlu0 %2624
        %v2626 = vsel %vm1647, %v2616, 0.0
        %2627 = vadd.xlane.f32.xlu0 %v2626
        %v2628 = vpop.xlane.xlu0 %2627
        %v2629 = vrcp.pop %v2619
        %v2630 = vrcp.pop %v2622
        %v2631 = vrcp.pop %v2625
        %v2632 = vrcp.pop %v2628
        %v2633 = vmul.f32 %v2610, %v2629
        %v2634 = vmul.f32 %v2612, %v2630
        %v2635 = vmul.f32 %v2614, %v2631
        %v2636 = vmul.f32 %v2616, %v2632
        %v2637 = vpack.c.bf16 %v2633, %v2633
        %v2638 = vpack.c.bf16 %v2634, %v2634
        %v2639 = vpack.c.bf16 %v2635, %v2635
        %v2640 = vpack.c.bf16 %v2636, %v2636
        %v2642 = vsel %vm1647, %v2637, 0
        %v2645 = vsel %vm1699, %v2397, 0
        %2647 = vmatprep.subr.bf16.mxu0 0
        %2648 = vmatpush1.bf16.msra.mxu0 0
        %2649 = vmatprep.subr.bf16.mxu0 0
        %2650 = vmatpush1.bf16.msra.mxu0 0
        %2651 = vmatprep.subr.bf16.mxu0 0
        %2652 = vmatpush1.bf16.msra.mxu0 0
        %2653 = vmatprep.subr.bf16.mxu0 0
        %2654 = vmatpush1.bf16.msra.mxu0 0
        %2655 = vmatprep.subr.bf16.mxu0 0
        %2656 = vmatpush1.bf16.msra.mxu0 0
        %2657 = vmatprep.subr.bf16.mxu0 0
        %2658 = vmatpush1.bf16.msra.mxu0 0
        %2659 = vmatprep.subr.bf16.mxu0 0
        %2660 = vmatpush1.bf16.msra.mxu0 0
        %2661 = vmatprep.subr.bf16.mxu0 0
        %2662 = vmatpush1.bf16.msra.mxu0 %v2645
        %2663 = vmatprep.subr.bf16.mxu0 0
        %2664 = vmatpush2.bf16.msra.mxu0 0
        %2665 = vmatprep.subr.bf16.mxu0 0
        %2666 = vmatpush2.bf16.msra.mxu0 0
        %2667 = vmatprep.subr.bf16.mxu0 0
        %2668 = vmatpush2.bf16.msra.mxu0 0
        %2669 = vmatprep.subr.bf16.mxu0 0
        %2670 = vmatpush2.bf16.msra.mxu0 0
        %2671 = vmatprep.subr.bf16.mxu0 0
        %2672 = vmatpush2.bf16.msra.mxu0 0
        %2673 = vmatprep.subr.bf16.mxu0 0
        %2674 = vmatpush2.bf16.msra.mxu0 0
        %2675 = vmatprep.subr.bf16.mxu0 0
        %2676 = vmatpush2.bf16.msra.mxu0 0
        %2677 = vmatprep.subr.bf16.mxu0 0
        %2678 = vmatpush2.bf16.msra.mxu0 0
        %2679 = vmatprep.mubr.bf16.mxu0 0
        %2680 = vmatmul.mubr.bf16.gmra.mxu0 %v2642
        %v2681 = vpop.f32.mrf.mxu0
        %v2682 = vadd.f32 0.0, %v2681
        %v2683 = vpop.f32.mrf.mxu0
        %v2684 = vpop.f32.mrf.mxu0
        %v2685 = vpop.f32.mrf.mxu0
        %2686 = vdwg.mxu0
        %v2688 = vsel %vm1647, %v2638, 0
        %v2691 = vsel %vm1699, %v2398, 0
        %2693 = vmatprep.subr.bf16.mxu0 0
        %2694 = vmatpush1.bf16.msra.mxu0 0
        %2695 = vmatprep.subr.bf16.mxu0 0
        %2696 = vmatpush1.bf16.msra.mxu0 0
        %2697 = vmatprep.subr.bf16.mxu0 0
        %2698 = vmatpush1.bf16.msra.mxu0 0
        %2699 = vmatprep.subr.bf16.mxu0 0
        %2700 = vmatpush1.bf16.msra.mxu0 0
        %2701 = vmatprep.subr.bf16.mxu0 0
        %2702 = vmatpush1.bf16.msra.mxu0 0
        %2703 = vmatprep.subr.bf16.mxu0 0
        %2704 = vmatpush1.bf16.msra.mxu0 0
        %2705 = vmatprep.subr.bf16.mxu0 0
        %2706 = vmatpush1.bf16.msra.mxu0 0
        %2707 = vmatprep.subr.bf16.mxu0 0
        %2708 = vmatpush1.bf16.msra.mxu0 %v2691
        %2709 = vmatprep.subr.bf16.mxu0 0
        %2710 = vmatpush2.bf16.msra.mxu0 0
        %2711 = vmatprep.subr.bf16.mxu0 0
        %2712 = vmatpush2.bf16.msra.mxu0 0
        %2713 = vmatprep.subr.bf16.mxu0 0
        %2714 = vmatpush2.bf16.msra.mxu0 0
        %2715 = vmatprep.subr.bf16.mxu0 0
        %2716 = vmatpush2.bf16.msra.mxu0 0
        %2717 = vmatprep.subr.bf16.mxu0 0
        %2718 = vmatpush2.bf16.msra.mxu0 0
        %2719 = vmatprep.subr.bf16.mxu0 0
        %2720 = vmatpush2.bf16.msra.mxu0 0
        %2721 = vmatprep.subr.bf16.mxu0 0
        %2722 = vmatpush2.bf16.msra.mxu0 0
        %2723 = vmatprep.subr.bf16.mxu0 0
        %2724 = vmatpush2.bf16.msra.mxu0 0
        %2725 = vmatprep.mubr.bf16.mxu0 0
        %2726 = vmatmul.mubr.bf16.gmra.mxu0 %v2688
        %v2727 = vpop.f32.mrf.mxu0
        %v2728 = vadd.f32 0.0, %v2727
        %v2729 = vpop.f32.mrf.mxu0
        %v2730 = vpop.f32.mrf.mxu0
        %v2731 = vpop.f32.mrf.mxu0
        %2732 = vdwg.mxu0
        %v2734 = vsel %vm1647, %v2639, 0
        %v2737 = vsel %vm1699, %v2399, 0
        %2739 = vmatprep.subr.bf16.mxu0 0
        %2740 = vmatpush1.bf16.msra.mxu0 0
        %2741 = vmatprep.subr.bf16.mxu0 0
        %2742 = vmatpush1.bf16.msra.mxu0 0
        %2743 = vmatprep.subr.bf16.mxu0 0
        %2744 = vmatpush1.bf16.msra.mxu0 0
        %2745 = vmatprep.subr.bf16.mxu0 0
        %2746 = vmatpush1.bf16.msra.mxu0 0
        %2747 = vmatprep.subr.bf16.mxu0 0
        %2748 = vmatpush1.bf16.msra.mxu0 0
        %2749 = vmatprep.subr.bf16.mxu0 0
        %2750 = vmatpush1.bf16.msra.mxu0 0
        %2751 = vmatprep.subr.bf16.mxu0 0
        %2752 = vmatpush1.bf16.msra.mxu0 0
        %2753 = vmatprep.subr.bf16.mxu0 0
        %2754 = vmatpush1.bf16.msra.mxu0 %v2737
        %2755 = vmatprep.subr.bf16.mxu0 0
        %2756 = vmatpush2.bf16.msra.mxu0 0
        %2757 = vmatprep.subr.bf16.mxu0 0
        %2758 = vmatpush2.bf16.msra.mxu0 0
        %2759 = vmatprep.subr.bf16.mxu0 0
        %2760 = vmatpush2.bf16.msra.mxu0 0
        %2761 = vmatprep.subr.bf16.mxu0 0
        %2762 = vmatpush2.bf16.msra.mxu0 0
        %2763 = vmatprep.subr.bf16.mxu0 0
        %2764 = vmatpush2.bf16.msra.mxu0 0
        %2765 = vmatprep.subr.bf16.mxu0 0
        %2766 = vmatpush2.bf16.msra.mxu0 0
        %2767 = vmatprep.subr.bf16.mxu0 0
        %2768 = vmatpush2.bf16.msra.mxu0 0
        %2769 = vmatprep.subr.bf16.mxu0 0
        %2770 = vmatpush2.bf16.msra.mxu0 0
        %2771 = vmatprep.mubr.bf16.mxu0 0
        %2772 = vmatmul.mubr.bf16.gmra.mxu0 %v2734
        %v2773 = vpop.f32.mrf.mxu0
        %v2774 = vadd.f32 0.0, %v2773
        %v2775 = vpop.f32.mrf.mxu0
        %v2776 = vpop.f32.mrf.mxu0
        %v2777 = vpop.f32.mrf.mxu0
        %2778 = vdwg.mxu0
        %v2780 = vsel %vm1647, %v2640, 0
        %v2783 = vsel %vm1699, %v2400, 0
        %2785 = vmatprep.subr.bf16.mxu0 0
        %2786 = vmatpush1.bf16.msra.mxu0 0
        %2787 = vmatprep.subr.bf16.mxu0 0
        %2788 = vmatpush1.bf16.msra.mxu0 0
        %2789 = vmatprep.subr.bf16.mxu0 0
        %2790 = vmatpush1.bf16.msra.mxu0 0
        %2791 = vmatprep.subr.bf16.mxu0 0
        %2792 = vmatpush1.bf16.msra.mxu0 0
        %2793 = vmatprep.subr.bf16.mxu0 0
        %2794 = vmatpush1.bf16.msra.mxu0 0
        %2795 = vmatprep.subr.bf16.mxu0 0
        %2796 = vmatpush1.bf16.msra.mxu0 0
        %2797 = vmatprep.subr.bf16.mxu0 0
        %2798 = vmatpush1.bf16.msra.mxu0 0
        %2799 = vmatprep.subr.bf16.mxu0 0
        %2800 = vmatpush1.bf16.msra.mxu0 %v2783
        %2801 = vmatprep.subr.bf16.mxu0 0
        %2802 = vmatpush2.bf16.msra.mxu0 0
        %2803 = vmatprep.subr.bf16.mxu0 0
        %2804 = vmatpush2.bf16.msra.mxu0 0
        %2805 = vmatprep.subr.bf16.mxu0 0
        %2806 = vmatpush2.bf16.msra.mxu0 0
        %2807 = vmatprep.subr.bf16.mxu0 0
        %2808 = vmatpush2.bf16.msra.mxu0 0
        %2809 = vmatprep.subr.bf16.mxu0 0
        %2810 = vmatpush2.bf16.msra.mxu0 0
        %2811 = vmatprep.subr.bf16.mxu0 0
        %2812 = vmatpush2.bf16.msra.mxu0 0
        %2813 = vmatprep.subr.bf16.mxu0 0
        %2814 = vmatpush2.bf16.msra.mxu0 0
        %2815 = vmatprep.subr.bf16.mxu0 0
        %2816 = vmatpush2.bf16.msra.mxu0 0
        %2817 = vmatprep.mubr.bf16.mxu0 0
        %2818 = vmatmul.mubr.bf16.gmra.mxu0 %v2780
        %v2819 = vpop.f32.mrf.mxu0
        %v2820 = vadd.f32 0.0, %v2819
        %v2821 = vpop.f32.mrf.mxu0
        %v2822 = vpop.f32.mrf.mxu0
        %v2823 = vpop.f32.mrf.mxu0
        %2824 = vdwg.mxu0
        %v2825 = vpack.c.bf16 %v2728, %v2682
        %v2826 = vpack.c.bf16 %v2820, %v2774
        %s2827 = scalar_lea.vmem %s772, 8
        %v2828 = vld [vmem:[%s2827] sm:$0xf]
        %v2829 = vld [vmem:[%s2827 + $0x4] sm:$0xf]
        %v2832 = vunpack.c.l.b16 %v2828
        %v2833 = vunpack.c.l.b16 %v2829
        %v2834 = vpack.c.b16 %v2833, %v2832
        %v2837 = vsel %vm1137, %v2825, 0
        %v2840 = vsel %vm1137, %v2826, 0
        %2842 = vmatprep.subr.bf16.mxu0 0
        %2843 = vmatpush1.bf16.msra.mxu0 0
        %2844 = vmatprep.subr.bf16.mxu0 0
        %2845 = vmatpush1.bf16.msra.mxu0 0
        %2846 = vmatprep.subr.bf16.mxu0 0
        %2847 = vmatpush1.bf16.msra.mxu0 0
        %2848 = vmatprep.subr.bf16.mxu0 0
        %2849 = vmatpush1.bf16.msra.mxu0 0
        %2850 = vmatprep.subr.bf16.mxu0 0
        %2851 = vmatpush1.bf16.msra.mxu0 0
        %2852 = vmatprep.subr.bf16.mxu0 0
        %2853 = vmatpush1.bf16.msra.mxu0 0
        %2854 = vmatprep.subr.bf16.mxu0 0
        %2855 = vmatpush1.bf16.msra.mxu0 0
        %2856 = vmatprep.subr.bf16.mxu0 0
        %2857 = vmatpush1.bf16.msra.mxu0 %v2834
        %2858 = vmatprep.subr.bf16.mxu0 0
        %2859 = vmatpush2.bf16.msra.mxu0 0
        %2860 = vmatprep.subr.bf16.mxu0 0
        %2861 = vmatpush2.bf16.msra.mxu0 0
        %2862 = vmatprep.subr.bf16.mxu0 0
        %2863 = vmatpush2.bf16.msra.mxu0 0
        %2864 = vmatprep.subr.bf16.mxu0 0
        %2865 = vmatpush2.bf16.msra.mxu0 0
        %2866 = vmatprep.subr.bf16.mxu0 0
        %2867 = vmatpush2.bf16.msra.mxu0 0
        %2868 = vmatprep.subr.bf16.mxu0 0
        %2869 = vmatpush2.bf16.msra.mxu0 0
        %2870 = vmatprep.subr.bf16.mxu0 0
        %2871 = vmatpush2.bf16.msra.mxu0 0
        %2872 = vmatprep.subr.bf16.mxu0 0
        %2873 = vmatpush2.bf16.msra.mxu0 0
        %2874 = vmatprep.mubr.bf16.mxu0 0
        %2875 = vmatmul.mubr.bf16.gmra.mxu0 %v2837
        %v2876 = vpop.f32.mrf.mxu0
        %v2877 = vadd.f32 0.0, %v2876
        %v2878 = vpop.f32.mrf.mxu0
        %v2879 = vpop.f32.mrf.mxu0
        %v2880 = vadd.f32 0.0, %v2879
        %v2881 = vpop.f32.mrf.mxu0
        %2882 = vmatprep.mubr.bf16.mxu0 0
        %2883 = vmatmul.mubr.bf16.gmra.mxu0 %v2840
        %v2884 = vpop.f32.mrf.mxu0
        %v2885 = vadd.f32 0.0, %v2884
        %v2886 = vpop.f32.mrf.mxu0
        %v2887 = vpop.f32.mrf.mxu0
        %v2888 = vadd.f32 0.0, %v2887
        %v2889 = vpop.f32.mrf.mxu0
        %2890 = vdwg.mxu0
        %v2893 = vunpack.c.l.b16 %v1883
        %v2894 = vunpack.c.l.b16 %v1884
        %v2895 = vpack.c.b16 %v2894, %v2893
        %v2898 = vsel %vm1137, %v1881, 0
        %v2901 = vsel %vm1137, %v1882, 0
        %2903 = vmatprep.subr.bf16.mxu0 0
        %2904 = vmatpush1.bf16.msra.mxu0 0
        %2905 = vmatprep.subr.bf16.mxu0 0
        %2906 = vmatpush1.bf16.msra.mxu0 0
        %2907 = vmatprep.subr.bf16.mxu0 0
        %2908 = vmatpush1.bf16.msra.mxu0 0
        %2909 = vmatprep.subr.bf16.mxu0 0
        %2910 = vmatpush1.bf16.msra.mxu0 0
        %2911 = vmatprep.subr.bf16.mxu0 0
        %2912 = vmatpush1.bf16.msra.mxu0 0
        %2913 = vmatprep.subr.bf16.mxu0 0
        %2914 = vmatpush1.bf16.msra.mxu0 0
        %2915 = vmatprep.subr.bf16.mxu0 0
        %2916 = vmatpush1.bf16.msra.mxu0 0
        %2917 = vmatprep.subr.bf16.mxu0 0
        %2918 = vmatpush1.bf16.msra.mxu0 %v2895
        %2919 = vmatprep.subr.bf16.mxu0 0
        %2920 = vmatpush2.bf16.msra.mxu0 0
        %2921 = vmatprep.subr.bf16.mxu0 0
        %2922 = vmatpush2.bf16.msra.mxu0 0
        %2923 = vmatprep.subr.bf16.mxu0 0
        %2924 = vmatpush2.bf16.msra.mxu0 0
        %2925 = vmatprep.subr.bf16.mxu0 0
        %2926 = vmatpush2.bf16.msra.mxu0 0
        %2927 = vmatprep.subr.bf16.mxu0 0
        %2928 = vmatpush2.bf16.msra.mxu0 0
        %2929 = vmatprep.subr.bf16.mxu0 0
        %2930 = vmatpush2.bf16.msra.mxu0 0
        %2931 = vmatprep.subr.bf16.mxu0 0
        %2932 = vmatpush2.bf16.msra.mxu0 0
        %2933 = vmatprep.subr.bf16.mxu0 0
        %2934 = vmatpush2.bf16.msra.mxu0 0
        %2935 = vmatprep.mubr.bf16.mxu0 0
        %2936 = vmatmul.mubr.bf16.gmra.mxu0 %v2898
        %v2937 = vpop.f32.mrf.mxu0
        %v2938 = vadd.f32 %v2877, %v2937
        %v2939 = vpop.f32.mrf.mxu0
        %v2940 = vpop.f32.mrf.mxu0
        %v2941 = vadd.f32 %v2880, %v2940
        %v2942 = vpop.f32.mrf.mxu0
        %2943 = vmatprep.mubr.bf16.mxu0 0
        %2944 = vmatmul.mubr.bf16.gmra.mxu0 %v2901
        %v2945 = vpop.f32.mrf.mxu0
        %v2946 = vadd.f32 %v2885, %v2945
        %v2947 = vpop.f32.mrf.mxu0
        %v2948 = vpop.f32.mrf.mxu0
        %v2949 = vadd.f32 %v2888, %v2948
        %v2950 = vpop.f32.mrf.mxu0
        %2951 = vdwg.mxu0
        %v2952 = vadd.f32 %v822, %v2938
        %v2953 = vadd.f32 %v823, %v2941
        %v2954 = vadd.f32 %v824, %v2946
        %v2955 = vadd.f32 %v825, %v2949
        %v2956 = vld [vmem:[%s783] sm:$0x1]
        %v2957 = vld [vmem:[%s786] sm:$0x1]
        %v2958 = vsel %vm828, %v2952, 0.0
        %2959 = vadd.xlane.f32.xlu0 %v2958
        %v2960 = vpop.xlane.xlu0 %2959
        %v2961 = vsel %vm828, %v2953, 0.0
        %2962 = vadd.xlane.f32.xlu0 %v2961
        %v2963 = vpop.xlane.xlu0 %2962
        %v2964 = vsel %vm828, %v2954, 0.0
        %2965 = vadd.xlane.f32.xlu0 %v2964
        %v2966 = vpop.xlane.xlu0 %2965
        %v2967 = vsel %vm828, %v2955, 0.0
        %2968 = vadd.xlane.f32.xlu0 %v2967
        %v2969 = vpop.xlane.xlu0 %2968
        %v2970 = vmul.f32 %v2960, %v841
        %v2971 = vmul.f32 %v2963, %v841
        %v2972 = vmul.f32 %v2966, %v841
        %v2973 = vmul.f32 %v2969, %v841
        %v2974 = vsub.f32 %v2952, %v2970
        %v2975 = vsub.f32 %v2953, %v2971
        %v2976 = vsub.f32 %v2954, %v2972
        %v2977 = vsub.f32 %v2955, %v2973
        %v2978 = vmul.f32 %v2974, %v2974
        %v2979 = vmul.f32 %v2975, %v2975
        %v2980 = vmul.f32 %v2976, %v2976
        %v2981 = vmul.f32 %v2977, %v2977
        %v2982 = vsel %vm828, %v2978, 0.0
        %2983 = vadd.xlane.f32.xlu0 %v2982
        %v2984 = vpop.xlane.xlu0 %2983
        %v2985 = vsel %vm828, %v2979, 0.0
        %2986 = vadd.xlane.f32.xlu0 %v2985
        %v2987 = vpop.xlane.xlu0 %2986
        %v2988 = vsel %vm828, %v2980, 0.0
        %2989 = vadd.xlane.f32.xlu0 %v2988
        %v2990 = vpop.xlane.xlu0 %2989
        %v2991 = vsel %vm828, %v2981, 0.0
        %2992 = vadd.xlane.f32.xlu0 %v2991
        %v2993 = vpop.xlane.xlu0 %2992
        %v2994 = vmul.f32 %v2984, %v841
        %v2995 = vmul.f32 %v2987, %v841
        %v2996 = vmul.f32 %v2990, %v841
        %v2997 = vmul.f32 %v2993, %v841
        %v2998 = vadd.f32 %v2994, 1e-05
        %v2999 = vadd.f32 %v2995, 1e-05
        %v3000 = vadd.f32 %v2996, 1e-05
        %v3001 = vadd.f32 %v2997, 1e-05
        %v3002 = vrsqrt.pop %v2998
        %v3003 = vrsqrt.pop %v2999
        %v3004 = vrsqrt.pop %v3000
        %v3005 = vrsqrt.pop %v3001
        %v3006 = vmul.f32 %v2974, %v3002
        %v3007 = vmul.f32 %v2975, %v3003
        %v3008 = vmul.f32 %v2976, %v3004
        %v3009 = vmul.f32 %v2977, %v3005
        %v3011 = vlaneseq
        %v3012 = vshrl.u32 %v3011, 7
        %v3013 = vsub.s32 0, %v3012
        %v3014 = vrot.slane %v2956, %v3013
        %v3016 = vmul.f32 %v3006, %v3014
        %v3017 = vmul.f32 %v3007, %v3014
        %v3018 = vmul.f32 %v3008, %v3014
        %v3019 = vmul.f32 %v3009, %v3014
        %v3021 = vlaneseq
        %v3022 = vshrl.u32 %v3021, 7
        %v3023 = vsub.s32 0, %v3022
        %v3024 = vrot.slane %v2957, %v3023
        %v3026 = vadd.f32 %v3016, %v3024
        %v3027 = vadd.f32 %v3017, %v3024
        %v3028 = vadd.f32 %v3018, %v3024
        %v3029 = vadd.f32 %v3019, %v3024
        %v3030 = vpack.c.bf16 %v3027, %v3026
        %v3031 = vpack.c.bf16 %v3029, %v3028
        %v3032 = vld [vmem:[%s791] sm:$0xf]
        %v3033 = vld [vmem:[%s791 + $0x4] sm:$0xf]
        %v3034 = vld [vmem:[%s791 + $0x8] sm:$0xf]
        %v3035 = vld [vmem:[%s791 + $0xc] sm:$0xf]
        %v3040 = vunpack.c.l.b16 %v3032
        %v3041 = vunpack.c.l.b16 %v3033
        %v3042 = vunpack.c.l.b16 %v3034
        %v3043 = vunpack.c.l.b16 %v3035
        %v3044 = vpack.c.b16 %v3041, %v3040
        %v3045 = vpack.c.b16 %v3043, %v3042
        %v3049 = vsel %vm828, %v3030, 0
        %v3052 = vsel %vm828, %v3031, 0
        %3054 = vmatprep.subr.bf16.mxu0 0
        %3055 = vmatpush1.bf16.msra.mxu0 0
        %3056 = vmatprep.subr.bf16.mxu0 0
        %3057 = vmatpush1.bf16.msra.mxu0 0
        %3058 = vmatprep.subr.bf16.mxu0 0
        %3059 = vmatpush1.bf16.msra.mxu0 0
        %3060 = vmatprep.subr.bf16.mxu0 0
        %3061 = vmatpush1.bf16.msra.mxu0 0
        %3062 = vmatprep.subr.bf16.mxu0 0
        %3063 = vmatpush1.bf16.msra.mxu0 0
        %3064 = vmatprep.subr.bf16.mxu0 0
        %3065 = vmatpush1.bf16.msra.mxu0 0
        %3066 = vmatprep.subr.bf16.mxu0 0
        %3067 = vmatpush1.bf16.msra.mxu0 %v3045
        %3068 = vmatprep.subr.bf16.mxu0 0
        %3069 = vmatpush1.bf16.msra.mxu0 %v3044
        %3070 = vmatprep.subr.bf16.mxu0 0
        %3071 = vmatpush2.bf16.msra.mxu0 0
        %3072 = vmatprep.subr.bf16.mxu0 0
        %3073 = vmatpush2.bf16.msra.mxu0 0
        %3074 = vmatprep.subr.bf16.mxu0 0
        %3075 = vmatpush2.bf16.msra.mxu0 0
        %3076 = vmatprep.subr.bf16.mxu0 0
        %3077 = vmatpush2.bf16.msra.mxu0 0
        %3078 = vmatprep.subr.bf16.mxu0 0
        %3079 = vmatpush2.bf16.msra.mxu0 0
        %3080 = vmatprep.subr.bf16.mxu0 0
        %3081 = vmatpush2.bf16.msra.mxu0 0
        %3082 = vmatprep.subr.bf16.mxu0 0
        %3083 = vmatpush2.bf16.msra.mxu0 0
        %3084 = vmatprep.subr.bf16.mxu0 0
        %3085 = vmatpush2.bf16.msra.mxu0 0
        %3086 = vmatprep.mubr.bf16.mxu0 0
        %3087 = vmatmul.mubr.bf16.gmra.mxu0 %v3049
        %v3088 = vpop.f32.mrf.mxu0
        %v3089 = vadd.f32 0.0, %v3088
        %v3090 = vpop.f32.mrf.mxu0
        %v3091 = vpop.f32.mrf.mxu0
        %v3092 = vadd.f32 0.0, %v3091
        %v3093 = vpop.f32.mrf.mxu0
        %3094 = vmatprep.mubr.bf16.mxu0 0
        %3095 = vmatmul.mubr.bf16.gmra.mxu0 %v3052
        %v3096 = vpop.f32.mrf.mxu0
        %v3097 = vadd.f32 0.0, %v3096
        %v3098 = vpop.f32.mrf.mxu0
        %v3099 = vpop.f32.mrf.mxu0
        %v3100 = vadd.f32 0.0, %v3099
        %v3101 = vpop.f32.mrf.mxu0
        %3102 = vdwg.mxu0
        %v3103 = vld [vmem:[%s796] sm:$0xf]
        %v3104 = vld [vmem:[%s796 + $0x4] sm:$0xf]
        %v3105 = vld [vmem:[%s796 + $0x8] sm:$0xf]
        %v3106 = vld [vmem:[%s796 + $0xc] sm:$0xf]
        %v3111 = vunpack.c.l.b16 %v3103
        %v3112 = vunpack.c.l.b16 %v3104
        %v3113 = vunpack.c.l.b16 %v3105
        %v3114 = vunpack.c.l.b16 %v3106
        %v3115 = vpack.c.b16 %v3112, %v3111
        %v3116 = vpack.c.b16 %v3114, %v3113
        %3119 = vmatprep.subr.bf16.mxu0 0
        %3120 = vmatpush1.bf16.msra.mxu0 0
        %3121 = vmatprep.subr.bf16.mxu0 0
        %3122 = vmatpush1.bf16.msra.mxu0 0
        %3123 = vmatprep.subr.bf16.mxu0 0
        %3124 = vmatpush1.bf16.msra.mxu0 0
        %3125 = vmatprep.subr.bf16.mxu0 0
        %3126 = vmatpush1.bf16.msra.mxu0 0
        %3127 = vmatprep.subr.bf16.mxu0 0
        %3128 = vmatpush1.bf16.msra.mxu0 0
        %3129 = vmatprep.subr.bf16.mxu0 0
        %3130 = vmatpush1.bf16.msra.mxu0 0
        %3131 = vmatprep.subr.bf16.mxu0 0
        %3132 = vmatpush1.bf16.msra.mxu0 %v3116
        %3133 = vmatprep.subr.bf16.mxu0 0
        %3134 = vmatpush1.bf16.msra.mxu0 %v3115
        %3135 = vmatprep.subr.bf16.mxu0 0
        %3136 = vmatpush2.bf16.msra.mxu0 0
        %3137 = vmatprep.subr.bf16.mxu0 0
        %3138 = vmatpush2.bf16.msra.mxu0 0
        %3139 = vmatprep.subr.bf16.mxu0 0
        %3140 = vmatpush2.bf16.msra.mxu0 0
        %3141 = vmatprep.subr.bf16.mxu0 0
        %3142 = vmatpush2.bf16.msra.mxu0 0
        %3143 = vmatprep.subr.bf16.mxu0 0
        %3144 = vmatpush2.bf16.msra.mxu0 0
        %3145 = vmatprep.subr.bf16.mxu0 0
        %3146 = vmatpush2.bf16.msra.mxu0 0
        %3147 = vmatprep.subr.bf16.mxu0 0
        %3148 = vmatpush2.bf16.msra.mxu0 0
        %3149 = vmatprep.subr.bf16.mxu0 0
        %3150 = vmatpush2.bf16.msra.mxu0 0
        %3151 = vmatprep.mubr.bf16.mxu0 0
        %3152 = vmatmul.mubr.bf16.gmra.mxu0 %v3049
        %v3153 = vpop.f32.mrf.mxu0
        %v3154 = vadd.f32 0.0, %v3153
        %v3155 = vpop.f32.mrf.mxu0
        %v3156 = vpop.f32.mrf.mxu0
        %v3157 = vadd.f32 0.0, %v3156
        %v3158 = vpop.f32.mrf.mxu0
        %3159 = vmatprep.mubr.bf16.mxu0 0
        %3160 = vmatmul.mubr.bf16.gmra.mxu0 %v3052
        %v3161 = vpop.f32.mrf.mxu0
        %v3162 = vadd.f32 0.0, %v3161
        %v3163 = vpop.f32.mrf.mxu0
        %v3164 = vpop.f32.mrf.mxu0
        %v3165 = vadd.f32 0.0, %v3164
        %v3166 = vpop.f32.mrf.mxu0
        %3167 = vdwg.mxu0
        %v3168 = vxor.u32 %v3154, 2147483648
        %v3169 = vxor.u32 %v3157, 2147483648
        %v3170 = vxor.u32 %v3162, 2147483648
        %v3171 = vxor.u32 %v3165, 2147483648
        %v3172 = vmul.f32 %v3168, 1.442695
        %v3173 = vpow.pop %v3172
        %v3174 = vmul.f32 %v3169, 1.442695
        %v3175 = vpow.pop %v3174
        %v3176 = vmul.f32 %v3170, 1.442695
        %v3177 = vpow.pop %v3176
        %v3178 = vmul.f32 %v3171, 1.442695
        %v3179 = vpow.pop %v3178
        %v3180 = vadd.f32 %v3173, 1.0
        %v3181 = vadd.f32 %v3175, 1.0
        %v3182 = vadd.f32 %v3177, 1.0
        %v3183 = vadd.f32 %v3179, 1.0
        %v3184 = vrcp.pop %v3180
        %v3185 = vmul.f32 1.0, %v3184
        %v3186 = vrcp.pop %v3181
        %v3187 = vmul.f32 1.0, %v3186
        %v3188 = vrcp.pop %v3182
        %v3189 = vmul.f32 1.0, %v3188
        %v3190 = vrcp.pop %v3183
        %v3191 = vmul.f32 1.0, %v3190
        %v3192 = vmul.f32 %v3154, %v3185
        %v3193 = vmul.f32 %v3157, %v3187
        %v3194 = vmul.f32 %v3162, %v3189
        %v3195 = vmul.f32 %v3165, %v3191
        %v3196 = vmul.f32 %v3192, %v3089
        %v3197 = vmul.f32 %v3193, %v3092
        %v3198 = vmul.f32 %v3194, %v3097
        %v3199 = vmul.f32 %v3195, %v3100
        %v3200 = vpack.c.bf16 %v3197, %v3196
        %v3201 = vpack.c.bf16 %v3199, %v3198
        %v3202 = vld [vmem:[%s801] sm:$0xf]
        %v3203 = vld [vmem:[%s801 + $0x4] sm:$0xf]
        %v3204 = vld [vmem:[%s801 + $0x8] sm:$0xf]
        %v3205 = vld [vmem:[%s801 + $0xc] sm:$0xf]
        %v3206 = vld [vmem:[%s801 + $0x10] sm:$0xf]
        %v3207 = vld [vmem:[%s801 + $0x14] sm:$0xf]
        %v3208 = vld [vmem:[%s801 + $0x18] sm:$0xf]
        %v3209 = vld [vmem:[%s801 + $0x1c] sm:$0xf]
        %v3218 = vunpack.c.l.b16 %v3202
        %v3219 = vunpack.c.l.b16 %v3203
        %v3220 = vunpack.c.l.b16 %v3204
        %v3221 = vunpack.c.l.b16 %v3205
        %v3222 = vunpack.c.l.b16 %v3206
        %v3223 = vunpack.c.l.b16 %v3207
        %v3224 = vunpack.c.l.b16 %v3208
        %v3225 = vunpack.c.l.b16 %v3209
        %v3226 = vpack.c.b16 %v3219, %v3218
        %v3227 = vpack.c.b16 %v3221, %v3220
        %v3228 = vpack.c.b16 %v3223, %v3222
        %v3229 = vpack.c.b16 %v3225, %v3224
        %vm3234 = vcmask 523264
        %v3236 = vsel %vm3234, %v3200, 0
        %v3239 = vsel %vm3234, %v3201, 0
        %3241 = vmatprep.subr.bf16.mxu0 0
        %3242 = vmatpush1.bf16.msra.mxu0 0
        %3243 = vmatprep.subr.bf16.mxu0 0
        %3244 = vmatpush1.bf16.msra.mxu0 0
        %3245 = vmatprep.subr.bf16.mxu0 0
        %3246 = vmatpush1.bf16.msra.mxu0 0
        %3247 = vmatprep.subr.bf16.mxu0 0
        %3248 = vmatpush1.bf16.msra.mxu0 0
        %3249 = vmatprep.subr.bf16.mxu0 0
        %3250 = vmatpush1.bf16.msra.mxu0 %v3229
        %3251 = vmatprep.subr.bf16.mxu0 0
        %3252 = vmatpush1.bf16.msra.mxu0 %v3228
        %3253 = vmatprep.subr.bf16.mxu0 0
        %3254 = vmatpush1.bf16.msra.mxu0 %v3227
        %3255 = vmatprep.subr.bf16.mxu0 0
        %3256 = vmatpush1.bf16.msra.mxu0 %v3226
        %3257 = vmatprep.subr.bf16.mxu0 0
        %3258 = vmatpush2.bf16.msra.mxu0 0
        %3259 = vmatprep.subr.bf16.mxu0 0
        %3260 = vmatpush2.bf16.msra.mxu0 0
        %3261 = vmatprep.subr.bf16.mxu0 0
        %3262 = vmatpush2.bf16.msra.mxu0 0
        %3263 = vmatprep.subr.bf16.mxu0 0
        %3264 = vmatpush2.bf16.msra.mxu0 0
        %3265 = vmatprep.subr.bf16.mxu0 0
        %3266 = vmatpush2.bf16.msra.mxu0 0
        %3267 = vmatprep.subr.bf16.mxu0 0
        %3268 = vmatpush2.bf16.msra.mxu0 0
        %3269 = vmatprep.subr.bf16.mxu0 0
        %3270 = vmatpush2.bf16.msra.mxu0 0
        %3271 = vmatprep.subr.bf16.mxu0 0
        %3272 = vmatpush2.bf16.msra.mxu0 0
        %3273 = vmatprep.mubr.bf16.mxu0 0
        %3274 = vmatmul.mubr.bf16.gmra.mxu0 %v3236
        %v3275 = vpop.f32.mrf.mxu0
        %v3276 = vadd.f32 0.0, %v3275
        %v3277 = vpop.f32.mrf.mxu0
        %v3278 = vpop.f32.mrf.mxu0
        %v3279 = vadd.f32 0.0, %v3278
        %v3280 = vpop.f32.mrf.mxu0
        %3281 = vmatprep.mubr.bf16.mxu0 0
        %3282 = vmatmul.mubr.bf16.gmra.mxu0 %v3239
        %v3283 = vpop.f32.mrf.mxu0
        %v3284 = vadd.f32 0.0, %v3283
        %v3285 = vpop.f32.mrf.mxu0
        %v3286 = vpop.f32.mrf.mxu0
        %v3287 = vadd.f32 0.0, %v3286
        %v3288 = vpop.f32.mrf.mxu0
        %3289 = vdwg.mxu0
        %v3290 = vadd.f32 %v2952, %v3276
        %v3291 = vadd.f32 %v2953, %v3279
        %v3292 = vadd.f32 %v2954, %v3284
        %v3293 = vadd.f32 %v2955, %v3287
        %3294 = vst.msk [vmem:[#allocation2] sm:$0xff] %vm828, %v3290
        %3295 = vst.msk [vmem:[#allocation2 + $0x8] sm:$0xff] %vm828, %v3291
        %3296 = vst.msk [vmem:[#allocation2 + $0x10] sm:$0xff] %vm828, %v3292
        %3297 = vst.msk [vmem:[#allocation2 + $0x18] sm:$0xff] %vm828, %v3293
        %p3298 = scmp.eq.s32.totalorder %s34, 1
        // Predicated region
        $region97: #{hmte_forward.1} parent=87 // pred_check
          %p3299 = pneg %p3298
        $region98: #{hmte_forward.1} parent=87 // pred_check_branch
          %3301 = sbr.rel (%p3299) target = $region100
        $region99: #{hmte_forward.1} parent=87 // pred_region
          %3302 = vst.msk [vmem:[%s806] sm:$0xff] %vm828, %v3290
          %3303 = vst.msk [vmem:[%s806 + $0x8] sm:$0xff] %vm828, %v3291
          %3304 = vst.msk [vmem:[%s806 + $0x10] sm:$0xff] %vm828, %v3292
          %3305 = vst.msk [vmem:[%s806 + $0x18] sm:$0xff] %vm828, %v3293
        $region100: #{hmte_forward.1} parent=87 // pred_fallthru
          _
        %s3306 = smul.u32 4, %s33
        %p3307 = scmp.lt.s32.totalorder %s3306, 3
        %s3308 = scalar_select %p3307, %s3306, 3
        %s3309 = smul.addr %s3308, 8
        %s3310 = scalar_lea.vmem %s17, %s3309
        // Predicated region
        $region101: #{hmte_forward.1} parent=87 // pred_check
          %p3311 = pneg %p486
        $region102: #{hmte_forward.1} parent=87 // pred_check_branch
          %3313 = sbr.rel (%p3311) target = $region104
        $region103: #{hmte_forward.1} parent=87 // pred_region
          %s3314 = smul.u32 4, %s33
        $region104: #{hmte_forward.1} parent=87 // pred_fallthru
          _
        // Predicated region
        $region105: #{hmte_forward.1} parent=87 // pred_check
          %p3315 = pneg %p486
        $region106: #{hmte_forward.1} parent=87 // pred_check_branch
          %3317 = sbr.rel (%p3315) target = $region108
        $region107: #{hmte_forward.1} parent=87 // pred_region
          %s3318 = smul.u32 4, %s33
          %p3319 = scmp.lt.s32.totalorder %s3318, 3
          %s3320 = scalar_select %p3319, %s3318, 3
          %s3321 = smul.addr %s3320, 8
          %s3322 = scalar_lea.vmem %s17, %s3321
        $region108: #{hmte_forward.1} parent=87 // pred_fallthru
          _
      $region88: #{hmte_forward.1} parent=5 // pred_fallthru
        _
      %p3323 = scmp.le.s32.totalorder 2, %s24
      // Predicated region
      $region109: #{hmte_forward.1} parent=5 // pred_check
        %p3324 = pneg %p3323
      $region110: #{hmte_forward.1} parent=5 // pred_check_branch
        %3326 = sbr.rel (%p3324) target = $region112
      $region111: #{hmte_forward.1} parent=5 // pred_region
        %s3327 = ssub.s32 %s24, 2
      $region112: #{hmte_forward.1} parent=5 // pred_fallthru
        _
    $region6: #{hmte_forward.1} parent=1 // loop_footer
      %s28 = sadd.s32 1, %s24
    $region7: #{hmte_forward.1} parent=1 // loop_footer_branch
      %23 = sbr.rel target = $region3
    $region8: #{hmte_forward.1} parent=1 // loop_exit
      _
    %3328 = vsyncpa [#allocation4], 1
    %s3329 = scalar_lea.sflag [#allocation4], 1
    %3330 = vsyncpa %s3329, 1

</llo_original>
